<compile_context>
chip_gen: v5e
topology: v5e:2x2
jax: 0.10.0
libtpu: 0.0.40
codegen_flags: <defaults>
</compile_context>

<pallas_src>
import jax
import jax.numpy as jnp
from jax.experimental import pallas as pl
from jax.experimental.pallas import tpu as pltpu


def _round_up(v, m):
    return (v + m - 1) // m * m


def _make_fused_kernel(n_layer, row_tile, n_tiles, n_pad, e_pad):
    def kernel(*refs):
        # refs = (x, ind1, ind2, w0, b0, ..., w_{L-1}, b_{L-1}, out, h_scratch)
        x_ref, i1_ref, i2_ref = refs[0], refs[1], refs[2]
        wb_refs = refs[3:3 + 2 * n_layer]
        out_ref = refs[3 + 2 * n_layer]
        h_ref = refs[4 + 2 * n_layer]          # VMEM scratch: full [N_pad, H_pad]

        step = pl.program_id(0)

        # ---- MLP for this row tile (bf16 MXU matmuls, f32 accumulate) ----
        h = x_ref[...]                          # [row_tile, in_dim] f32
        for i in range(n_layer):
            w = wb_refs[2 * i][...].astype(jnp.bfloat16)      # [in, H_pad]
            b = wb_refs[2 * i + 1][...]                       # [1, H_pad] f32
            h = jnp.dot(h.astype(jnp.bfloat16), w,
                        preferred_element_type=jnp.float32) + b
            if i < n_layer - 1:
                # nn.Dropout is identity in eval mode; then ReLU.
                # TODO(synk): training-mode stochastic dropout (pltpu.prng_*).
                h = jnp.maximum(h, 0.0)

        row0 = pl.multiple_of(step * row_tile, row_tile)
        h_ref[pl.ds(row0, row_tile), :] = h     # keep h resident in VMEM

        # ---- fused pair scoring: runs once, after the last row tile ----
        @pl.when(step == n_tiles - 1)
        def _():
            hs_t = h_ref[...].T                 # [H_pad, N_pad] (XLU transpose)
            n_iota = jax.lax.broadcasted_iota(jnp.int32, (n_pad, e_pad), 0)
            # One-hot gather matrices: g[n, e] = (n == ind[e]).  Exact in f32.
            g1 = (n_iota == i1_ref[...]).astype(jnp.float32)
            g2 = (n_iota == i2_ref[...]).astype(jnp.float32)
            h1t = jnp.dot(hs_t, g1, preferred_element_type=jnp.float32)
            h2t = jnp.dot(hs_t, g2, preferred_element_type=jnp.float32)
            logits = jnp.sum(h1t * h2t, axis=0, keepdims=True)   # [1, E_pad]
            # Exact sigmoid (divide); exp lands on the EUP.
            out_ref[...] = 1.0 / (1.0 + jnp.exp(-logits))

    return kernel


def task_mlp_forward(x, ind1, ind2, weights, biases, *, row_tile=256):
    """x: [N, in_dim]; weights[i]: [in_i, out_i]; biases[i]: [out_i]."""
    n, in_dim = x.shape
    hidden = weights[-1].shape[1]
    n_layer = len(weights)
    e = ind1.shape[0]

    tm = min(row_tile, _round_up(n, 8))
    n_pad = _round_up(n, tm)
    n_tiles = n_pad // tm
    e_pad = _round_up(e, 128)       # lane-dense index / output row
    hid_pad = _round_up(hidden, 128)  # lane-dense hidden dim (zero-padded, exact)

    x_p = jnp.zeros((n_pad, in_dim), jnp.float32).at[:n, :].set(x.astype(jnp.float32))
    i1_p = jnp.zeros((1, e_pad), jnp.int32).at[0, :e].set(ind1.astype(jnp.int32))
    i2_p = jnp.zeros((1, e_pad), jnp.int32).at[0, :e].set(ind2.astype(jnp.int32))

    ops = [x_p, i1_p, i2_p]
    in_specs = [
        pl.BlockSpec((tm, in_dim), lambda i: (i, 0)),     # row-tiled, pipelined
        pl.BlockSpec((1, e_pad), lambda i: (0, 0)),
        pl.BlockSpec((1, e_pad), lambda i: (0, 0)),
    ]
    for li, (w, b) in enumerate(zip(weights, biases)):
        fi = in_dim if li == 0 else hid_pad
        w_p = (jnp.zeros((fi, hid_pad), jnp.float32)
               .at[:w.shape[0], :w.shape[1]].set(w.astype(jnp.float32)))
        b_p = (jnp.zeros((1, hid_pad), jnp.float32)
               .at[0, :b.shape[-1]].set(b.reshape(-1).astype(jnp.float32)))
        ops += [w_p, b_p]
        in_specs += [pl.BlockSpec((fi, hid_pad), lambda i: (0, 0)),
                     pl.BlockSpec((1, hid_pad), lambda i: (0, 0))]

    # Explicit VMEM budget (double-buffered x tiles, resident params, h scratch,
    # one-hot masks + gathered rows on the last step), capped under v7x's 64 MiB.
    param_bytes = sum(int(o.size) * 4 for o in ops[3:])
    vmem_bytes = (2 * tm * in_dim * 4 + param_bytes
                  + n_pad * hid_pad * 4            # h scratch
                  + 2 * n_pad * e_pad * 4          # one-hot masks
                  + 3 * hid_pad * e_pad * 4        # gathered rows + product
                  + hid_pad * n_pad * 4            # transposed h
                  + 4 * e_pad * 4)
    vmem_limit = int(min(max(2 * vmem_bytes, 16 * 1024 * 1024), 40 * 1024 * 1024))

    grid_spec = pltpu.PrefetchScalarGridSpec(
        num_scalar_prefetch=0,
        grid=(n_tiles,),
        in_specs=in_specs,
        out_specs=pl.BlockSpec((1, e_pad), lambda i: (0, 0)),
        scratch_shapes=[pltpu.VMEM((n_pad, hid_pad), jnp.float32)],
    )
    out = pl.pallas_call(
        _make_fused_kernel(n_layer, tm, n_tiles, n_pad, e_pad),
        out_shape=jax.ShapeDtypeStruct((1, e_pad), jnp.float32),
        grid_spec=grid_spec,
        compiler_params=pltpu.CompilerParams(
            # Row axis carries the VMEM-resident h scratch into the final
            # scoring step -> must stay sequential ("arbitrary").
            dimension_semantics=("arbitrary",),
            vmem_limit_bytes=vmem_limit),
    )(*ops)
    return out[0, :e]


def task_mlp_reference(x, ind1, ind2, weights, biases, *, matmul_dtype=jnp.float32):
    h = x.astype(jnp.float32)
    n_layer = len(weights)
    for i, (w, b) in enumerate(zip(weights, biases)):
        h = jnp.dot(h.astype(matmul_dtype), w.astype(matmul_dtype),
                    preferred_element_type=jnp.float32) + b.reshape(1, -1)
        if i < n_layer - 1:
            h = jnp.maximum(h, 0.0)
    logits = jnp.sum(h[ind1, :] * h[ind2, :], axis=1)
    return 1.0 / (1.0 + jnp.exp(-logits))


if __name__ == "__main__":
    # Small deterministic shapes: exercise multi-tile grid (N > row_tile) and
    # padding (N, E not multiples of the tile / lane sizes).
    N = 300
    IN_DIM = 64
    HIDDEN = 32
    N_LAYER = 3
    E = 200

    key = jax.random.PRNGKey(0)
    k_x, k_i1, k_i2, k_w = jax.random.split(key, 4)

    x = jax.random.normal(k_x, (N, IN_DIM), dtype=jnp.float32)
    ind1 = jax.random.randint(k_i1, (E,), 0, N, dtype=jnp.int32)
    ind2 = jax.random.randint(k_i2, (E,), 0, N, dtype=jnp.int32)

    # Deterministic parameter init (shapes follow the module's __init__);
    # weights pre-transposed to [in_features, out_features].
    weights, biases = [], []
    wkeys = jax.random.split(k_w, 2 * N_LAYER)
    for i in range(N_LAYER):
        fan_in = IN_DIM if i == 0 else HIDDEN
        scale = 1.0 / (fan_in ** 0.5)
        w = jax.random.uniform(wkeys[2 * i], (fan_in, HIDDEN), jnp.float32, -scale, scale)
        b = jax.random.uniform(wkeys[2 * i + 1], (HIDDEN,), jnp.float32, -scale, scale)
        weights.append(w)
        biases.append(b)

    fwd = jax.jit(task_mlp_forward)
    out = jax.block_until_ready(fwd(x, ind1, ind2, weights, biases))

    # Tight check vs. a reference using the same bf16-matmul / f32-accumulate
    # math; loose sanity check vs. full-f32 math (bf16 MXU is intentional).
    ref_bf16 = task_mlp_reference(x, ind1, ind2, weights, biases,
                                  matmul_dtype=jnp.bfloat16)
    ref_f32 = task_mlp_reference(x, ind1, ind2, weights, biases,
                                 matmul_dtype=jnp.float32)
    assert out.shape == (E,), out.shape
    assert jnp.allclose(out, ref_bf16, atol=2e-3, rtol=2e-3), (out, ref_bf16)
    assert jnp.allclose(out, ref_f32, atol=1e-1), (out, ref_f32)

    print("KERNEL_OK")
</pallas_src>

<mosaic_0001>
module attributes {stable_mosaic.version = 11 : i64} {
  func.func @kernel(%arg0: i32, %arg1: memref<256x64xf32, #tpu.memory_space<vmem>>, %arg2: memref<1x256xi32, #tpu.memory_space<vmem>>, %arg3: memref<1x256xi32, #tpu.memory_space<vmem>>, %arg4: memref<64x128xf32, #tpu.memory_space<vmem>>, %arg5: memref<1x128xf32, #tpu.memory_space<vmem>>, %arg6: memref<128x128xf32, #tpu.memory_space<vmem>>, %arg7: memref<1x128xf32, #tpu.memory_space<vmem>>, %arg8: memref<128x128xf32, #tpu.memory_space<vmem>>, %arg9: memref<1x128xf32, #tpu.memory_space<vmem>>, %arg10: memref<1x256xf32, #tpu.memory_space<vmem>>, %arg11: memref<512x128xf32, #tpu.memory_space<vmem>>) attributes {dimension_semantics = [#tpu.dimension_semantics<arbitrary>], iteration_bounds = array<i64: 2>, scalar_prefetch = 0 : i64, scratch_operands = 1 : i64, tpu.core_type = #tpu.core_type<tc>, window_params = [{transform_indices = @transform_0, window_bounds = array<i64: 256, 64>}, {pipeline_mode = #tpu.pipeline_mode<synchronous>, transform_indices = @transform_1, window_bounds = array<i64: 1, 256>}, {pipeline_mode = #tpu.pipeline_mode<synchronous>, transform_indices = @transform_2, window_bounds = array<i64: 1, 256>}, {pipeline_mode = #tpu.pipeline_mode<synchronous>, transform_indices = @transform_3, window_bounds = array<i64: 64, 128>}, {pipeline_mode = #tpu.pipeline_mode<synchronous>, transform_indices = @transform_4, window_bounds = array<i64: 1, 128>}, {pipeline_mode = #tpu.pipeline_mode<synchronous>, transform_indices = @transform_5, window_bounds = array<i64: 128, 128>}, {pipeline_mode = #tpu.pipeline_mode<synchronous>, transform_indices = @transform_6, window_bounds = array<i64: 1, 128>}, {pipeline_mode = #tpu.pipeline_mode<synchronous>, transform_indices = @transform_7, window_bounds = array<i64: 128, 128>}, {pipeline_mode = #tpu.pipeline_mode<synchronous>, transform_indices = @transform_8, window_bounds = array<i64: 1, 128>}, {pipeline_mode = #tpu.pipeline_mode<synchronous>, transform_indices = @transform_9, window_bounds = array<i64: 1, 256>}]} {
    %c0 = arith.constant 0 : index
    %c0_0 = arith.constant 0 : index
    %0 = vector.load %arg1[%c0, %c0_0] : memref<256x64xf32, #tpu.memory_space<vmem>>, vector<256x64xf32>
    %c0_1 = arith.constant 0 : index
    %c0_2 = arith.constant 0 : index
    %1 = vector.load %arg4[%c0_1, %c0_2] : memref<64x128xf32, #tpu.memory_space<vmem>>, vector<64x128xf32>
    %2 = arith.truncf %1 : vector<64x128xf32> to vector<64x128xbf16>
    %c0_3 = arith.constant 0 : index
    %c0_4 = arith.constant 0 : index
    %3 = vector.load %arg5[%c0_3, %c0_4] : memref<1x128xf32, #tpu.memory_space<vmem>>, vector<1x128xf32>
    %4 = arith.truncf %0 : vector<256x64xf32> to vector<256x64xbf16>
    %cst = arith.constant dense<0.000000e+00> : vector<256x128xf32>
    %5 = tpu.matmul %4, %2, %cst {dimension_numbers = #tpu.dot_dimension_numbers<[1], [0], [0], [1], [0, 0, 1, 1], [], []>} : vector<256x64xbf16>, vector<64x128xbf16>, vector<256x128xf32> -> vector<256x128xf32>
    %6 = vector.broadcast %3 : vector<1x128xf32> to vector<256x128xf32>
    %7 = arith.addf %5, %6 : vector<256x128xf32>
    %cst_5 = arith.constant 0.000000e+00 : f32
    %8 = vector.broadcast %cst_5 : f32 to vector<256x128xf32>
    %9 = arith.maximumf %7, %8 : vector<256x128xf32>
    %c0_6 = arith.constant 0 : index
    %c0_7 = arith.constant 0 : index
    %10 = vector.load %arg6[%c0_6, %c0_7] : memref<128x128xf32, #tpu.memory_space<vmem>>, vector<128x128xf32>
    %11 = arith.truncf %10 : vector<128x128xf32> to vector<128x128xbf16>
    %c0_8 = arith.constant 0 : index
    %c0_9 = arith.constant 0 : index
    %12 = vector.load %arg7[%c0_8, %c0_9] : memref<1x128xf32, #tpu.memory_space<vmem>>, vector<1x128xf32>
    %13 = arith.truncf %9 : vector<256x128xf32> to vector<256x128xbf16>
    %cst_10 = arith.constant dense<0.000000e+00> : vector<256x128xf32>
    %14 = tpu.matmul %13, %11, %cst_10 {dimension_numbers = #tpu.dot_dimension_numbers<[1], [0], [0], [1], [0, 0, 1, 1], [], []>} : vector<256x128xbf16>, vector<128x128xbf16>, vector<256x128xf32> -> vector<256x128xf32>
    %15 = vector.broadcast %12 : vector<1x128xf32> to vector<256x128xf32>
    %16 = arith.addf %14, %15 : vector<256x128xf32>
    %cst_11 = arith.constant 0.000000e+00 : f32
    %17 = vector.broadcast %cst_11 : f32 to vector<256x128xf32>
    %18 = arith.maximumf %16, %17 : vector<256x128xf32>
    %c0_12 = arith.constant 0 : index
    %c0_13 = arith.constant 0 : index
    %19 = vector.load %arg8[%c0_12, %c0_13] : memref<128x128xf32, #tpu.memory_space<vmem>>, vector<128x128xf32>
    %20 = arith.truncf %19 : vector<128x128xf32> to vector<128x128xbf16>
    %c0_14 = arith.constant 0 : index
    %c0_15 = arith.constant 0 : index
    %21 = vector.load %arg9[%c0_14, %c0_15] : memref<1x128xf32, #tpu.memory_space<vmem>>, vector<1x128xf32>
    %22 = arith.truncf %18 : vector<256x128xf32> to vector<256x128xbf16>
    %cst_16 = arith.constant dense<0.000000e+00> : vector<256x128xf32>
    %23 = tpu.matmul %22, %20, %cst_16 {dimension_numbers = #tpu.dot_dimension_numbers<[1], [0], [0], [1], [0, 0, 1, 1], [], []>} : vector<256x128xbf16>, vector<128x128xbf16>, vector<256x128xf32> -> vector<256x128xf32>
    %24 = vector.broadcast %21 : vector<1x128xf32> to vector<256x128xf32>
    %25 = arith.addf %23, %24 : vector<256x128xf32>
    %c256_i32 = arith.constant 256 : i32
    %26 = arith.muli %arg0, %c256_i32 : i32
    %27 = tpu.assume_multiple %26, 256 : i32
    %28 = arith.index_cast %27 : i32 to index
    %c0_17 = arith.constant 0 : index
    %29 = vector.load %arg11[%28, %c0_17] : memref<512x128xf32, #tpu.memory_space<vmem>>, vector<256x128xf32>
    tpu.vector_store %arg11[%28, %c0_17], %25 {strides = array<i32>} : memref<512x128xf32, #tpu.memory_space<vmem>>, vector<256x128xf32>,
    %c1_i32 = arith.constant 1 : i32
    %30 = arith.cmpi eq, %arg0, %c1_i32 : i32
    %31 = arith.extui %30 : i1 to i32
    %c0_i32 = arith.constant 0 : i32
    %32 = arith.cmpi ne, %31, %c0_i32 : i32
    scf.if %32 {
      %c0_18 = arith.constant 0 : index
      %c0_19 = arith.constant 0 : index
      %33 = vector.load %arg11[%c0_18, %c0_19] : memref<512x128xf32, #tpu.memory_space<vmem>>, vector<512x128xf32>
      %34 = tpu.transpose %33, [1, 0] : vector<512x128xf32> -> vector<128x512xf32>
      %35 = tpu.iota {dimensions = array<i32: 0>} : vector<512x256xi32>
      %c0_20 = arith.constant 0 : index
      %c0_21 = arith.constant 0 : index
      %36 = vector.load %arg2[%c0_20, %c0_21] : memref<1x256xi32, #tpu.memory_space<vmem>>, vector<1x256xi32>
      %37 = vector.broadcast %36 : vector<1x256xi32> to vector<512x256xi32>
      %38 = arith.cmpi eq, %35, %37 : vector<512x256xi32>
      %39 = arith.extui %38 : vector<512x256xi1> to vector<512x256xi32>
      %40 = arith.sitofp %39 : vector<512x256xi32> to vector<512x256xf32>
      %c0_22 = arith.constant 0 : index
      %c0_23 = arith.constant 0 : index
      %41 = vector.load %arg3[%c0_22, %c0_23] : memref<1x256xi32, #tpu.memory_space<vmem>>, vector<1x256xi32>
      %42 = vector.broadcast %41 : vector<1x256xi32> to vector<512x256xi32>
      %43 = arith.cmpi eq, %35, %42 : vector<512x256xi32>
      %44 = arith.extui %43 : vector<512x256xi1> to vector<512x256xi32>
      %45 = arith.sitofp %44 : vector<512x256xi32> to vector<512x256xf32>
      %cst_24 = arith.constant dense<0.000000e+00> : vector<128x256xf32>
      %46 = tpu.matmul %34, %40, %cst_24 {dimension_numbers = #tpu.dot_dimension_numbers<[1], [0], [0], [1], [0, 0, 1, 1], [], []>} : vector<128x512xf32>, vector<512x256xf32>, vector<128x256xf32> -> vector<128x256xf32>
      %cst_25 = arith.constant dense<0.000000e+00> : vector<128x256xf32>
      %47 = tpu.matmul %34, %45, %cst_25 {dimension_numbers = #tpu.dot_dimension_numbers<[1], [0], [0], [1], [0, 0, 1, 1], [], []>} : vector<128x512xf32>, vector<512x256xf32>, vector<128x256xf32> -> vector<128x256xf32>
      %48 = arith.mulf %46, %47 : vector<128x256xf32>
      %cst_26 = arith.constant dense<0.000000e+00> : vector<256xf32>
      %49 = vector.multi_reduction <add>, %48, %cst_26 [0] : vector<128x256xf32> to vector<256xf32>
      %50 = vector.shape_cast %49 : vector<256xf32> to vector<1x256xf32>
      %cst_27 = arith.constant 0.000000e+00 : f32
      %51 = vector.broadcast %cst_27 : f32 to vector<1x256xf32>
      %52 = arith.subf %51, %50 : vector<1x256xf32>
      %53 = math.exp %52 : vector<1x256xf32>
      %cst_28 = arith.constant 1.000000e+00 : f32
      %54 = vector.broadcast %cst_28 : f32 to vector<1x256xf32>
      %55 = arith.addf %54, %53 : vector<1x256xf32>
      %cst_29 = arith.constant 1.000000e+00 : f32
      %56 = vector.broadcast %cst_29 : f32 to vector<1x256xf32>
      %57 = arith.divf %56, %55 : vector<1x256xf32>
      %c0_30 = arith.constant 0 : index
      %c0_31 = arith.constant 0 : index
      %58 = vector.load %arg10[%c0_30, %c0_31] : memref<1x256xf32, #tpu.memory_space<vmem>>, vector<1x256xf32>
      tpu.vector_store %arg10[%c0_30, %c0_31], %57 {strides = array<i32>} : memref<1x256xf32, #tpu.memory_space<vmem>>, vector<1x256xf32>,
    } else {
    }
    return
  }
  func.func @transform_0(%arg0: i32) -> (i32, i32) {
    %c0_i32 = arith.constant 0 : i32
    %c0_i32_0 = arith.constant 0 : i32
    return %arg0, %c0_i32 : i32, i32
  }
  func.func @transform_1(%arg0: i32) -> (i32, i32) {
    %c0_i32 = arith.constant 0 : i32
    %c0_i32_0 = arith.constant 0 : i32
    %c0_i32_1 = arith.constant 0 : i32
    return %c0_i32, %c0_i32_0 : i32, i32
  }
  func.func @transform_2(%arg0: i32) -> (i32, i32) {
    %c0_i32 = arith.constant 0 : i32
    %c0_i32_0 = arith.constant 0 : i32
    %c0_i32_1 = arith.constant 0 : i32
    return %c0_i32, %c0_i32_0 : i32, i32
  }
  func.func @transform_3(%arg0: i32) -> (i32, i32) {
    %c0_i32 = arith.constant 0 : i32
    %c0_i32_0 = arith.constant 0 : i32
    %c0_i32_1 = arith.constant 0 : i32
    return %c0_i32, %c0_i32_0 : i32, i32
  }
  func.func @transform_4(%arg0: i32) -> (i32, i32) {
    %c0_i32 = arith.constant 0 : i32
    %c0_i32_0 = arith.constant 0 : i32
    %c0_i32_1 = arith.constant 0 : i32
    return %c0_i32, %c0_i32_0 : i32, i32
  }
  func.func @transform_5(%arg0: i32) -> (i32, i32) {
    %c0_i32 = arith.constant 0 : i32
    %c0_i32_0 = arith.constant 0 : i32
    %c0_i32_1 = arith.constant 0 : i32
    return %c0_i32, %c0_i32_0 : i32, i32
  }
  func.func @transform_6(%arg0: i32) -> (i32, i32) {
    %c0_i32 = arith.constant 0 : i32
    %c0_i32_0 = arith.constant 0 : i32
    %c0_i32_1 = arith.constant 0 : i32
    return %c0_i32, %c0_i32_0 : i32, i32
  }
  func.func @transform_7(%arg0: i32) -> (i32, i32) {
    %c0_i32 = arith.constant 0 : i32
    %c0_i32_0 = arith.constant 0 : i32
    %c0_i32_1 = arith.constant 0 : i32
    return %c0_i32, %c0_i32_0 : i32, i32
  }
  func.func @transform_8(%arg0: i32) -> (i32, i32) {
    %c0_i32 = arith.constant 0 : i32
    %c0_i32_0 = arith.constant 0 : i32
    %c0_i32_1 = arith.constant 0 : i32
    return %c0_i32, %c0_i32_0 : i32, i32
  }
  func.func @transform_9(%arg0: i32) -> (i32, i32) {
    %c0_i32 = arith.constant 0 : i32
    %c0_i32_0 = arith.constant 0 : i32
    %c0_i32_1 = arith.constant 0 : i32
    return %c0_i32, %c0_i32_0 : i32, i32
  }
}

</mosaic_0001>

<llo_original>
// kernel: task_mlp_forward.1
$region0: #{task_mlp_forward.1}
  #allocation0 [shape = 'u32[]', space=smem, size = 0x4, offset = 0x4, fixed_abs, tag = 'smem constant byte address 0x4 - core index']
  #allocation1 [shape = 'u32[72,128]{1,0:T(1,128)}', space=vmem, size = 0x9000, scoped, tag = 'internal scratch']
  #allocation2 [shape = 'f32[512,128]{1,0:T(8,128)}', space=vmem, size = 0x40000, scoped, tag = 'scratch operand']
  %s0 = inlined_call_operand.vmem [shape: f32[512,64], index: 0, kind: input, shape index: {}]
  %s1 = inlined_call_operand.vmem [shape: s32[1,256], index: 1, kind: input, shape index: {}]
  %s2 = inlined_call_operand.vmem [shape: s32[1,256], index: 2, kind: input, shape index: {}]
  %s3 = inlined_call_operand.vmem [shape: f32[64,128], index: 3, kind: input, shape index: {}]
  %s4 = inlined_call_operand.vmem [shape: f32[1,128], index: 4, kind: input, shape index: {}]
  %s5 = inlined_call_operand.vmem [shape: f32[128,128], index: 5, kind: input, shape index: {}]
  %s6 = inlined_call_operand.vmem [shape: f32[1,128], index: 6, kind: input, shape index: {}]
  %s7 = inlined_call_operand.vmem [shape: f32[128,128], index: 7, kind: input, shape index: {}]
  %s8 = inlined_call_operand.vmem [shape: f32[1,128], index: 8, kind: input, shape index: {}]
  %s9 = inlined_call_operand.hbm [shape: f32[1,256], index: 9, kind: output, shape index: {}]
  %s10 = sld [smem:[#allocation0]]
  $region73: #{task_mlp_forward.1} parent=0
    _
  %s12 = ssub.s32 1, %s10
  %s13 = scalar_select 0, %s12, %s10
  $region1: #{task_mlp_forward.1} parent=0
    #allocation3 [shape = 'u8[1024]{0}', space=vmem, size = 0x400, scoped, tag = 'output window, operand 0, single buffered']
    #allocation4 [shape = 's32[2]{0}', space=sflag, size = 0x8, scoped, tag = 'scoped memory for task_mlp_forward.1']
    %14 = vsyncpa [#allocation4], 0
    loop: start=0, step=1, limit=4
    $region2: #{task_mlp_forward.1} parent=1 // loop_pre_header
      _
    $region3: #{task_mlp_forward.1} parent=1 // loop_header
      %s16 = sphi 0, %s20
      %p17 = scmp.ge.s32.totalorder %s16, 4
      %s26 = sphi 0, %s28
      %s29 = sphi 0, %s26
      %s30 = sphi 0, %s29
      %s46 = sphi 0, %s30
      %s50 = sphi 0, %s50
      %s52 = sphi 0, %s50
      %s53 = sphi 0, %s52
      %s67 = sphi 0, %s53
      %s71 = sphi 0, %s71
      %s73 = sphi 0, %s71
      %s74 = sphi 0, %s73
      %s88 = sphi 0, %s74
      %s92 = sphi 0, %s92
      %s94 = sphi 0, %s92
      %s95 = sphi 0, %s94
      %s109 = sphi 0, %s95
      %s113 = sphi 0, %s113
      %s115 = sphi 0, %s113
      %s116 = sphi 0, %s115
      %s130 = sphi 0, %s116
      %s134 = sphi 0, %s134
      %s136 = sphi 0, %s134
      %s137 = sphi 0, %s136
      %s151 = sphi 0, %s137
      %s155 = sphi 0, %s155
      %s157 = sphi 0, %s155
      %s158 = sphi 0, %s157
      %s172 = sphi 0, %s158
      %s176 = sphi 0, %s176
      %s178 = sphi 0, %s176
      %s179 = sphi 0, %s178
      %s193 = sphi 0, %s179
      %s197 = sphi 0, %s197
      %s199 = sphi 0, %s197
      %s200 = sphi 0, %s199
      %s214 = sphi 0, %s200
      %s218 = sphi 0, %s218
      %s220 = sphi 0, %s218
      %s221 = sphi 0, %s220
      %s235 = sphi 0, %s221
    $region4: #{task_mlp_forward.1} parent=1 // loop_header_branch
      %19 = sbr.rel (%p17) target = $region8
    $region5: #{task_mlp_forward.1} parent=1 // loop_body
      %s21 = ssub.s32 %s16, 1
      %s22 = ssub.s32 %s16, 2
      %s23 = sadd.s32 %s16, 1
      %s24 = ssub.s32 %s16, %s23
      %p25 = scmp.eq.s32.totalorder %s24, 0
      %s27 = sadd.s32 %s26, 1
      %s28 = scalar_select %p25, %s26, %s27
      %p31 = pneg %p25
      %p32 = scmp.eq.s32.totalorder %s16, 1
      %p33 = por %p31, %p32
      %p34 = scmp.ne.s32.totalorder %s26, %s29
      %p35 = scmp.eq.s32.totalorder %s16, 0
      %p36 = por %p34, %p35
      %p37 = scmp.ne.s32.totalorder %s26, %s29
      %p38 = scmp.eq.s32.totalorder %s21, 1
      %p39 = por %p37, %p38
      %p40 = scmp.ne.s32.totalorder %s29, %s30
      %p41 = scmp.eq.s32.totalorder %s21, 0
      %p42 = por %p40, %p41
      %p43 = scmp.ne.s32.totalorder %s29, %s30
      %p44 = scmp.eq.s32.totalorder %s22, 1
      %p45 = por %p43, %p44
      %p47 = scmp.ne.s32.totalorder %s30, %s46
      %p48 = scmp.eq.s32.totalorder %s22, 0
      %p49 = por %p47, %p48
      %s51 = sadd.s32 %s50, 1
      %p54 = scmp.eq.s32.totalorder %s16, 1
      %p55 = scmp.ne.s32.totalorder %s50, %s52
      %p56 = scmp.eq.s32.totalorder %s16, 0
      %p57 = por %p55, %p56
      %p58 = scmp.ne.s32.totalorder %s50, %s52
      %p59 = scmp.eq.s32.totalorder %s21, 1
      %p60 = por %p58, %p59
      %p61 = scmp.ne.s32.totalorder %s52, %s53
      %p62 = scmp.eq.s32.totalorder %s21, 0
      %p63 = por %p61, %p62
      %p64 = scmp.ne.s32.totalorder %s52, %s53
      %p65 = scmp.eq.s32.totalorder %s22, 1
      %p66 = por %p64, %p65
      %p68 = scmp.ne.s32.totalorder %s53, %s67
      %p69 = scmp.eq.s32.totalorder %s22, 0
      %p70 = por %p68, %p69
      %s72 = sadd.s32 %s71, 1
      %p75 = scmp.eq.s32.totalorder %s16, 1
      %p76 = scmp.ne.s32.totalorder %s71, %s73
      %p77 = scmp.eq.s32.totalorder %s16, 0
      %p78 = por %p76, %p77
      %p79 = scmp.ne.s32.totalorder %s71, %s73
      %p80 = scmp.eq.s32.totalorder %s21, 1
      %p81 = por %p79, %p80
      %p82 = scmp.ne.s32.totalorder %s73, %s74
      %p83 = scmp.eq.s32.totalorder %s21, 0
      %p84 = por %p82, %p83
      %p85 = scmp.ne.s32.totalorder %s73, %s74
      %p86 = scmp.eq.s32.totalorder %s22, 1
      %p87 = por %p85, %p86
      %p89 = scmp.ne.s32.totalorder %s74, %s88
      %p90 = scmp.eq.s32.totalorder %s22, 0
      %p91 = por %p89, %p90
      %s93 = sadd.s32 %s92, 1
      %p96 = scmp.eq.s32.totalorder %s16, 1
      %p97 = scmp.ne.s32.totalorder %s92, %s94
      %p98 = scmp.eq.s32.totalorder %s16, 0
      %p99 = por %p97, %p98
      %p100 = scmp.ne.s32.totalorder %s92, %s94
      %p101 = scmp.eq.s32.totalorder %s21, 1
      %p102 = por %p100, %p101
      %p103 = scmp.ne.s32.totalorder %s94, %s95
      %p104 = scmp.eq.s32.totalorder %s21, 0
      %p105 = por %p103, %p104
      %p106 = scmp.ne.s32.totalorder %s94, %s95
      %p107 = scmp.eq.s32.totalorder %s22, 1
      %p108 = por %p106, %p107
      %p110 = scmp.ne.s32.totalorder %s95, %s109
      %p111 = scmp.eq.s32.totalorder %s22, 0
      %p112 = por %p110, %p111
      %s114 = sadd.s32 %s113, 1
      %p117 = scmp.eq.s32.totalorder %s16, 1
      %p118 = scmp.ne.s32.totalorder %s113, %s115
      %p119 = scmp.eq.s32.totalorder %s16, 0
      %p120 = por %p118, %p119
      %p121 = scmp.ne.s32.totalorder %s113, %s115
      %p122 = scmp.eq.s32.totalorder %s21, 1
      %p123 = por %p121, %p122
      %p124 = scmp.ne.s32.totalorder %s115, %s116
      %p125 = scmp.eq.s32.totalorder %s21, 0
      %p126 = por %p124, %p125
      %p127 = scmp.ne.s32.totalorder %s115, %s116
      %p128 = scmp.eq.s32.totalorder %s22, 1
      %p129 = por %p127, %p128
      %p131 = scmp.ne.s32.totalorder %s116, %s130
      %p132 = scmp.eq.s32.totalorder %s22, 0
      %p133 = por %p131, %p132
      %s135 = sadd.s32 %s134, 1
      %p138 = scmp.eq.s32.totalorder %s16, 1
      %p139 = scmp.ne.s32.totalorder %s134, %s136
      %p140 = scmp.eq.s32.totalorder %s16, 0
      %p141 = por %p139, %p140
      %p142 = scmp.ne.s32.totalorder %s134, %s136
      %p143 = scmp.eq.s32.totalorder %s21, 1
      %p144 = por %p142, %p143
      %p145 = scmp.ne.s32.totalorder %s136, %s137
      %p146 = scmp.eq.s32.totalorder %s21, 0
      %p147 = por %p145, %p146
      %p148 = scmp.ne.s32.totalorder %s136, %s137
      %p149 = scmp.eq.s32.totalorder %s22, 1
      %p150 = por %p148, %p149
      %p152 = scmp.ne.s32.totalorder %s137, %s151
      %p153 = scmp.eq.s32.totalorder %s22, 0
      %p154 = por %p152, %p153
      %s156 = sadd.s32 %s155, 1
      %p159 = scmp.eq.s32.totalorder %s16, 1
      %p160 = scmp.ne.s32.totalorder %s155, %s157
      %p161 = scmp.eq.s32.totalorder %s16, 0
      %p162 = por %p160, %p161
      %p163 = scmp.ne.s32.totalorder %s155, %s157
      %p164 = scmp.eq.s32.totalorder %s21, 1
      %p165 = por %p163, %p164
      %p166 = scmp.ne.s32.totalorder %s157, %s158
      %p167 = scmp.eq.s32.totalorder %s21, 0
      %p168 = por %p166, %p167
      %p169 = scmp.ne.s32.totalorder %s157, %s158
      %p170 = scmp.eq.s32.totalorder %s22, 1
      %p171 = por %p169, %p170
      %p173 = scmp.ne.s32.totalorder %s158, %s172
      %p174 = scmp.eq.s32.totalorder %s22, 0
      %p175 = por %p173, %p174
      %s177 = sadd.s32 %s176, 1
      %p180 = scmp.eq.s32.totalorder %s16, 1
      %p181 = scmp.ne.s32.totalorder %s176, %s178
      %p182 = scmp.eq.s32.totalorder %s16, 0
      %p183 = por %p181, %p182
      %p184 = scmp.ne.s32.totalorder %s176, %s178
      %p185 = scmp.eq.s32.totalorder %s21, 1
      %p186 = por %p184, %p185
      %p187 = scmp.ne.s32.totalorder %s178, %s179
      %p188 = scmp.eq.s32.totalorder %s21, 0
      %p189 = por %p187, %p188
      %p190 = scmp.ne.s32.totalorder %s178, %s179
      %p191 = scmp.eq.s32.totalorder %s22, 1
      %p192 = por %p190, %p191
      %p194 = scmp.ne.s32.totalorder %s179, %s193
      %p195 = scmp.eq.s32.totalorder %s22, 0
      %p196 = por %p194, %p195
      %s198 = sadd.s32 %s197, 1
      %p201 = scmp.eq.s32.totalorder %s16, 1
      %p202 = scmp.ne.s32.totalorder %s197, %s199
      %p203 = scmp.eq.s32.totalorder %s16, 0
      %p204 = por %p202, %p203
      %p205 = scmp.ne.s32.totalorder %s197, %s199
      %p206 = scmp.eq.s32.totalorder %s21, 1
      %p207 = por %p205, %p206
      %p208 = scmp.ne.s32.totalorder %s199, %s200
      %p209 = scmp.eq.s32.totalorder %s21, 0
      %p210 = por %p208, %p209
      %p211 = scmp.ne.s32.totalorder %s199, %s200
      %p212 = scmp.eq.s32.totalorder %s22, 1
      %p213 = por %p211, %p212
      %p215 = scmp.ne.s32.totalorder %s200, %s214
      %p216 = scmp.eq.s32.totalorder %s22, 0
      %p217 = por %p215, %p216
      %s219 = sadd.s32 %s218, 1
      %p222 = scmp.eq.s32.totalorder %s16, 1
      %p223 = scmp.ne.s32.totalorder %s218, %s220
      %p224 = scmp.eq.s32.totalorder %s16, 0
      %p225 = por %p223, %p224
      %p226 = scmp.ne.s32.totalorder %s218, %s220
      %p227 = scmp.eq.s32.totalorder %s21, 1
      %p228 = por %p226, %p227
      %p229 = scmp.ne.s32.totalorder %s220, %s221
      %p230 = scmp.eq.s32.totalorder %s21, 0
      %p231 = por %p229, %p230
      %p232 = scmp.ne.s32.totalorder %s220, %s221
      %p233 = scmp.eq.s32.totalorder %s22, 1
      %p234 = por %p232, %p233
      %p236 = scmp.ne.s32.totalorder %s221, %s235
      %p237 = scmp.eq.s32.totalorder %s22, 0
      %p238 = por %p236, %p237
      %p239 = scmp.le.s32.totalorder 1, %s16
      %p240 = scmp.lt.s32.totalorder %s16, 3
      %p241 = pnand %p239, %p240
      %p242 = pneg %p241
      // Predicated region
      $region9: #{task_mlp_forward.1} parent=5 // pred_check
        _
      $region10: #{task_mlp_forward.1} parent=5 // pred_check_branch
        %244 = sbr.rel (%p241) target = $region12
      $region11: #{task_mlp_forward.1} parent=5 // pred_region
        %s245 = ssub.s32 %s16, 1
        // Predicated region
        $region13: #{task_mlp_forward.1} parent=11 // pred_check
          %p246 = pneg %p63
        $region14: #{task_mlp_forward.1} parent=11 // pred_check_branch
          %248 = sbr.rel (%p246) target = $region16
        $region15: #{task_mlp_forward.1} parent=11 // pred_region
          _
        $region16: #{task_mlp_forward.1} parent=11 // pred_fallthru
          _
        // Predicated region
        $region17: #{task_mlp_forward.1} parent=11 // pred_check
          %p249 = pneg %p84
        $region18: #{task_mlp_forward.1} parent=11 // pred_check_branch
          %251 = sbr.rel (%p249) target = $region20
        $region19: #{task_mlp_forward.1} parent=11 // pred_region
          _
        $region20: #{task_mlp_forward.1} parent=11 // pred_fallthru
          _
        // Predicated region
        $region21: #{task_mlp_forward.1} parent=11 // pred_check
          %p252 = pneg %p105
        $region22: #{task_mlp_forward.1} parent=11 // pred_check_branch
          %254 = sbr.rel (%p252) target = $region24
        $region23: #{task_mlp_forward.1} parent=11 // pred_region
          _
        $region24: #{task_mlp_forward.1} parent=11 // pred_fallthru
          _
        // Predicated region
        $region25: #{task_mlp_forward.1} parent=11 // pred_check
          %p255 = pneg %p126
        $region26: #{task_mlp_forward.1} parent=11 // pred_check_branch
          %257 = sbr.rel (%p255) target = $region28
        $region27: #{task_mlp_forward.1} parent=11 // pred_region
          _
        $region28: #{task_mlp_forward.1} parent=11 // pred_fallthru
          _
        // Predicated region
        $region29: #{task_mlp_forward.1} parent=11 // pred_check
          %p258 = pneg %p147
        $region30: #{task_mlp_forward.1} parent=11 // pred_check_branch
          %260 = sbr.rel (%p258) target = $region32
        $region31: #{task_mlp_forward.1} parent=11 // pred_region
          _
        $region32: #{task_mlp_forward.1} parent=11 // pred_fallthru
          _
        // Predicated region
        $region33: #{task_mlp_forward.1} parent=11 // pred_check
          %p261 = pneg %p168
        $region34: #{task_mlp_forward.1} parent=11 // pred_check_branch
          %263 = sbr.rel (%p261) target = $region36
        $region35: #{task_mlp_forward.1} parent=11 // pred_region
          _
        $region36: #{task_mlp_forward.1} parent=11 // pred_fallthru
          _
        // Predicated region
        $region37: #{task_mlp_forward.1} parent=11 // pred_check
          %p264 = pneg %p189
        $region38: #{task_mlp_forward.1} parent=11 // pred_check_branch
          %266 = sbr.rel (%p264) target = $region40
        $region39: #{task_mlp_forward.1} parent=11 // pred_region
          _
        $region40: #{task_mlp_forward.1} parent=11 // pred_fallthru
          _
        // Predicated region
        $region41: #{task_mlp_forward.1} parent=11 // pred_check
          %p267 = pneg %p210
        $region42: #{task_mlp_forward.1} parent=11 // pred_check_branch
          %269 = sbr.rel (%p267) target = $region44
        $region43: #{task_mlp_forward.1} parent=11 // pred_region
          _
        $region44: #{task_mlp_forward.1} parent=11 // pred_fallthru
          _
      $region12: #{task_mlp_forward.1} parent=5 // pred_fallthru
        _
      %p270 = scmp.lt.s32.totalorder %s16, 2
      // Predicated region
      $region45: #{task_mlp_forward.1} parent=5 // pred_check
        %p271 = pneg %p270
      $region46: #{task_mlp_forward.1} parent=5 // pred_check_branch
        %273 = sbr.rel (%p271) target = $region48
      $region47: #{task_mlp_forward.1} parent=5 // pred_region
        // Predicated region
        $region49: #{task_mlp_forward.1} parent=47 // pred_check
          %p274 = pneg %p36
        $region50: #{task_mlp_forward.1} parent=47 // pred_check_branch
          %276 = sbr.rel (%p274) target = $region52
        $region51: #{task_mlp_forward.1} parent=47 // pred_region
          %s277 = smul.u32 32, %s16
          %p278 = scmp.lt.s32.totalorder %s277, 63
          %s279 = scalar_select %p278, %s277, 63
          %s280 = smul.addr %s279, 8
          %s281 = scalar_lea.vmem %s0, %s280
          %s282 = smul.u32 32, %s16
        $region52: #{task_mlp_forward.1} parent=47 // pred_fallthru
          _
      $region48: #{task_mlp_forward.1} parent=5 // pred_fallthru
        _
      %p283 = scmp.le.s32.totalorder 1, %s16
      %p284 = scmp.lt.s32.totalorder %s16, 3
      %p285 = pnand %p283, %p284
      %p286 = pneg %p285
      // Predicated region
      $region53: #{task_mlp_forward.1} parent=5 // pred_check
        _
      $region54: #{task_mlp_forward.1} parent=5 // pred_check_branch
        %288 = sbr.rel (%p285) target = $region56
      $region55: #{task_mlp_forward.1} parent=5 // pred_region
        %s289 = ssub.s32 %s16, 1
        %s290 = smul.u32 32, %s21
        %p291 = scmp.lt.s32.totalorder %s290, 63
        %s292 = scalar_select %p291, %s290, 63
        %s293 = smul.addr %s292, 8
        %s294 = scalar_lea.vmem %s0, %s293
        %p295 = pneg %p42
        %p296 = pneg %p39
        %p297 = pneg %p63
        %p298 = pneg %p60
        %p299 = pneg %p84
        %p300 = pneg %p81
        %p301 = pneg %p105
        %p302 = pneg %p102
        %p303 = pneg %p126
        %p304 = pneg %p123
        %p305 = pneg %p147
        %p306 = pneg %p144
        %p307 = pneg %p168
        %p308 = pneg %p165
        %p309 = pneg %p189
        %p310 = pneg %p186
        %p311 = pneg %p210
        %p312 = pneg %p207
        %p313 = pneg %p231
        %p314 = pneg %p228
        %s315 = smul.u32 32, %s21
        %p316 = scmp.lt.s32.totalorder %s315, 63
        %s317 = scalar_select %p316, %s315, 63
        %s318 = smul.addr %s317, 8
        %s319 = scalar_lea.vmem %s0, %s318
        %s320 = smul.u32 32, %s21
        %v322 = vld [vmem:[%s319] sm:$0xff]
        %v323 = vld [vmem:[%s319 + $0x8] sm:$0xff]
        %v324 = vld [vmem:[%s319 + $0x10] sm:$0xff]
        %v325 = vld [vmem:[%s319 + $0x18] sm:$0xff]
        %v326 = vld [vmem:[%s319 + $0x20] sm:$0xff]
        %v327 = vld [vmem:[%s319 + $0x28] sm:$0xff]
        %v328 = vld [vmem:[%s319 + $0x30] sm:$0xff]
        %v329 = vld [vmem:[%s319 + $0x38] sm:$0xff]
        %v330 = vld [vmem:[%s319 + $0x40] sm:$0xff]
        %v331 = vld [vmem:[%s319 + $0x48] sm:$0xff]
        %v332 = vld [vmem:[%s319 + $0x50] sm:$0xff]
        %v333 = vld [vmem:[%s319 + $0x58] sm:$0xff]
        %v334 = vld [vmem:[%s319 + $0x60] sm:$0xff]
        %v335 = vld [vmem:[%s319 + $0x68] sm:$0xff]
        %v336 = vld [vmem:[%s319 + $0x70] sm:$0xff]
        %v337 = vld [vmem:[%s319 + $0x78] sm:$0xff]
        %v338 = vld [vmem:[%s319 + $0x80] sm:$0xff]
        %v339 = vld [vmem:[%s319 + $0x88] sm:$0xff]
        %v340 = vld [vmem:[%s319 + $0x90] sm:$0xff]
        %v341 = vld [vmem:[%s319 + $0x98] sm:$0xff]
        %v342 = vld [vmem:[%s319 + $0xa0] sm:$0xff]
        %v343 = vld [vmem:[%s319 + $0xa8] sm:$0xff]
        %v344 = vld [vmem:[%s319 + $0xb0] sm:$0xff]
        %v345 = vld [vmem:[%s319 + $0xb8] sm:$0xff]
        %v346 = vld [vmem:[%s319 + $0xc0] sm:$0xff]
        %v347 = vld [vmem:[%s319 + $0xc8] sm:$0xff]
        %v348 = vld [vmem:[%s319 + $0xd0] sm:$0xff]
        %v349 = vld [vmem:[%s319 + $0xd8] sm:$0xff]
        %v350 = vld [vmem:[%s319 + $0xe0] sm:$0xff]
        %v351 = vld [vmem:[%s319 + $0xe8] sm:$0xff]
        %v352 = vld [vmem:[%s319 + $0xf0] sm:$0xff]
        %v353 = vld [vmem:[%s319 + $0xf8] sm:$0xff]
        %v354 = vld [vmem:[%s3] sm:$0xff]
        %v355 = vld [vmem:[%s3 + $0x8] sm:$0xff]
        %v356 = vld [vmem:[%s3 + $0x10] sm:$0xff]
        %v357 = vld [vmem:[%s3 + $0x18] sm:$0xff]
        %v358 = vld [vmem:[%s3 + $0x20] sm:$0xff]
        %v359 = vld [vmem:[%s3 + $0x28] sm:$0xff]
        %v360 = vld [vmem:[%s3 + $0x30] sm:$0xff]
        %v361 = vld [vmem:[%s3 + $0x38] sm:$0xff]
        %v362 = vpack.c.bf16 %v355, %v354
        %v363 = vpack.c.bf16 %v357, %v356
        %v364 = vpack.c.bf16 %v359, %v358
        %v365 = vpack.c.bf16 %v361, %v360
        %v366 = vld [vmem:[%s4] sm:$0x1]
        %v367 = vpack.c.bf16 %v323, %v322
        %v368 = vpack.c.bf16 %v325, %v324
        %v369 = vpack.c.bf16 %v327, %v326
        %v370 = vpack.c.bf16 %v329, %v328
        %v371 = vpack.c.bf16 %v331, %v330
        %v372 = vpack.c.bf16 %v333, %v332
        %v373 = vpack.c.bf16 %v335, %v334
        %v374 = vpack.c.bf16 %v337, %v336
        %v375 = vpack.c.bf16 %v339, %v338
        %v376 = vpack.c.bf16 %v341, %v340
        %v377 = vpack.c.bf16 %v343, %v342
        %v378 = vpack.c.bf16 %v345, %v344
        %v379 = vpack.c.bf16 %v347, %v346
        %v380 = vpack.c.bf16 %v349, %v348
        %v381 = vpack.c.bf16 %v351, %v350
        %v382 = vpack.c.bf16 %v353, %v352
        %v384 = vperm.slane %v366, 0
        %vm386 = vcmask 523264
        %v388 = vsel %vm386, %v367, 0
        %v391 = vsel %vm386, %v368, 0
        %v394 = vsel %vm386, %v369, 0
        %v397 = vsel %vm386, %v370, 0
        %v400 = vsel %vm386, %v371, 0
        %v403 = vsel %vm386, %v372, 0
        %v406 = vsel %vm386, %v373, 0
        %v409 = vsel %vm386, %v374, 0
        %v412 = vsel %vm386, %v375, 0
        %v415 = vsel %vm386, %v376, 0
        %v418 = vsel %vm386, %v377, 0
        %v421 = vsel %vm386, %v378, 0
        %v424 = vsel %vm386, %v379, 0
        %v427 = vsel %vm386, %v380, 0
        %v430 = vsel %vm386, %v381, 0
        %v433 = vsel %vm386, %v382, 0
        %435 = vmatpush.bf16.msra.mxu0 0
        %436 = vmatpush.bf16.msra.mxu0 0
        %437 = vmatpush.bf16.msra.mxu0 0
        %438 = vmatpush.bf16.msra.mxu0 0
        %439 = vmatpush.bf16.msra.mxu0 %v365
        %440 = vmatpush.bf16.msra.mxu0 %v364
        %441 = vmatpush.bf16.msra.mxu0 %v363
        %442 = vmatpush.bf16.msra.mxu0 %v362
        %443 = vmatmul.bf16.gmra.mxu0 %v388
        %v444 = vpop.f32.mrf.mxu0
        %v445 = vadd.f32 %v384, %v444
        %v446 = vpop.f32.mrf.mxu0
        %v447 = vadd.f32 %v384, %v446
        %448 = vmatmul.bf16.gmra.mxu0 %v391
        %v449 = vpop.f32.mrf.mxu0
        %v450 = vadd.f32 %v384, %v449
        %v451 = vpop.f32.mrf.mxu0
        %v452 = vadd.f32 %v384, %v451
        %453 = vmatmul.bf16.gmra.mxu0 %v394
        %v454 = vpop.f32.mrf.mxu0
        %v455 = vadd.f32 %v384, %v454
        %v456 = vpop.f32.mrf.mxu0
        %v457 = vadd.f32 %v384, %v456
        %458 = vmatmul.bf16.gmra.mxu0 %v397
        %v459 = vpop.f32.mrf.mxu0
        %v460 = vadd.f32 %v384, %v459
        %v461 = vpop.f32.mrf.mxu0
        %v462 = vadd.f32 %v384, %v461
        %463 = vmatmul.bf16.gmra.mxu0 %v400
        %v464 = vpop.f32.mrf.mxu0
        %v465 = vadd.f32 %v384, %v464
        %v466 = vpop.f32.mrf.mxu0
        %v467 = vadd.f32 %v384, %v466
        %468 = vmatmul.bf16.gmra.mxu0 %v403
        %v469 = vpop.f32.mrf.mxu0
        %v470 = vadd.f32 %v384, %v469
        %v471 = vpop.f32.mrf.mxu0
        %v472 = vadd.f32 %v384, %v471
        %473 = vmatmul.bf16.gmra.mxu0 %v406
        %v474 = vpop.f32.mrf.mxu0
        %v475 = vadd.f32 %v384, %v474
        %v476 = vpop.f32.mrf.mxu0
        %v477 = vadd.f32 %v384, %v476
        %478 = vmatmul.bf16.gmra.mxu0 %v409
        %v479 = vpop.f32.mrf.mxu0
        %v480 = vadd.f32 %v384, %v479
        %v481 = vpop.f32.mrf.mxu0
        %v482 = vadd.f32 %v384, %v481
        %483 = vmatmul.bf16.gmra.mxu0 %v412
        %v484 = vpop.f32.mrf.mxu0
        %v485 = vadd.f32 %v384, %v484
        %v486 = vpop.f32.mrf.mxu0
        %v487 = vadd.f32 %v384, %v486
        %488 = vmatmul.bf16.gmra.mxu0 %v415
        %v489 = vpop.f32.mrf.mxu0
        %v490 = vadd.f32 %v384, %v489
        %v491 = vpop.f32.mrf.mxu0
        %v492 = vadd.f32 %v384, %v491
        %493 = vmatmul.bf16.gmra.mxu0 %v418
        %v494 = vpop.f32.mrf.mxu0
        %v495 = vadd.f32 %v384, %v494
        %v496 = vpop.f32.mrf.mxu0
        %v497 = vadd.f32 %v384, %v496
        %498 = vmatmul.bf16.gmra.mxu0 %v421
        %v499 = vpop.f32.mrf.mxu0
        %v500 = vadd.f32 %v384, %v499
        %v501 = vpop.f32.mrf.mxu0
        %v502 = vadd.f32 %v384, %v501
        %503 = vmatmul.bf16.gmra.mxu0 %v424
        %v504 = vpop.f32.mrf.mxu0
        %v505 = vadd.f32 %v384, %v504
        %v506 = vpop.f32.mrf.mxu0
        %v507 = vadd.f32 %v384, %v506
        %508 = vmatmul.bf16.gmra.mxu0 %v427
        %v509 = vpop.f32.mrf.mxu0
        %v510 = vadd.f32 %v384, %v509
        %v511 = vpop.f32.mrf.mxu0
        %v512 = vadd.f32 %v384, %v511
        %513 = vmatmul.bf16.gmra.mxu0 %v430
        %v514 = vpop.f32.mrf.mxu0
        %v515 = vadd.f32 %v384, %v514
        %v516 = vpop.f32.mrf.mxu0
        %v517 = vadd.f32 %v384, %v516
        %518 = vmatmul.bf16.gmra.mxu0 %v433
        %v519 = vpop.f32.mrf.mxu0
        %v520 = vadd.f32 %v384, %v519
        %v521 = vpop.f32.mrf.mxu0
        %v522 = vadd.f32 %v384, %v521
        %523 = vdwg.mxu0
        %v524 = vmax.f32 %v445, 0.0
        %v525 = vmax.f32 %v447, 0.0
        %v526 = vmax.f32 %v450, 0.0
        %v527 = vmax.f32 %v452, 0.0
        %v528 = vmax.f32 %v455, 0.0
        %v529 = vmax.f32 %v457, 0.0
        %v530 = vmax.f32 %v460, 0.0
        %v531 = vmax.f32 %v462, 0.0
        %v532 = vmax.f32 %v465, 0.0
        %v533 = vmax.f32 %v467, 0.0
        %v534 = vmax.f32 %v470, 0.0
        %v535 = vmax.f32 %v472, 0.0
        %v536 = vmax.f32 %v475, 0.0
        %v537 = vmax.f32 %v477, 0.0
        %v538 = vmax.f32 %v480, 0.0
        %v539 = vmax.f32 %v482, 0.0
        %v540 = vmax.f32 %v485, 0.0
        %v541 = vmax.f32 %v487, 0.0
        %v542 = vmax.f32 %v490, 0.0
        %v543 = vmax.f32 %v492, 0.0
        %v544 = vmax.f32 %v495, 0.0
        %v545 = vmax.f32 %v497, 0.0
        %v546 = vmax.f32 %v500, 0.0
        %v547 = vmax.f32 %v502, 0.0
        %v548 = vmax.f32 %v505, 0.0
        %v549 = vmax.f32 %v507, 0.0
        %v550 = vmax.f32 %v510, 0.0
        %v551 = vmax.f32 %v512, 0.0
        %v552 = vmax.f32 %v515, 0.0
        %v553 = vmax.f32 %v517, 0.0
        %v554 = vmax.f32 %v520, 0.0
        %v555 = vmax.f32 %v522, 0.0
        %v556 = vld [vmem:[%s5] sm:$0xff]
        %v557 = vld [vmem:[%s5 + $0x8] sm:$0xff]
        %v558 = vld [vmem:[%s5 + $0x10] sm:$0xff]
        %v559 = vld [vmem:[%s5 + $0x18] sm:$0xff]
        %v560 = vld [vmem:[%s5 + $0x20] sm:$0xff]
        %v561 = vld [vmem:[%s5 + $0x28] sm:$0xff]
        %v562 = vld [vmem:[%s5 + $0x30] sm:$0xff]
        %v563 = vld [vmem:[%s5 + $0x38] sm:$0xff]
        %v564 = vld [vmem:[%s5 + $0x40] sm:$0xff]
        %v565 = vld [vmem:[%s5 + $0x48] sm:$0xff]
        %v566 = vld [vmem:[%s5 + $0x50] sm:$0xff]
        %v567 = vld [vmem:[%s5 + $0x58] sm:$0xff]
        %v568 = vld [vmem:[%s5 + $0x60] sm:$0xff]
        %v569 = vld [vmem:[%s5 + $0x68] sm:$0xff]
        %v570 = vld [vmem:[%s5 + $0x70] sm:$0xff]
        %v571 = vld [vmem:[%s5 + $0x78] sm:$0xff]
        %v572 = vpack.c.bf16 %v557, %v556
        %v573 = vpack.c.bf16 %v559, %v558
        %v574 = vpack.c.bf16 %v561, %v560
        %v575 = vpack.c.bf16 %v563, %v562
        %v576 = vpack.c.bf16 %v565, %v564
        %v577 = vpack.c.bf16 %v567, %v566
        %v578 = vpack.c.bf16 %v569, %v568
        %v579 = vpack.c.bf16 %v571, %v570
        %v580 = vld [vmem:[%s6] sm:$0x1]
        %v581 = vpack.c.bf16 %v525, %v524
        %v582 = vpack.c.bf16 %v527, %v526
        %v583 = vpack.c.bf16 %v529, %v528
        %v584 = vpack.c.bf16 %v531, %v530
        %v585 = vpack.c.bf16 %v533, %v532
        %v586 = vpack.c.bf16 %v535, %v534
        %v587 = vpack.c.bf16 %v537, %v536
        %v588 = vpack.c.bf16 %v539, %v538
        %v589 = vpack.c.bf16 %v541, %v540
        %v590 = vpack.c.bf16 %v543, %v542
        %v591 = vpack.c.bf16 %v545, %v544
        %v592 = vpack.c.bf16 %v547, %v546
        %v593 = vpack.c.bf16 %v549, %v548
        %v594 = vpack.c.bf16 %v551, %v550
        %v595 = vpack.c.bf16 %v553, %v552
        %v596 = vpack.c.bf16 %v555, %v554
        %v598 = vperm.slane %v580, 0
        %600 = vmatpush.bf16.msra.mxu0 %v579
        %601 = vmatpush.bf16.msra.mxu0 %v578
        %602 = vmatpush.bf16.msra.mxu0 %v577
        %603 = vmatpush.bf16.msra.mxu0 %v576
        %604 = vmatpush.bf16.msra.mxu0 %v575
        %605 = vmatpush.bf16.msra.mxu0 %v574
        %606 = vmatpush.bf16.msra.mxu0 %v573
        %607 = vmatpush.bf16.msra.mxu0 %v572
        %608 = vmatmul.bf16.gmra.mxu0 %v581
        %v609 = vpop.f32.mrf.mxu0
        %v610 = vadd.f32 %v598, %v609
        %v611 = vpop.f32.mrf.mxu0
        %v612 = vadd.f32 %v598, %v611
        %613 = vmatmul.bf16.gmra.mxu0 %v582
        %v614 = vpop.f32.mrf.mxu0
        %v615 = vadd.f32 %v598, %v614
        %v616 = vpop.f32.mrf.mxu0
        %v617 = vadd.f32 %v598, %v616
        %618 = vmatmul.bf16.gmra.mxu0 %v583
        %v619 = vpop.f32.mrf.mxu0
        %v620 = vadd.f32 %v598, %v619
        %v621 = vpop.f32.mrf.mxu0
        %v622 = vadd.f32 %v598, %v621
        %623 = vmatmul.bf16.gmra.mxu0 %v584
        %v624 = vpop.f32.mrf.mxu0
        %v625 = vadd.f32 %v598, %v624
        %v626 = vpop.f32.mrf.mxu0
        %v627 = vadd.f32 %v598, %v626
        %628 = vmatmul.bf16.gmra.mxu0 %v585
        %v629 = vpop.f32.mrf.mxu0
        %v630 = vadd.f32 %v598, %v629
        %v631 = vpop.f32.mrf.mxu0
        %v632 = vadd.f32 %v598, %v631
        %633 = vmatmul.bf16.gmra.mxu0 %v586
        %v634 = vpop.f32.mrf.mxu0
        %v635 = vadd.f32 %v598, %v634
        %v636 = vpop.f32.mrf.mxu0
        %v637 = vadd.f32 %v598, %v636
        %638 = vmatmul.bf16.gmra.mxu0 %v587
        %v639 = vpop.f32.mrf.mxu0
        %v640 = vadd.f32 %v598, %v639
        %v641 = vpop.f32.mrf.mxu0
        %v642 = vadd.f32 %v598, %v641
        %643 = vmatmul.bf16.gmra.mxu0 %v588
        %v644 = vpop.f32.mrf.mxu0
        %v645 = vadd.f32 %v598, %v644
        %v646 = vpop.f32.mrf.mxu0
        %v647 = vadd.f32 %v598, %v646
        %648 = vmatmul.bf16.gmra.mxu0 %v589
        %v649 = vpop.f32.mrf.mxu0
        %v650 = vadd.f32 %v598, %v649
        %v651 = vpop.f32.mrf.mxu0
        %v652 = vadd.f32 %v598, %v651
        %653 = vmatmul.bf16.gmra.mxu0 %v590
        %v654 = vpop.f32.mrf.mxu0
        %v655 = vadd.f32 %v598, %v654
        %v656 = vpop.f32.mrf.mxu0
        %v657 = vadd.f32 %v598, %v656
        %658 = vmatmul.bf16.gmra.mxu0 %v591
        %v659 = vpop.f32.mrf.mxu0
        %v660 = vadd.f32 %v598, %v659
        %v661 = vpop.f32.mrf.mxu0
        %v662 = vadd.f32 %v598, %v661
        %663 = vmatmul.bf16.gmra.mxu0 %v592
        %v664 = vpop.f32.mrf.mxu0
        %v665 = vadd.f32 %v598, %v664
        %v666 = vpop.f32.mrf.mxu0
        %v667 = vadd.f32 %v598, %v666
        %668 = vmatmul.bf16.gmra.mxu0 %v593
        %v669 = vpop.f32.mrf.mxu0
        %v670 = vadd.f32 %v598, %v669
        %v671 = vpop.f32.mrf.mxu0
        %v672 = vadd.f32 %v598, %v671
        %673 = vmatmul.bf16.gmra.mxu0 %v594
        %v674 = vpop.f32.mrf.mxu0
        %v675 = vadd.f32 %v598, %v674
        %v676 = vpop.f32.mrf.mxu0
        %v677 = vadd.f32 %v598, %v676
        %678 = vmatmul.bf16.gmra.mxu0 %v595
        %v679 = vpop.f32.mrf.mxu0
        %v680 = vadd.f32 %v598, %v679
        %v681 = vpop.f32.mrf.mxu0
        %v682 = vadd.f32 %v598, %v681
        %683 = vmatmul.bf16.gmra.mxu0 %v596
        %v684 = vpop.f32.mrf.mxu0
        %v685 = vadd.f32 %v598, %v684
        %v686 = vpop.f32.mrf.mxu0
        %v687 = vadd.f32 %v598, %v686
        %688 = vdwg.mxu0
        %v689 = vmax.f32 %v610, 0.0
        %v690 = vmax.f32 %v612, 0.0
        %v691 = vmax.f32 %v615, 0.0
        %v692 = vmax.f32 %v617, 0.0
        %v693 = vmax.f32 %v620, 0.0
        %v694 = vmax.f32 %v622, 0.0
        %v695 = vmax.f32 %v625, 0.0
        %v696 = vmax.f32 %v627, 0.0
        %v697 = vmax.f32 %v630, 0.0
        %v698 = vmax.f32 %v632, 0.0
        %v699 = vmax.f32 %v635, 0.0
        %v700 = vmax.f32 %v637, 0.0
        %v701 = vmax.f32 %v640, 0.0
        %v702 = vmax.f32 %v642, 0.0
        %v703 = vmax.f32 %v645, 0.0
        %v704 = vmax.f32 %v647, 0.0
        %v705 = vmax.f32 %v650, 0.0
        %v706 = vmax.f32 %v652, 0.0
        %v707 = vmax.f32 %v655, 0.0
        %v708 = vmax.f32 %v657, 0.0
        %v709 = vmax.f32 %v660, 0.0
        %v710 = vmax.f32 %v662, 0.0
        %v711 = vmax.f32 %v665, 0.0
        %v712 = vmax.f32 %v667, 0.0
        %v713 = vmax.f32 %v670, 0.0
        %v714 = vmax.f32 %v672, 0.0
        %v715 = vmax.f32 %v675, 0.0
        %v716 = vmax.f32 %v677, 0.0
        %v717 = vmax.f32 %v680, 0.0
        %v718 = vmax.f32 %v682, 0.0
        %v719 = vmax.f32 %v685, 0.0
        %v720 = vmax.f32 %v687, 0.0
        %v721 = vld [vmem:[%s7] sm:$0xff]
        %v722 = vld [vmem:[%s7 + $0x8] sm:$0xff]
        %v723 = vld [vmem:[%s7 + $0x10] sm:$0xff]
        %v724 = vld [vmem:[%s7 + $0x18] sm:$0xff]
        %v725 = vld [vmem:[%s7 + $0x20] sm:$0xff]
        %v726 = vld [vmem:[%s7 + $0x28] sm:$0xff]
        %v727 = vld [vmem:[%s7 + $0x30] sm:$0xff]
        %v728 = vld [vmem:[%s7 + $0x38] sm:$0xff]
        %v729 = vld [vmem:[%s7 + $0x40] sm:$0xff]
        %v730 = vld [vmem:[%s7 + $0x48] sm:$0xff]
        %v731 = vld [vmem:[%s7 + $0x50] sm:$0xff]
        %v732 = vld [vmem:[%s7 + $0x58] sm:$0xff]
        %v733 = vld [vmem:[%s7 + $0x60] sm:$0xff]
        %v734 = vld [vmem:[%s7 + $0x68] sm:$0xff]
        %v735 = vld [vmem:[%s7 + $0x70] sm:$0xff]
        %v736 = vld [vmem:[%s7 + $0x78] sm:$0xff]
        %v737 = vpack.c.bf16 %v722, %v721
        %v738 = vpack.c.bf16 %v724, %v723
        %v739 = vpack.c.bf16 %v726, %v725
        %v740 = vpack.c.bf16 %v728, %v727
        %v741 = vpack.c.bf16 %v730, %v729
        %v742 = vpack.c.bf16 %v732, %v731
        %v743 = vpack.c.bf16 %v734, %v733
        %v744 = vpack.c.bf16 %v736, %v735
        %v745 = vld [vmem:[%s8] sm:$0x1]
        %v746 = vpack.c.bf16 %v690, %v689
        %v747 = vpack.c.bf16 %v692, %v691
        %v748 = vpack.c.bf16 %v694, %v693
        %v749 = vpack.c.bf16 %v696, %v695
        %v750 = vpack.c.bf16 %v698, %v697
        %v751 = vpack.c.bf16 %v700, %v699
        %v752 = vpack.c.bf16 %v702, %v701
        %v753 = vpack.c.bf16 %v704, %v703
        %v754 = vpack.c.bf16 %v706, %v705
        %v755 = vpack.c.bf16 %v708, %v707
        %v756 = vpack.c.bf16 %v710, %v709
        %v757 = vpack.c.bf16 %v712, %v711
        %v758 = vpack.c.bf16 %v714, %v713
        %v759 = vpack.c.bf16 %v716, %v715
        %v760 = vpack.c.bf16 %v718, %v717
        %v761 = vpack.c.bf16 %v720, %v719
        %v763 = vperm.slane %v745, 0
        %765 = vmatpush.bf16.msra.mxu0 %v744
        %766 = vmatpush.bf16.msra.mxu0 %v743
        %767 = vmatpush.bf16.msra.mxu0 %v742
        %768 = vmatpush.bf16.msra.mxu0 %v741
        %769 = vmatpush.bf16.msra.mxu0 %v740
        %770 = vmatpush.bf16.msra.mxu0 %v739
        %771 = vmatpush.bf16.msra.mxu0 %v738
        %772 = vmatpush.bf16.msra.mxu0 %v737
        %773 = vmatmul.bf16.gmra.mxu0 %v746
        %v774 = vpop.f32.mrf.mxu0
        %v775 = vadd.f32 %v763, %v774
        %v776 = vpop.f32.mrf.mxu0
        %v777 = vadd.f32 %v763, %v776
        %778 = vmatmul.bf16.gmra.mxu0 %v747
        %v779 = vpop.f32.mrf.mxu0
        %v780 = vadd.f32 %v763, %v779
        %v781 = vpop.f32.mrf.mxu0
        %v782 = vadd.f32 %v763, %v781
        %783 = vmatmul.bf16.gmra.mxu0 %v748
        %v784 = vpop.f32.mrf.mxu0
        %v785 = vadd.f32 %v763, %v784
        %v786 = vpop.f32.mrf.mxu0
        %v787 = vadd.f32 %v763, %v786
        %788 = vmatmul.bf16.gmra.mxu0 %v749
        %v789 = vpop.f32.mrf.mxu0
        %v790 = vadd.f32 %v763, %v789
        %v791 = vpop.f32.mrf.mxu0
        %v792 = vadd.f32 %v763, %v791
        %793 = vmatmul.bf16.gmra.mxu0 %v750
        %v794 = vpop.f32.mrf.mxu0
        %v795 = vadd.f32 %v763, %v794
        %v796 = vpop.f32.mrf.mxu0
        %v797 = vadd.f32 %v763, %v796
        %798 = vmatmul.bf16.gmra.mxu0 %v751
        %v799 = vpop.f32.mrf.mxu0
        %v800 = vadd.f32 %v763, %v799
        %v801 = vpop.f32.mrf.mxu0
        %v802 = vadd.f32 %v763, %v801
        %803 = vmatmul.bf16.gmra.mxu0 %v752
        %v804 = vpop.f32.mrf.mxu0
        %v805 = vadd.f32 %v763, %v804
        %v806 = vpop.f32.mrf.mxu0
        %v807 = vadd.f32 %v763, %v806
        %808 = vmatmul.bf16.gmra.mxu0 %v753
        %v809 = vpop.f32.mrf.mxu0
        %v810 = vadd.f32 %v763, %v809
        %v811 = vpop.f32.mrf.mxu0
        %v812 = vadd.f32 %v763, %v811
        %813 = vmatmul.bf16.gmra.mxu0 %v754
        %v814 = vpop.f32.mrf.mxu0
        %v815 = vadd.f32 %v763, %v814
        %v816 = vpop.f32.mrf.mxu0
        %v817 = vadd.f32 %v763, %v816
        %818 = vmatmul.bf16.gmra.mxu0 %v755
        %v819 = vpop.f32.mrf.mxu0
        %v820 = vadd.f32 %v763, %v819
        %v821 = vpop.f32.mrf.mxu0
        %v822 = vadd.f32 %v763, %v821
        %823 = vmatmul.bf16.gmra.mxu0 %v756
        %v824 = vpop.f32.mrf.mxu0
        %v825 = vadd.f32 %v763, %v824
        %v826 = vpop.f32.mrf.mxu0
        %v827 = vadd.f32 %v763, %v826
        %828 = vmatmul.bf16.gmra.mxu0 %v757
        %v829 = vpop.f32.mrf.mxu0
        %v830 = vadd.f32 %v763, %v829
        %v831 = vpop.f32.mrf.mxu0
        %v832 = vadd.f32 %v763, %v831
        %833 = vmatmul.bf16.gmra.mxu0 %v758
        %v834 = vpop.f32.mrf.mxu0
        %v835 = vadd.f32 %v763, %v834
        %v836 = vpop.f32.mrf.mxu0
        %v837 = vadd.f32 %v763, %v836
        %838 = vmatmul.bf16.gmra.mxu0 %v759
        %v839 = vpop.f32.mrf.mxu0
        %v840 = vadd.f32 %v763, %v839
        %v841 = vpop.f32.mrf.mxu0
        %v842 = vadd.f32 %v763, %v841
        %843 = vmatmul.bf16.gmra.mxu0 %v760
        %v844 = vpop.f32.mrf.mxu0
        %v845 = vadd.f32 %v763, %v844
        %v846 = vpop.f32.mrf.mxu0
        %v847 = vadd.f32 %v763, %v846
        %848 = vmatmul.bf16.gmra.mxu0 %v761
        %v849 = vpop.f32.mrf.mxu0
        %v850 = vadd.f32 %v763, %v849
        %v851 = vpop.f32.mrf.mxu0
        %v852 = vadd.f32 %v763, %v851
        %853 = vdwg.mxu0
        %s854 = smul.u32 %s21, 256
        %s855 = scalar_lea.vmem [#allocation2], %s854
        %856 = vst [vmem:[%s855] sm:$0xff] %v775
        %857 = vst [vmem:[%s855 + $0x8] sm:$0xff] %v777
        %858 = vst [vmem:[%s855 + $0x10] sm:$0xff] %v780
        %859 = vst [vmem:[%s855 + $0x18] sm:$0xff] %v782
        %860 = vst [vmem:[%s855 + $0x20] sm:$0xff] %v785
        %861 = vst [vmem:[%s855 + $0x28] sm:$0xff] %v787
        %862 = vst [vmem:[%s855 + $0x30] sm:$0xff] %v790
        %863 = vst [vmem:[%s855 + $0x38] sm:$0xff] %v792
        %864 = vst [vmem:[%s855 + $0x40] sm:$0xff] %v795
        %865 = vst [vmem:[%s855 + $0x48] sm:$0xff] %v797
        %866 = vst [vmem:[%s855 + $0x50] sm:$0xff] %v800
        %867 = vst [vmem:[%s855 + $0x58] sm:$0xff] %v802
        %868 = vst [vmem:[%s855 + $0x60] sm:$0xff] %v805
        %869 = vst [vmem:[%s855 + $0x68] sm:$0xff] %v807
        %870 = vst [vmem:[%s855 + $0x70] sm:$0xff] %v810
        %871 = vst [vmem:[%s855 + $0x78] sm:$0xff] %v812
        %872 = vst [vmem:[%s855 + $0x80] sm:$0xff] %v815
        %873 = vst [vmem:[%s855 + $0x88] sm:$0xff] %v817
        %874 = vst [vmem:[%s855 + $0x90] sm:$0xff] %v820
        %875 = vst [vmem:[%s855 + $0x98] sm:$0xff] %v822
        %876 = vst [vmem:[%s855 + $0xa0] sm:$0xff] %v825
        %877 = vst [vmem:[%s855 + $0xa8] sm:$0xff] %v827
        %878 = vst [vmem:[%s855 + $0xb0] sm:$0xff] %v830
        %879 = vst [vmem:[%s855 + $0xb8] sm:$0xff] %v832
        %880 = vst [vmem:[%s855 + $0xc0] sm:$0xff] %v835
        %881 = vst [vmem:[%s855 + $0xc8] sm:$0xff] %v837
        %882 = vst [vmem:[%s855 + $0xd0] sm:$0xff] %v840
        %883 = vst [vmem:[%s855 + $0xd8] sm:$0xff] %v842
        %884 = vst [vmem:[%s855 + $0xe0] sm:$0xff] %v845
        %885 = vst [vmem:[%s855 + $0xe8] sm:$0xff] %v847
        %886 = vst [vmem:[%s855 + $0xf0] sm:$0xff] %v850
        %887 = vst [vmem:[%s855 + $0xf8] sm:$0xff] %v852
        %p888 = scmp.eq.s32.totalorder %s21, 1
        // Predicated region
        $region57: #{task_mlp_forward.1} parent=55 // pred_check
          %p889 = pneg %p888
        $region58: #{task_mlp_forward.1} parent=55 // pred_check_branch
          %891 = sbr.rel (%p889) target = $region60
        $region59: #{task_mlp_forward.1} parent=55 // pred_region
          %v892 = vld [vmem:[#allocation2] sm:$0xff]
          %v893 = vld [vmem:[#allocation2 + $0x8] sm:$0xff]
          %v894 = vld [vmem:[#allocation2 + $0x10] sm:$0xff]
          %v895 = vld [vmem:[#allocation2 + $0x18] sm:$0xff]
          %v896 = vld [vmem:[#allocation2 + $0x20] sm:$0xff]
          %v897 = vld [vmem:[#allocation2 + $0x28] sm:$0xff]
          %v898 = vld [vmem:[#allocation2 + $0x30] sm:$0xff]
          %v899 = vld [vmem:[#allocation2 + $0x38] sm:$0xff]
          %v900 = vld [vmem:[#allocation2 + $0x40] sm:$0xff]
          %v901 = vld [vmem:[#allocation2 + $0x48] sm:$0xff]
          %v902 = vld [vmem:[#allocation2 + $0x50] sm:$0xff]
          %v903 = vld [vmem:[#allocation2 + $0x58] sm:$0xff]
          %v904 = vld [vmem:[#allocation2 + $0x60] sm:$0xff]
          %v905 = vld [vmem:[#allocation2 + $0x68] sm:$0xff]
          %v906 = vld [vmem:[#allocation2 + $0x70] sm:$0xff]
          %v907 = vld [vmem:[#allocation2 + $0x78] sm:$0xff]
          %v908 = vld [vmem:[#allocation2 + $0x80] sm:$0xff]
          %v909 = vld [vmem:[#allocation2 + $0x88] sm:$0xff]
          %v910 = vld [vmem:[#allocation2 + $0x90] sm:$0xff]
          %v911 = vld [vmem:[#allocation2 + $0x98] sm:$0xff]
          %v912 = vld [vmem:[#allocation2 + $0xa0] sm:$0xff]
          %v913 = vld [vmem:[#allocation2 + $0xa8] sm:$0xff]
          %v914 = vld [vmem:[#allocation2 + $0xb0] sm:$0xff]
          %v915 = vld [vmem:[#allocation2 + $0xb8] sm:$0xff]
          %v916 = vld [vmem:[#allocation2 + $0xc0] sm:$0xff]
          %v917 = vld [vmem:[#allocation2 + $0xc8] sm:$0xff]
          %v918 = vld [vmem:[#allocation2 + $0xd0] sm:$0xff]
          %v919 = vld [vmem:[#allocation2 + $0xd8] sm:$0xff]
          %v920 = vld [vmem:[#allocation2 + $0xe0] sm:$0xff]
          %v921 = vld [vmem:[#allocation2 + $0xe8] sm:$0xff]
          %v922 = vld [vmem:[#allocation2 + $0xf0] sm:$0xff]
          %v923 = vld [vmem:[#allocation2 + $0xf8] sm:$0xff]
          %v924 = vld [vmem:[#allocation2 + $0x100] sm:$0xff]
          %v925 = vld [vmem:[#allocation2 + $0x108] sm:$0xff]
          %v926 = vld [vmem:[#allocation2 + $0x110] sm:$0xff]
          %v927 = vld [vmem:[#allocation2 + $0x118] sm:$0xff]
          %v928 = vld [vmem:[#allocation2 + $0x120] sm:$0xff]
          %v929 = vld [vmem:[#allocation2 + $0x128] sm:$0xff]
          %v930 = vld [vmem:[#allocation2 + $0x130] sm:$0xff]
          %v931 = vld [vmem:[#allocation2 + $0x138] sm:$0xff]
          %v932 = vld [vmem:[#allocation2 + $0x140] sm:$0xff]
          %v933 = vld [vmem:[#allocation2 + $0x148] sm:$0xff]
          %v934 = vld [vmem:[#allocation2 + $0x150] sm:$0xff]
          %v935 = vld [vmem:[#allocation2 + $0x158] sm:$0xff]
          %v936 = vld [vmem:[#allocation2 + $0x160] sm:$0xff]
          %v937 = vld [vmem:[#allocation2 + $0x168] sm:$0xff]
          %v938 = vld [vmem:[#allocation2 + $0x170] sm:$0xff]
          %v939 = vld [vmem:[#allocation2 + $0x178] sm:$0xff]
          %v940 = vld [vmem:[#allocation2 + $0x180] sm:$0xff]
          %v941 = vld [vmem:[#allocation2 + $0x188] sm:$0xff]
          %v942 = vld [vmem:[#allocation2 + $0x190] sm:$0xff]
          %v943 = vld [vmem:[#allocation2 + $0x198] sm:$0xff]
          %v944 = vld [vmem:[#allocation2 + $0x1a0] sm:$0xff]
          %v945 = vld [vmem:[#allocation2 + $0x1a8] sm:$0xff]
          %v946 = vld [vmem:[#allocation2 + $0x1b0] sm:$0xff]
          %v947 = vld [vmem:[#allocation2 + $0x1b8] sm:$0xff]
          %v948 = vld [vmem:[#allocation2 + $0x1c0] sm:$0xff]
          %v949 = vld [vmem:[#allocation2 + $0x1c8] sm:$0xff]
          %v950 = vld [vmem:[#allocation2 + $0x1d0] sm:$0xff]
          %v951 = vld [vmem:[#allocation2 + $0x1d8] sm:$0xff]
          %v952 = vld [vmem:[#allocation2 + $0x1e0] sm:$0xff]
          %v953 = vld [vmem:[#allocation2 + $0x1e8] sm:$0xff]
          %v954 = vld [vmem:[#allocation2 + $0x1f0] sm:$0xff]
          %v955 = vld [vmem:[#allocation2 + $0x1f8] sm:$0xff]
          %956 = vxpose.xlu0.b32.start [1/16] %v892, 128
          %957 = vxpose.xlu0.b32.cont [2/16] %v893, 128
          %958 = vxpose.xlu0.b32.cont [3/16] %v894, 128
          %959 = vxpose.xlu0.b32.cont [4/16] %v895, 128
          %960 = vxpose.xlu0.b32.cont [5/16] %v896, 128
          %961 = vxpose.xlu0.b32.cont [6/16] %v897, 128
          %962 = vxpose.xlu0.b32.cont [7/16] %v898, 128
          %963 = vxpose.xlu0.b32.cont [8/16] %v899, 128
          %964 = vxpose.xlu0.b32.cont [9/16] %v900, 128
          %965 = vxpose.xlu0.b32.cont [10/16] %v901, 128
          %966 = vxpose.xlu0.b32.cont [11/16] %v902, 128
          %967 = vxpose.xlu0.b32.cont [12/16] %v903, 128
          %968 = vxpose.xlu0.b32.cont [13/16] %v904, 128
          %969 = vxpose.xlu0.b32.cont [14/16] %v905, 128
          %970 = vxpose.xlu0.b32.cont [15/16] %v906, 128
          %971 = vxpose.xlu0.b32.end [16/16] %v907, 128
          %v972 = vpop.trf.xlu0
          %v973 = vpop.trf.xlu0
          %v974 = vpop.trf.xlu0
          %v975 = vpop.trf.xlu0
          %v976 = vpop.trf.xlu0
          %v977 = vpop.trf.xlu0
          %v978 = vpop.trf.xlu0
          %v979 = vpop.trf.xlu0
          %v980 = vpop.trf.xlu0
          %v981 = vpop.trf.xlu0
          %v982 = vpop.trf.xlu0
          %v983 = vpop.trf.xlu0
          %v984 = vpop.trf.xlu0
          %v985 = vpop.trf.xlu0
          %v986 = vpop.trf.xlu0
          %v987 = vpop.trf.xlu0
          %988 = vxpose.xlu0.b32.start [1/16] %v908, 128
          %989 = vxpose.xlu0.b32.cont [2/16] %v909, 128
          %990 = vxpose.xlu0.b32.cont [3/16] %v910, 128
          %991 = vxpose.xlu0.b32.cont [4/16] %v911, 128
          %992 = vxpose.xlu0.b32.cont [5/16] %v912, 128
          %993 = vxpose.xlu0.b32.cont [6/16] %v913, 128
          %994 = vxpose.xlu0.b32.cont [7/16] %v914, 128
          %995 = vxpose.xlu0.b32.cont [8/16] %v915, 128
          %996 = vxpose.xlu0.b32.cont [9/16] %v916, 128
          %997 = vxpose.xlu0.b32.cont [10/16] %v917, 128
          %998 = vxpose.xlu0.b32.cont [11/16] %v918, 128
          %999 = vxpose.xlu0.b32.cont [12/16] %v919, 128
          %1000 = vxpose.xlu0.b32.cont [13/16] %v920, 128
          %1001 = vxpose.xlu0.b32.cont [14/16] %v921, 128
          %1002 = vxpose.xlu0.b32.cont [15/16] %v922, 128
          %1003 = vxpose.xlu0.b32.end [16/16] %v923, 128
          %v1004 = vpop.trf.xlu0
          %v1005 = vpop.trf.xlu0
          %v1006 = vpop.trf.xlu0
          %v1007 = vpop.trf.xlu0
          %v1008 = vpop.trf.xlu0
          %v1009 = vpop.trf.xlu0
          %v1010 = vpop.trf.xlu0
          %v1011 = vpop.trf.xlu0
          %v1012 = vpop.trf.xlu0
          %v1013 = vpop.trf.xlu0
          %v1014 = vpop.trf.xlu0
          %v1015 = vpop.trf.xlu0
          %v1016 = vpop.trf.xlu0
          %v1017 = vpop.trf.xlu0
          %v1018 = vpop.trf.xlu0
          %v1019 = vpop.trf.xlu0
          %1020 = vxpose.xlu0.b32.start [1/16] %v924, 128
          %1021 = vxpose.xlu0.b32.cont [2/16] %v925, 128
          %1022 = vxpose.xlu0.b32.cont [3/16] %v926, 128
          %1023 = vxpose.xlu0.b32.cont [4/16] %v927, 128
          %1024 = vxpose.xlu0.b32.cont [5/16] %v928, 128
          %1025 = vxpose.xlu0.b32.cont [6/16] %v929, 128
          %1026 = vxpose.xlu0.b32.cont [7/16] %v930, 128
          %1027 = vxpose.xlu0.b32.cont [8/16] %v931, 128
          %1028 = vxpose.xlu0.b32.cont [9/16] %v932, 128
          %1029 = vxpose.xlu0.b32.cont [10/16] %v933, 128
          %1030 = vxpose.xlu0.b32.cont [11/16] %v934, 128
          %1031 = vxpose.xlu0.b32.cont [12/16] %v935, 128
          %1032 = vxpose.xlu0.b32.cont [13/16] %v936, 128
          %1033 = vxpose.xlu0.b32.cont [14/16] %v937, 128
          %1034 = vxpose.xlu0.b32.cont [15/16] %v938, 128
          %1035 = vxpose.xlu0.b32.end [16/16] %v939, 128
          %v1036 = vpop.trf.xlu0
          %v1037 = vpop.trf.xlu0
          %v1038 = vpop.trf.xlu0
          %v1039 = vpop.trf.xlu0
          %v1040 = vpop.trf.xlu0
          %v1041 = vpop.trf.xlu0
          %v1042 = vpop.trf.xlu0
          %v1043 = vpop.trf.xlu0
          %v1044 = vpop.trf.xlu0
          %v1045 = vpop.trf.xlu0
          %v1046 = vpop.trf.xlu0
          %v1047 = vpop.trf.xlu0
          %v1048 = vpop.trf.xlu0
          %v1049 = vpop.trf.xlu0
          %v1050 = vpop.trf.xlu0
          %v1051 = vpop.trf.xlu0
          %1052 = vxpose.xlu0.b32.start [1/16] %v940, 128
          %1053 = vxpose.xlu0.b32.cont [2/16] %v941, 128
          %1054 = vxpose.xlu0.b32.cont [3/16] %v942, 128
          %1055 = vxpose.xlu0.b32.cont [4/16] %v943, 128
          %1056 = vxpose.xlu0.b32.cont [5/16] %v944, 128
          %1057 = vxpose.xlu0.b32.cont [6/16] %v945, 128
          %1058 = vxpose.xlu0.b32.cont [7/16] %v946, 128
          %1059 = vxpose.xlu0.b32.cont [8/16] %v947, 128
          %1060 = vxpose.xlu0.b32.cont [9/16] %v948, 128
          %1061 = vxpose.xlu0.b32.cont [10/16] %v949, 128
          %1062 = vxpose.xlu0.b32.cont [11/16] %v950, 128
          %1063 = vxpose.xlu0.b32.cont [12/16] %v951, 128
          %1064 = vxpose.xlu0.b32.cont [13/16] %v952, 128
          %1065 = vxpose.xlu0.b32.cont [14/16] %v953, 128
          %1066 = vxpose.xlu0.b32.cont [15/16] %v954, 128
          %1067 = vxpose.xlu0.b32.end [16/16] %v955, 128
          %v1068 = vpop.trf.xlu0
          %v1069 = vpop.trf.xlu0
          %v1070 = vpop.trf.xlu0
          %v1071 = vpop.trf.xlu0
          %v1072 = vpop.trf.xlu0
          %v1073 = vpop.trf.xlu0
          %v1074 = vpop.trf.xlu0
          %v1075 = vpop.trf.xlu0
          %v1076 = vpop.trf.xlu0
          %v1077 = vpop.trf.xlu0
          %v1078 = vpop.trf.xlu0
          %v1079 = vpop.trf.xlu0
          %v1080 = vpop.trf.xlu0
          %v1081 = vpop.trf.xlu0
          %v1082 = vpop.trf.xlu0
          %v1083 = vpop.trf.xlu0
          %v1084 = vlaneseq
          %v1085 = vshrl.u32 %v1084, 7
          %v1086 = vadd.s32 %v1085, 8
          %v1087 = vadd.s32 %v1085, 16
          %v1088 = vadd.s32 %v1085, 24
          %v1089 = vadd.s32 %v1085, 32
          %v1090 = vadd.s32 %v1085, 40
          %v1091 = vadd.s32 %v1085, 48
          %v1092 = vadd.s32 %v1085, 56
          %v1093 = vadd.s32 %v1085, 64
          %v1094 = vadd.s32 %v1085, 72
          %v1095 = vadd.s32 %v1085, 80
          %v1096 = vadd.s32 %v1085, 88
          %v1097 = vadd.s32 %v1085, 96
          %v1098 = vadd.s32 %v1085, 104
          %v1099 = vadd.s32 %v1085, 112
          %v1100 = vadd.s32 %v1085, 120
          %v1101 = vadd.s32 %v1085, 128
          %v1102 = vadd.s32 %v1085, 136
          %v1103 = vadd.s32 %v1085, 144
          %v1104 = vadd.s32 %v1085, 152
          %v1105 = vadd.s32 %v1085, 160
          %v1106 = vadd.s32 %v1085, 168
          %v1107 = vadd.s32 %v1085, 176
          %v1108 = vadd.s32 %v1085, 184
          %v1109 = vadd.s32 %v1085, 192
          %v1110 = vadd.s32 %v1085, 200
          %v1111 = vadd.s32 %v1085, 208
          %v1112 = vadd.s32 %v1085, 216
          %v1113 = vadd.s32 %v1085, 224
          %v1114 = vadd.s32 %v1085, 232
          %v1115 = vadd.s32 %v1085, 240
          %v1116 = vadd.s32 %v1085, 248
          %v1117 = vadd.s32 %v1085, 256
          %v1118 = vadd.s32 %v1085, 264
          %v1119 = vadd.s32 %v1085, 272
          %v1120 = vadd.s32 %v1085, 280
          %v1121 = vadd.s32 %v1085, 288
          %v1122 = vadd.s32 %v1085, 296
          %v1123 = vadd.s32 %v1085, 304
          %v1124 = vadd.s32 %v1085, 312
          %v1125 = vadd.s32 %v1085, 320
          %v1126 = vadd.s32 %v1085, 328
          %v1127 = vadd.s32 %v1085, 336
          %v1128 = vadd.s32 %v1085, 344
          %v1129 = vadd.s32 %v1085, 352
          %v1130 = vadd.s32 %v1085, 360
          %v1131 = vadd.s32 %v1085, 368
          %v1132 = vadd.s32 %v1085, 376
          %v1133 = vadd.s32 %v1085, 384
          %v1134 = vadd.s32 %v1085, 392
          %v1135 = vadd.s32 %v1085, 400
          %v1136 = vadd.s32 %v1085, 408
          %v1137 = vadd.s32 %v1085, 416
          %v1138 = vadd.s32 %v1085, 424
          %v1139 = vadd.s32 %v1085, 432
          %v1140 = vadd.s32 %v1085, 440
          %v1141 = vadd.s32 %v1085, 448
          %v1142 = vadd.s32 %v1085, 456
          %v1143 = vadd.s32 %v1085, 464
          %v1144 = vadd.s32 %v1085, 472
          %v1145 = vadd.s32 %v1085, 480
          %v1146 = vadd.s32 %v1085, 488
          %v1147 = vadd.s32 %v1085, 496
          %v1148 = vadd.s32 %v1085, 504
          %v1149 = vld [vmem:[%s1] sm:$0x3]
          %v1150 = vperm.slane %v1149, 0
          %v1151 = vperm.slane %v1149, 1
          %vm1152 = vcmp.eq.s32.totalorder %v1085, %v1150
          %vm1153 = vcmp.eq.s32.totalorder %v1085, %v1151
          %vm1154 = vcmp.eq.s32.totalorder %v1086, %v1150
          %vm1155 = vcmp.eq.s32.totalorder %v1086, %v1151
          %vm1156 = vcmp.eq.s32.totalorder %v1087, %v1150
          %vm1157 = vcmp.eq.s32.totalorder %v1087, %v1151
          %vm1158 = vcmp.eq.s32.totalorder %v1088, %v1150
          %vm1159 = vcmp.eq.s32.totalorder %v1088, %v1151
          %vm1160 = vcmp.eq.s32.totalorder %v1089, %v1150
          %vm1161 = vcmp.eq.s32.totalorder %v1089, %v1151
          %vm1162 = vcmp.eq.s32.totalorder %v1090, %v1150
          %vm1163 = vcmp.eq.s32.totalorder %v1090, %v1151
          %vm1164 = vcmp.eq.s32.totalorder %v1091, %v1150
          %vm1165 = vcmp.eq.s32.totalorder %v1091, %v1151
          %vm1166 = vcmp.eq.s32.totalorder %v1092, %v1150
          %vm1167 = vcmp.eq.s32.totalorder %v1092, %v1151
          %vm1168 = vcmp.eq.s32.totalorder %v1093, %v1150
          %vm1169 = vcmp.eq.s32.totalorder %v1093, %v1151
          %vm1170 = vcmp.eq.s32.totalorder %v1094, %v1150
          %vm1171 = vcmp.eq.s32.totalorder %v1094, %v1151
          %vm1172 = vcmp.eq.s32.totalorder %v1095, %v1150
          %vm1173 = vcmp.eq.s32.totalorder %v1095, %v1151
          %vm1174 = vcmp.eq.s32.totalorder %v1096, %v1150
          %vm1175 = vcmp.eq.s32.totalorder %v1096, %v1151
          %vm1176 = vcmp.eq.s32.totalorder %v1097, %v1150
          %vm1177 = vcmp.eq.s32.totalorder %v1097, %v1151
          %vm1178 = vcmp.eq.s32.totalorder %v1098, %v1150
          %vm1179 = vcmp.eq.s32.totalorder %v1098, %v1151
          %vm1180 = vcmp.eq.s32.totalorder %v1099, %v1150
          %vm1181 = vcmp.eq.s32.totalorder %v1099, %v1151
          %vm1182 = vcmp.eq.s32.totalorder %v1100, %v1150
          %vm1183 = vcmp.eq.s32.totalorder %v1100, %v1151
          %vm1184 = vcmp.eq.s32.totalorder %v1101, %v1150
          %vm1185 = vcmp.eq.s32.totalorder %v1101, %v1151
          %vm1186 = vcmp.eq.s32.totalorder %v1102, %v1150
          %vm1187 = vcmp.eq.s32.totalorder %v1102, %v1151
          %vm1188 = vcmp.eq.s32.totalorder %v1103, %v1150
          %vm1189 = vcmp.eq.s32.totalorder %v1103, %v1151
          %vm1190 = vcmp.eq.s32.totalorder %v1104, %v1150
          %vm1191 = vcmp.eq.s32.totalorder %v1104, %v1151
          %vm1192 = vcmp.eq.s32.totalorder %v1105, %v1150
          %vm1193 = vcmp.eq.s32.totalorder %v1105, %v1151
          %vm1194 = vcmp.eq.s32.totalorder %v1106, %v1150
          %vm1195 = vcmp.eq.s32.totalorder %v1106, %v1151
          %vm1196 = vcmp.eq.s32.totalorder %v1107, %v1150
          %vm1197 = vcmp.eq.s32.totalorder %v1107, %v1151
          %vm1198 = vcmp.eq.s32.totalorder %v1108, %v1150
          %vm1199 = vcmp.eq.s32.totalorder %v1108, %v1151
          %vm1200 = vcmp.eq.s32.totalorder %v1109, %v1150
          %vm1201 = vcmp.eq.s32.totalorder %v1109, %v1151
          %vm1202 = vcmp.eq.s32.totalorder %v1110, %v1150
          %vm1203 = vcmp.eq.s32.totalorder %v1110, %v1151
          %vm1204 = vcmp.eq.s32.totalorder %v1111, %v1150
          %vm1205 = vcmp.eq.s32.totalorder %v1111, %v1151
          %vm1206 = vcmp.eq.s32.totalorder %v1112, %v1150
          %vm1207 = vcmp.eq.s32.totalorder %v1112, %v1151
          %vm1208 = vcmp.eq.s32.totalorder %v1113, %v1150
          %vm1209 = vcmp.eq.s32.totalorder %v1113, %v1151
          %vm1210 = vcmp.eq.s32.totalorder %v1114, %v1150
          %vm1211 = vcmp.eq.s32.totalorder %v1114, %v1151
          %vm1212 = vcmp.eq.s32.totalorder %v1115, %v1150
          %vm1213 = vcmp.eq.s32.totalorder %v1115, %v1151
          %vm1214 = vcmp.eq.s32.totalorder %v1116, %v1150
          %vm1215 = vcmp.eq.s32.totalorder %v1116, %v1151
          %vm1216 = vcmp.eq.s32.totalorder %v1117, %v1150
          %vm1217 = vcmp.eq.s32.totalorder %v1117, %v1151
          %vm1218 = vcmp.eq.s32.totalorder %v1118, %v1150
          %vm1219 = vcmp.eq.s32.totalorder %v1118, %v1151
          %vm1220 = vcmp.eq.s32.totalorder %v1119, %v1150
          %vm1221 = vcmp.eq.s32.totalorder %v1119, %v1151
          %vm1222 = vcmp.eq.s32.totalorder %v1120, %v1150
          %vm1223 = vcmp.eq.s32.totalorder %v1120, %v1151
          %vm1224 = vcmp.eq.s32.totalorder %v1121, %v1150
          %vm1225 = vcmp.eq.s32.totalorder %v1121, %v1151
          %vm1226 = vcmp.eq.s32.totalorder %v1122, %v1150
          %vm1227 = vcmp.eq.s32.totalorder %v1122, %v1151
          %vm1228 = vcmp.eq.s32.totalorder %v1123, %v1150
          %vm1229 = vcmp.eq.s32.totalorder %v1123, %v1151
          %vm1230 = vcmp.eq.s32.totalorder %v1124, %v1150
          %vm1231 = vcmp.eq.s32.totalorder %v1124, %v1151
          %vm1232 = vcmp.eq.s32.totalorder %v1125, %v1150
          %vm1233 = vcmp.eq.s32.totalorder %v1125, %v1151
          %vm1234 = vcmp.eq.s32.totalorder %v1126, %v1150
          %vm1235 = vcmp.eq.s32.totalorder %v1126, %v1151
          %vm1236 = vcmp.eq.s32.totalorder %v1127, %v1150
          %vm1237 = vcmp.eq.s32.totalorder %v1127, %v1151
          %vm1238 = vcmp.eq.s32.totalorder %v1128, %v1150
          %vm1239 = vcmp.eq.s32.totalorder %v1128, %v1151
          %vm1240 = vcmp.eq.s32.totalorder %v1129, %v1150
          %vm1241 = vcmp.eq.s32.totalorder %v1129, %v1151
          %vm1242 = vcmp.eq.s32.totalorder %v1130, %v1150
          %vm1243 = vcmp.eq.s32.totalorder %v1130, %v1151
          %vm1244 = vcmp.eq.s32.totalorder %v1131, %v1150
          %vm1245 = vcmp.eq.s32.totalorder %v1131, %v1151
          %vm1246 = vcmp.eq.s32.totalorder %v1132, %v1150
          %vm1247 = vcmp.eq.s32.totalorder %v1132, %v1151
          %vm1248 = vcmp.eq.s32.totalorder %v1133, %v1150
          %vm1249 = vcmp.eq.s32.totalorder %v1133, %v1151
          %vm1250 = vcmp.eq.s32.totalorder %v1134, %v1150
          %vm1251 = vcmp.eq.s32.totalorder %v1134, %v1151
          %vm1252 = vcmp.eq.s32.totalorder %v1135, %v1150
          %vm1253 = vcmp.eq.s32.totalorder %v1135, %v1151
          %vm1254 = vcmp.eq.s32.totalorder %v1136, %v1150
          %vm1255 = vcmp.eq.s32.totalorder %v1136, %v1151
          %vm1256 = vcmp.eq.s32.totalorder %v1137, %v1150
          %vm1257 = vcmp.eq.s32.totalorder %v1137, %v1151
          %vm1258 = vcmp.eq.s32.totalorder %v1138, %v1150
          %vm1259 = vcmp.eq.s32.totalorder %v1138, %v1151
          %vm1260 = vcmp.eq.s32.totalorder %v1139, %v1150
          %vm1261 = vcmp.eq.s32.totalorder %v1139, %v1151
          %vm1262 = vcmp.eq.s32.totalorder %v1140, %v1150
          %vm1263 = vcmp.eq.s32.totalorder %v1140, %v1151
          %vm1264 = vcmp.eq.s32.totalorder %v1141, %v1150
          %vm1265 = vcmp.eq.s32.totalorder %v1141, %v1151
          %vm1266 = vcmp.eq.s32.totalorder %v1142, %v1150
          %vm1267 = vcmp.eq.s32.totalorder %v1142, %v1151
          %vm1268 = vcmp.eq.s32.totalorder %v1143, %v1150
          %vm1269 = vcmp.eq.s32.totalorder %v1143, %v1151
          %vm1270 = vcmp.eq.s32.totalorder %v1144, %v1150
          %vm1271 = vcmp.eq.s32.totalorder %v1144, %v1151
          %vm1272 = vcmp.eq.s32.totalorder %v1145, %v1150
          %vm1273 = vcmp.eq.s32.totalorder %v1145, %v1151
          %vm1274 = vcmp.eq.s32.totalorder %v1146, %v1150
          %vm1275 = vcmp.eq.s32.totalorder %v1146, %v1151
          %vm1276 = vcmp.eq.s32.totalorder %v1147, %v1150
          %vm1277 = vcmp.eq.s32.totalorder %v1147, %v1151
          %vm1278 = vcmp.eq.s32.totalorder %v1148, %v1150
          %vm1279 = vcmp.eq.s32.totalorder %v1148, %v1151
          %v1280 = vsel %vm1152, 1, 0
          %v1281 = vsel %vm1153, 1, 0
          %v1282 = vsel %vm1154, 1, 0
          %v1283 = vsel %vm1155, 1, 0
          %v1284 = vsel %vm1156, 1, 0
          %v1285 = vsel %vm1157, 1, 0
          %v1286 = vsel %vm1158, 1, 0
          %v1287 = vsel %vm1159, 1, 0
          %v1288 = vsel %vm1160, 1, 0
          %v1289 = vsel %vm1161, 1, 0
          %v1290 = vsel %vm1162, 1, 0
          %v1291 = vsel %vm1163, 1, 0
          %v1292 = vsel %vm1164, 1, 0
          %v1293 = vsel %vm1165, 1, 0
          %v1294 = vsel %vm1166, 1, 0
          %v1295 = vsel %vm1167, 1, 0
          %v1296 = vsel %vm1168, 1, 0
          %v1297 = vsel %vm1169, 1, 0
          %v1298 = vsel %vm1170, 1, 0
          %v1299 = vsel %vm1171, 1, 0
          %v1300 = vsel %vm1172, 1, 0
          %v1301 = vsel %vm1173, 1, 0
          %v1302 = vsel %vm1174, 1, 0
          %v1303 = vsel %vm1175, 1, 0
          %v1304 = vsel %vm1176, 1, 0
          %v1305 = vsel %vm1177, 1, 0
          %v1306 = vsel %vm1178, 1, 0
          %v1307 = vsel %vm1179, 1, 0
          %v1308 = vsel %vm1180, 1, 0
          %v1309 = vsel %vm1181, 1, 0
          %v1310 = vsel %vm1182, 1, 0
          %v1311 = vsel %vm1183, 1, 0
          %v1312 = vsel %vm1184, 1, 0
          %v1313 = vsel %vm1185, 1, 0
          %v1314 = vsel %vm1186, 1, 0
          %v1315 = vsel %vm1187, 1, 0
          %v1316 = vsel %vm1188, 1, 0
          %v1317 = vsel %vm1189, 1, 0
          %v1318 = vsel %vm1190, 1, 0
          %v1319 = vsel %vm1191, 1, 0
          %v1320 = vsel %vm1192, 1, 0
          %v1321 = vsel %vm1193, 1, 0
          %v1322 = vsel %vm1194, 1, 0
          %v1323 = vsel %vm1195, 1, 0
          %v1324 = vsel %vm1196, 1, 0
          %v1325 = vsel %vm1197, 1, 0
          %v1326 = vsel %vm1198, 1, 0
          %v1327 = vsel %vm1199, 1, 0
          %v1328 = vsel %vm1200, 1, 0
          %v1329 = vsel %vm1201, 1, 0
          %v1330 = vsel %vm1202, 1, 0
          %v1331 = vsel %vm1203, 1, 0
          %v1332 = vsel %vm1204, 1, 0
          %v1333 = vsel %vm1205, 1, 0
          %v1334 = vsel %vm1206, 1, 0
          %v1335 = vsel %vm1207, 1, 0
          %v1336 = vsel %vm1208, 1, 0
          %v1337 = vsel %vm1209, 1, 0
          %v1338 = vsel %vm1210, 1, 0
          %v1339 = vsel %vm1211, 1, 0
          %v1340 = vsel %vm1212, 1, 0
          %v1341 = vsel %vm1213, 1, 0
          %v1342 = vsel %vm1214, 1, 0
          %v1343 = vsel %vm1215, 1, 0
          %v1344 = vsel %vm1216, 1, 0
          %v1345 = vsel %vm1217, 1, 0
          %v1346 = vsel %vm1218, 1, 0
          %v1347 = vsel %vm1219, 1, 0
          %v1348 = vsel %vm1220, 1, 0
          %v1349 = vsel %vm1221, 1, 0
          %v1350 = vsel %vm1222, 1, 0
          %v1351 = vsel %vm1223, 1, 0
          %v1352 = vsel %vm1224, 1, 0
          %v1353 = vsel %vm1225, 1, 0
          %v1354 = vsel %vm1226, 1, 0
          %v1355 = vsel %vm1227, 1, 0
          %v1356 = vsel %vm1228, 1, 0
          %v1357 = vsel %vm1229, 1, 0
          %v1358 = vsel %vm1230, 1, 0
          %v1359 = vsel %vm1231, 1, 0
          %v1360 = vsel %vm1232, 1, 0
          %v1361 = vsel %vm1233, 1, 0
          %v1362 = vsel %vm1234, 1, 0
          %v1363 = vsel %vm1235, 1, 0
          %v1364 = vsel %vm1236, 1, 0
          %v1365 = vsel %vm1237, 1, 0
          %v1366 = vsel %vm1238, 1, 0
          %v1367 = vsel %vm1239, 1, 0
          %v1368 = vsel %vm1240, 1, 0
          %v1369 = vsel %vm1241, 1, 0
          %v1370 = vsel %vm1242, 1, 0
          %v1371 = vsel %vm1243, 1, 0
          %v1372 = vsel %vm1244, 1, 0
          %v1373 = vsel %vm1245, 1, 0
          %v1374 = vsel %vm1246, 1, 0
          %v1375 = vsel %vm1247, 1, 0
          %v1376 = vsel %vm1248, 1, 0
          %v1377 = vsel %vm1249, 1, 0
          %v1378 = vsel %vm1250, 1, 0
          %v1379 = vsel %vm1251, 1, 0
          %v1380 = vsel %vm1252, 1, 0
          %v1381 = vsel %vm1253, 1, 0
          %v1382 = vsel %vm1254, 1, 0
          %v1383 = vsel %vm1255, 1, 0
          %v1384 = vsel %vm1256, 1, 0
          %v1385 = vsel %vm1257, 1, 0
          %v1386 = vsel %vm1258, 1, 0
          %v1387 = vsel %vm1259, 1, 0
          %v1388 = vsel %vm1260, 1, 0
          %v1389 = vsel %vm1261, 1, 0
          %v1390 = vsel %vm1262, 1, 0
          %v1391 = vsel %vm1263, 1, 0
          %v1392 = vsel %vm1264, 1, 0
          %v1393 = vsel %vm1265, 1, 0
          %v1394 = vsel %vm1266, 1, 0
          %v1395 = vsel %vm1267, 1, 0
          %v1396 = vsel %vm1268, 1, 0
          %v1397 = vsel %vm1269, 1, 0
          %v1398 = vsel %vm1270, 1, 0
          %v1399 = vsel %vm1271, 1, 0
          %v1400 = vsel %vm1272, 1, 0
          %v1401 = vsel %vm1273, 1, 0
          %v1402 = vsel %vm1274, 1, 0
          %v1403 = vsel %vm1275, 1, 0
          %v1404 = vsel %vm1276, 1, 0
          %v1405 = vsel %vm1277, 1, 0
          %v1406 = vsel %vm1278, 1, 0
          %v1407 = vsel %vm1279, 1, 0
          %v1408 = vcvt.s32.f32 %v1280
          %v1409 = vcvt.s32.f32 %v1281
          %v1410 = vcvt.s32.f32 %v1282
          %v1411 = vcvt.s32.f32 %v1283
          %v1412 = vcvt.s32.f32 %v1284
          %v1413 = vcvt.s32.f32 %v1285
          %v1414 = vcvt.s32.f32 %v1286
          %v1415 = vcvt.s32.f32 %v1287
          %v1416 = vcvt.s32.f32 %v1288
          %v1417 = vcvt.s32.f32 %v1289
          %v1418 = vcvt.s32.f32 %v1290
          %v1419 = vcvt.s32.f32 %v1291
          %v1420 = vcvt.s32.f32 %v1292
          %v1421 = vcvt.s32.f32 %v1293
          %v1422 = vcvt.s32.f32 %v1294
          %v1423 = vcvt.s32.f32 %v1295
          %v1424 = vcvt.s32.f32 %v1296
          %v1425 = vcvt.s32.f32 %v1297
          %v1426 = vcvt.s32.f32 %v1298
          %v1427 = vcvt.s32.f32 %v1299
          %v1428 = vcvt.s32.f32 %v1300
          %v1429 = vcvt.s32.f32 %v1301
          %v1430 = vcvt.s32.f32 %v1302
          %v1431 = vcvt.s32.f32 %v1303
          %v1432 = vcvt.s32.f32 %v1304
          %v1433 = vcvt.s32.f32 %v1305
          %v1434 = vcvt.s32.f32 %v1306
          %v1435 = vcvt.s32.f32 %v1307
          %v1436 = vcvt.s32.f32 %v1308
          %v1437 = vcvt.s32.f32 %v1309
          %v1438 = vcvt.s32.f32 %v1310
          %v1439 = vcvt.s32.f32 %v1311
          %v1440 = vcvt.s32.f32 %v1312
          %v1441 = vcvt.s32.f32 %v1313
          %v1442 = vcvt.s32.f32 %v1314
          %v1443 = vcvt.s32.f32 %v1315
          %v1444 = vcvt.s32.f32 %v1316
          %v1445 = vcvt.s32.f32 %v1317
          %v1446 = vcvt.s32.f32 %v1318
          %v1447 = vcvt.s32.f32 %v1319
          %v1448 = vcvt.s32.f32 %v1320
          %v1449 = vcvt.s32.f32 %v1321
          %v1450 = vcvt.s32.f32 %v1322
          %v1451 = vcvt.s32.f32 %v1323
          %v1452 = vcvt.s32.f32 %v1324
          %v1453 = vcvt.s32.f32 %v1325
          %v1454 = vcvt.s32.f32 %v1326
          %v1455 = vcvt.s32.f32 %v1327
          %v1456 = vcvt.s32.f32 %v1328
          %v1457 = vcvt.s32.f32 %v1329
          %v1458 = vcvt.s32.f32 %v1330
          %v1459 = vcvt.s32.f32 %v1331
          %v1460 = vcvt.s32.f32 %v1332
          %v1461 = vcvt.s32.f32 %v1333
          %v1462 = vcvt.s32.f32 %v1334
          %v1463 = vcvt.s32.f32 %v1335
          %v1464 = vcvt.s32.f32 %v1336
          %v1465 = vcvt.s32.f32 %v1337
          %v1466 = vcvt.s32.f32 %v1338
          %v1467 = vcvt.s32.f32 %v1339
          %v1468 = vcvt.s32.f32 %v1340
          %v1469 = vcvt.s32.f32 %v1341
          %v1470 = vcvt.s32.f32 %v1342
          %v1471 = vcvt.s32.f32 %v1343
          %v1472 = vcvt.s32.f32 %v1344
          %v1473 = vcvt.s32.f32 %v1345
          %v1474 = vcvt.s32.f32 %v1346
          %v1475 = vcvt.s32.f32 %v1347
          %v1476 = vcvt.s32.f32 %v1348
          %v1477 = vcvt.s32.f32 %v1349
          %v1478 = vcvt.s32.f32 %v1350
          %v1479 = vcvt.s32.f32 %v1351
          %v1480 = vcvt.s32.f32 %v1352
          %v1481 = vcvt.s32.f32 %v1353
          %v1482 = vcvt.s32.f32 %v1354
          %v1483 = vcvt.s32.f32 %v1355
          %v1484 = vcvt.s32.f32 %v1356
          %v1485 = vcvt.s32.f32 %v1357
          %v1486 = vcvt.s32.f32 %v1358
          %v1487 = vcvt.s32.f32 %v1359
          %v1488 = vcvt.s32.f32 %v1360
          %v1489 = vcvt.s32.f32 %v1361
          %v1490 = vcvt.s32.f32 %v1362
          %v1491 = vcvt.s32.f32 %v1363
          %v1492 = vcvt.s32.f32 %v1364
          %v1493 = vcvt.s32.f32 %v1365
          %v1494 = vcvt.s32.f32 %v1366
          %v1495 = vcvt.s32.f32 %v1367
          %v1496 = vcvt.s32.f32 %v1368
          %v1497 = vcvt.s32.f32 %v1369
          %v1498 = vcvt.s32.f32 %v1370
          %v1499 = vcvt.s32.f32 %v1371
          %v1500 = vcvt.s32.f32 %v1372
          %v1501 = vcvt.s32.f32 %v1373
          %v1502 = vcvt.s32.f32 %v1374
          %v1503 = vcvt.s32.f32 %v1375
          %v1504 = vcvt.s32.f32 %v1376
          %v1505 = vcvt.s32.f32 %v1377
          %v1506 = vcvt.s32.f32 %v1378
          %v1507 = vcvt.s32.f32 %v1379
          %v1508 = vcvt.s32.f32 %v1380
          %v1509 = vcvt.s32.f32 %v1381
          %v1510 = vcvt.s32.f32 %v1382
          %v1511 = vcvt.s32.f32 %v1383
          %v1512 = vcvt.s32.f32 %v1384
          %v1513 = vcvt.s32.f32 %v1385
          %v1514 = vcvt.s32.f32 %v1386
          %v1515 = vcvt.s32.f32 %v1387
          %v1516 = vcvt.s32.f32 %v1388
          %v1517 = vcvt.s32.f32 %v1389
          %v1518 = vcvt.s32.f32 %v1390
          %v1519 = vcvt.s32.f32 %v1391
          %v1520 = vcvt.s32.f32 %v1392
          %v1521 = vcvt.s32.f32 %v1393
          %v1522 = vcvt.s32.f32 %v1394
          %v1523 = vcvt.s32.f32 %v1395
          %v1524 = vcvt.s32.f32 %v1396
          %v1525 = vcvt.s32.f32 %v1397
          %v1526 = vcvt.s32.f32 %v1398
          %v1527 = vcvt.s32.f32 %v1399
          %v1528 = vcvt.s32.f32 %v1400
          %v1529 = vcvt.s32.f32 %v1401
          %v1530 = vcvt.s32.f32 %v1402
          %v1531 = vcvt.s32.f32 %v1403
          %v1532 = vcvt.s32.f32 %v1404
          %v1533 = vcvt.s32.f32 %v1405
          %v1534 = vcvt.s32.f32 %v1406
          %v1535 = vcvt.s32.f32 %v1407
          %v1536 = vld [vmem:[%s2] sm:$0x3]
          %v1537 = vperm.slane %v1536, 0
          %v1538 = vperm.slane %v1536, 1
          %vm1539 = vcmp.eq.s32.totalorder %v1085, %v1537
          %vm1540 = vcmp.eq.s32.totalorder %v1085, %v1538
          %vm1541 = vcmp.eq.s32.totalorder %v1086, %v1537
          %vm1542 = vcmp.eq.s32.totalorder %v1086, %v1538
          %vm1543 = vcmp.eq.s32.totalorder %v1087, %v1537
          %vm1544 = vcmp.eq.s32.totalorder %v1087, %v1538
          %vm1545 = vcmp.eq.s32.totalorder %v1088, %v1537
          %vm1546 = vcmp.eq.s32.totalorder %v1088, %v1538
          %vm1547 = vcmp.eq.s32.totalorder %v1089, %v1537
          %vm1548 = vcmp.eq.s32.totalorder %v1089, %v1538
          %vm1549 = vcmp.eq.s32.totalorder %v1090, %v1537
          %vm1550 = vcmp.eq.s32.totalorder %v1090, %v1538
          %vm1551 = vcmp.eq.s32.totalorder %v1091, %v1537
          %vm1552 = vcmp.eq.s32.totalorder %v1091, %v1538
          %vm1553 = vcmp.eq.s32.totalorder %v1092, %v1537
          %vm1554 = vcmp.eq.s32.totalorder %v1092, %v1538
          %vm1555 = vcmp.eq.s32.totalorder %v1093, %v1537
          %vm1556 = vcmp.eq.s32.totalorder %v1093, %v1538
          %vm1557 = vcmp.eq.s32.totalorder %v1094, %v1537
          %vm1558 = vcmp.eq.s32.totalorder %v1094, %v1538
          %vm1559 = vcmp.eq.s32.totalorder %v1095, %v1537
          %vm1560 = vcmp.eq.s32.totalorder %v1095, %v1538
          %vm1561 = vcmp.eq.s32.totalorder %v1096, %v1537
          %vm1562 = vcmp.eq.s32.totalorder %v1096, %v1538
          %vm1563 = vcmp.eq.s32.totalorder %v1097, %v1537
          %vm1564 = vcmp.eq.s32.totalorder %v1097, %v1538
          %vm1565 = vcmp.eq.s32.totalorder %v1098, %v1537
          %vm1566 = vcmp.eq.s32.totalorder %v1098, %v1538
          %vm1567 = vcmp.eq.s32.totalorder %v1099, %v1537
          %vm1568 = vcmp.eq.s32.totalorder %v1099, %v1538
          %vm1569 = vcmp.eq.s32.totalorder %v1100, %v1537
          %vm1570 = vcmp.eq.s32.totalorder %v1100, %v1538
          %vm1571 = vcmp.eq.s32.totalorder %v1101, %v1537
          %vm1572 = vcmp.eq.s32.totalorder %v1101, %v1538
          %vm1573 = vcmp.eq.s32.totalorder %v1102, %v1537
          %vm1574 = vcmp.eq.s32.totalorder %v1102, %v1538
          %vm1575 = vcmp.eq.s32.totalorder %v1103, %v1537
          %vm1576 = vcmp.eq.s32.totalorder %v1103, %v1538
          %vm1577 = vcmp.eq.s32.totalorder %v1104, %v1537
          %vm1578 = vcmp.eq.s32.totalorder %v1104, %v1538
          %vm1579 = vcmp.eq.s32.totalorder %v1105, %v1537
          %vm1580 = vcmp.eq.s32.totalorder %v1105, %v1538
          %vm1581 = vcmp.eq.s32.totalorder %v1106, %v1537
          %vm1582 = vcmp.eq.s32.totalorder %v1106, %v1538
          %vm1583 = vcmp.eq.s32.totalorder %v1107, %v1537
          %vm1584 = vcmp.eq.s32.totalorder %v1107, %v1538
          %vm1585 = vcmp.eq.s32.totalorder %v1108, %v1537
          %vm1586 = vcmp.eq.s32.totalorder %v1108, %v1538
          %vm1587 = vcmp.eq.s32.totalorder %v1109, %v1537
          %vm1588 = vcmp.eq.s32.totalorder %v1109, %v1538
          %vm1589 = vcmp.eq.s32.totalorder %v1110, %v1537
          %vm1590 = vcmp.eq.s32.totalorder %v1110, %v1538
          %vm1591 = vcmp.eq.s32.totalorder %v1111, %v1537
          %vm1592 = vcmp.eq.s32.totalorder %v1111, %v1538
          %vm1593 = vcmp.eq.s32.totalorder %v1112, %v1537
          %vm1594 = vcmp.eq.s32.totalorder %v1112, %v1538
          %vm1595 = vcmp.eq.s32.totalorder %v1113, %v1537
          %vm1596 = vcmp.eq.s32.totalorder %v1113, %v1538
          %vm1597 = vcmp.eq.s32.totalorder %v1114, %v1537
          %vm1598 = vcmp.eq.s32.totalorder %v1114, %v1538
          %vm1599 = vcmp.eq.s32.totalorder %v1115, %v1537
          %vm1600 = vcmp.eq.s32.totalorder %v1115, %v1538
          %vm1601 = vcmp.eq.s32.totalorder %v1116, %v1537
          %vm1602 = vcmp.eq.s32.totalorder %v1116, %v1538
          %vm1603 = vcmp.eq.s32.totalorder %v1117, %v1537
          %vm1604 = vcmp.eq.s32.totalorder %v1117, %v1538
          %vm1605 = vcmp.eq.s32.totalorder %v1118, %v1537
          %vm1606 = vcmp.eq.s32.totalorder %v1118, %v1538
          %vm1607 = vcmp.eq.s32.totalorder %v1119, %v1537
          %vm1608 = vcmp.eq.s32.totalorder %v1119, %v1538
          %vm1609 = vcmp.eq.s32.totalorder %v1120, %v1537
          %vm1610 = vcmp.eq.s32.totalorder %v1120, %v1538
          %vm1611 = vcmp.eq.s32.totalorder %v1121, %v1537
          %vm1612 = vcmp.eq.s32.totalorder %v1121, %v1538
          %vm1613 = vcmp.eq.s32.totalorder %v1122, %v1537
          %vm1614 = vcmp.eq.s32.totalorder %v1122, %v1538
          %vm1615 = vcmp.eq.s32.totalorder %v1123, %v1537
          %vm1616 = vcmp.eq.s32.totalorder %v1123, %v1538
          %vm1617 = vcmp.eq.s32.totalorder %v1124, %v1537
          %vm1618 = vcmp.eq.s32.totalorder %v1124, %v1538
          %vm1619 = vcmp.eq.s32.totalorder %v1125, %v1537
          %vm1620 = vcmp.eq.s32.totalorder %v1125, %v1538
          %vm1621 = vcmp.eq.s32.totalorder %v1126, %v1537
          %vm1622 = vcmp.eq.s32.totalorder %v1126, %v1538
          %vm1623 = vcmp.eq.s32.totalorder %v1127, %v1537
          %vm1624 = vcmp.eq.s32.totalorder %v1127, %v1538
          %vm1625 = vcmp.eq.s32.totalorder %v1128, %v1537
          %vm1626 = vcmp.eq.s32.totalorder %v1128, %v1538
          %vm1627 = vcmp.eq.s32.totalorder %v1129, %v1537
          %vm1628 = vcmp.eq.s32.totalorder %v1129, %v1538
          %vm1629 = vcmp.eq.s32.totalorder %v1130, %v1537
          %vm1630 = vcmp.eq.s32.totalorder %v1130, %v1538
          %vm1631 = vcmp.eq.s32.totalorder %v1131, %v1537
          %vm1632 = vcmp.eq.s32.totalorder %v1131, %v1538
          %vm1633 = vcmp.eq.s32.totalorder %v1132, %v1537
          %vm1634 = vcmp.eq.s32.totalorder %v1132, %v1538
          %vm1635 = vcmp.eq.s32.totalorder %v1133, %v1537
          %vm1636 = vcmp.eq.s32.totalorder %v1133, %v1538
          %vm1637 = vcmp.eq.s32.totalorder %v1134, %v1537
          %vm1638 = vcmp.eq.s32.totalorder %v1134, %v1538
          %vm1639 = vcmp.eq.s32.totalorder %v1135, %v1537
          %vm1640 = vcmp.eq.s32.totalorder %v1135, %v1538
          %vm1641 = vcmp.eq.s32.totalorder %v1136, %v1537
          %vm1642 = vcmp.eq.s32.totalorder %v1136, %v1538
          %vm1643 = vcmp.eq.s32.totalorder %v1137, %v1537
          %vm1644 = vcmp.eq.s32.totalorder %v1137, %v1538
          %vm1645 = vcmp.eq.s32.totalorder %v1138, %v1537
          %vm1646 = vcmp.eq.s32.totalorder %v1138, %v1538
          %vm1647 = vcmp.eq.s32.totalorder %v1139, %v1537
          %vm1648 = vcmp.eq.s32.totalorder %v1139, %v1538
          %vm1649 = vcmp.eq.s32.totalorder %v1140, %v1537
          %vm1650 = vcmp.eq.s32.totalorder %v1140, %v1538
          %vm1651 = vcmp.eq.s32.totalorder %v1141, %v1537
          %vm1652 = vcmp.eq.s32.totalorder %v1141, %v1538
          %vm1653 = vcmp.eq.s32.totalorder %v1142, %v1537
          %vm1654 = vcmp.eq.s32.totalorder %v1142, %v1538
          %vm1655 = vcmp.eq.s32.totalorder %v1143, %v1537
          %vm1656 = vcmp.eq.s32.totalorder %v1143, %v1538
          %vm1657 = vcmp.eq.s32.totalorder %v1144, %v1537
          %vm1658 = vcmp.eq.s32.totalorder %v1144, %v1538
          %vm1659 = vcmp.eq.s32.totalorder %v1145, %v1537
          %vm1660 = vcmp.eq.s32.totalorder %v1145, %v1538
          %vm1661 = vcmp.eq.s32.totalorder %v1146, %v1537
          %vm1662 = vcmp.eq.s32.totalorder %v1146, %v1538
          %vm1663 = vcmp.eq.s32.totalorder %v1147, %v1537
          %vm1664 = vcmp.eq.s32.totalorder %v1147, %v1538
          %vm1665 = vcmp.eq.s32.totalorder %v1148, %v1537
          %vm1666 = vcmp.eq.s32.totalorder %v1148, %v1538
          %v1667 = vsel %vm1539, 1, 0
          %v1668 = vsel %vm1540, 1, 0
          %v1669 = vsel %vm1541, 1, 0
          %v1670 = vsel %vm1542, 1, 0
          %v1671 = vsel %vm1543, 1, 0
          %v1672 = vsel %vm1544, 1, 0
          %v1673 = vsel %vm1545, 1, 0
          %v1674 = vsel %vm1546, 1, 0
          %v1675 = vsel %vm1547, 1, 0
          %v1676 = vsel %vm1548, 1, 0
          %v1677 = vsel %vm1549, 1, 0
          %v1678 = vsel %vm1550, 1, 0
          %v1679 = vsel %vm1551, 1, 0
          %v1680 = vsel %vm1552, 1, 0
          %v1681 = vsel %vm1553, 1, 0
          %v1682 = vsel %vm1554, 1, 0
          %v1683 = vsel %vm1555, 1, 0
          %v1684 = vsel %vm1556, 1, 0
          %v1685 = vsel %vm1557, 1, 0
          %v1686 = vsel %vm1558, 1, 0
          %v1687 = vsel %vm1559, 1, 0
          %v1688 = vsel %vm1560, 1, 0
          %v1689 = vsel %vm1561, 1, 0
          %v1690 = vsel %vm1562, 1, 0
          %v1691 = vsel %vm1563, 1, 0
          %v1692 = vsel %vm1564, 1, 0
          %v1693 = vsel %vm1565, 1, 0
          %v1694 = vsel %vm1566, 1, 0
          %v1695 = vsel %vm1567, 1, 0
          %v1696 = vsel %vm1568, 1, 0
          %v1697 = vsel %vm1569, 1, 0
          %v1698 = vsel %vm1570, 1, 0
          %v1699 = vsel %vm1571, 1, 0
          %v1700 = vsel %vm1572, 1, 0
          %v1701 = vsel %vm1573, 1, 0
          %v1702 = vsel %vm1574, 1, 0
          %v1703 = vsel %vm1575, 1, 0
          %v1704 = vsel %vm1576, 1, 0
          %v1705 = vsel %vm1577, 1, 0
          %v1706 = vsel %vm1578, 1, 0
          %v1707 = vsel %vm1579, 1, 0
          %v1708 = vsel %vm1580, 1, 0
          %v1709 = vsel %vm1581, 1, 0
          %v1710 = vsel %vm1582, 1, 0
          %v1711 = vsel %vm1583, 1, 0
          %v1712 = vsel %vm1584, 1, 0
          %v1713 = vsel %vm1585, 1, 0
          %v1714 = vsel %vm1586, 1, 0
          %v1715 = vsel %vm1587, 1, 0
          %v1716 = vsel %vm1588, 1, 0
          %v1717 = vsel %vm1589, 1, 0
          %v1718 = vsel %vm1590, 1, 0
          %v1719 = vsel %vm1591, 1, 0
          %v1720 = vsel %vm1592, 1, 0
          %v1721 = vsel %vm1593, 1, 0
          %v1722 = vsel %vm1594, 1, 0
          %v1723 = vsel %vm1595, 1, 0
          %v1724 = vsel %vm1596, 1, 0
          %v1725 = vsel %vm1597, 1, 0
          %v1726 = vsel %vm1598, 1, 0
          %v1727 = vsel %vm1599, 1, 0
          %v1728 = vsel %vm1600, 1, 0
          %v1729 = vsel %vm1601, 1, 0
          %v1730 = vsel %vm1602, 1, 0
          %v1731 = vsel %vm1603, 1, 0
          %v1732 = vsel %vm1604, 1, 0
          %v1733 = vsel %vm1605, 1, 0
          %v1734 = vsel %vm1606, 1, 0
          %v1735 = vsel %vm1607, 1, 0
          %v1736 = vsel %vm1608, 1, 0
          %v1737 = vsel %vm1609, 1, 0
          %v1738 = vsel %vm1610, 1, 0
          %v1739 = vsel %vm1611, 1, 0
          %v1740 = vsel %vm1612, 1, 0
          %v1741 = vsel %vm1613, 1, 0
          %v1742 = vsel %vm1614, 1, 0
          %v1743 = vsel %vm1615, 1, 0
          %v1744 = vsel %vm1616, 1, 0
          %v1745 = vsel %vm1617, 1, 0
          %v1746 = vsel %vm1618, 1, 0
          %v1747 = vsel %vm1619, 1, 0
          %v1748 = vsel %vm1620, 1, 0
          %v1749 = vsel %vm1621, 1, 0
          %v1750 = vsel %vm1622, 1, 0
          %v1751 = vsel %vm1623, 1, 0
          %v1752 = vsel %vm1624, 1, 0
          %v1753 = vsel %vm1625, 1, 0
          %v1754 = vsel %vm1626, 1, 0
          %v1755 = vsel %vm1627, 1, 0
          %v1756 = vsel %vm1628, 1, 0
          %v1757 = vsel %vm1629, 1, 0
          %v1758 = vsel %vm1630, 1, 0
          %v1759 = vsel %vm1631, 1, 0
          %v1760 = vsel %vm1632, 1, 0
          %v1761 = vsel %vm1633, 1, 0
          %v1762 = vsel %vm1634, 1, 0
          %v1763 = vsel %vm1635, 1, 0
          %v1764 = vsel %vm1636, 1, 0
          %v1765 = vsel %vm1637, 1, 0
          %v1766 = vsel %vm1638, 1, 0
          %v1767 = vsel %vm1639, 1, 0
          %v1768 = vsel %vm1640, 1, 0
          %v1769 = vsel %vm1641, 1, 0
          %v1770 = vsel %vm1642, 1, 0
          %v1771 = vsel %vm1643, 1, 0
          %v1772 = vsel %vm1644, 1, 0
          %v1773 = vsel %vm1645, 1, 0
          %v1774 = vsel %vm1646, 1, 0
          %v1775 = vsel %vm1647, 1, 0
          %v1776 = vsel %vm1648, 1, 0
          %v1777 = vsel %vm1649, 1, 0
          %v1778 = vsel %vm1650, 1, 0
          %v1779 = vsel %vm1651, 1, 0
          %v1780 = vsel %vm1652, 1, 0
          %v1781 = vsel %vm1653, 1, 0
          %v1782 = vsel %vm1654, 1, 0
          %v1783 = vsel %vm1655, 1, 0
          %v1784 = vsel %vm1656, 1, 0
          %v1785 = vsel %vm1657, 1, 0
          %v1786 = vsel %vm1658, 1, 0
          %v1787 = vsel %vm1659, 1, 0
          %v1788 = vsel %vm1660, 1, 0
          %v1789 = vsel %vm1661, 1, 0
          %v1790 = vsel %vm1662, 1, 0
          %v1791 = vsel %vm1663, 1, 0
          %v1792 = vsel %vm1664, 1, 0
          %v1793 = vsel %vm1665, 1, 0
          %v1794 = vsel %vm1666, 1, 0
          %v1795 = vcvt.s32.f32 %v1667
          %v1796 = vcvt.s32.f32 %v1668
          %v1797 = vcvt.s32.f32 %v1669
          %v1798 = vcvt.s32.f32 %v1670
          %v1799 = vcvt.s32.f32 %v1671
          %v1800 = vcvt.s32.f32 %v1672
          %v1801 = vcvt.s32.f32 %v1673
          %v1802 = vcvt.s32.f32 %v1674
          %v1803 = vcvt.s32.f32 %v1675
          %v1804 = vcvt.s32.f32 %v1676
          %v1805 = vcvt.s32.f32 %v1677
          %v1806 = vcvt.s32.f32 %v1678
          %v1807 = vcvt.s32.f32 %v1679
          %v1808 = vcvt.s32.f32 %v1680
          %v1809 = vcvt.s32.f32 %v1681
          %v1810 = vcvt.s32.f32 %v1682
          %v1811 = vcvt.s32.f32 %v1683
          %v1812 = vcvt.s32.f32 %v1684
          %v1813 = vcvt.s32.f32 %v1685
          %v1814 = vcvt.s32.f32 %v1686
          %v1815 = vcvt.s32.f32 %v1687
          %v1816 = vcvt.s32.f32 %v1688
          %v1817 = vcvt.s32.f32 %v1689
          %v1818 = vcvt.s32.f32 %v1690
          %v1819 = vcvt.s32.f32 %v1691
          %v1820 = vcvt.s32.f32 %v1692
          %v1821 = vcvt.s32.f32 %v1693
          %v1822 = vcvt.s32.f32 %v1694
          %v1823 = vcvt.s32.f32 %v1695
          %v1824 = vcvt.s32.f32 %v1696
          %v1825 = vcvt.s32.f32 %v1697
          %v1826 = vcvt.s32.f32 %v1698
          %v1827 = vcvt.s32.f32 %v1699
          %v1828 = vcvt.s32.f32 %v1700
          %v1829 = vcvt.s32.f32 %v1701
          %v1830 = vcvt.s32.f32 %v1702
          %v1831 = vcvt.s32.f32 %v1703
          %v1832 = vcvt.s32.f32 %v1704
          %v1833 = vcvt.s32.f32 %v1705
          %v1834 = vcvt.s32.f32 %v1706
          %v1835 = vcvt.s32.f32 %v1707
          %v1836 = vcvt.s32.f32 %v1708
          %v1837 = vcvt.s32.f32 %v1709
          %v1838 = vcvt.s32.f32 %v1710
          %v1839 = vcvt.s32.f32 %v1711
          %v1840 = vcvt.s32.f32 %v1712
          %v1841 = vcvt.s32.f32 %v1713
          %v1842 = vcvt.s32.f32 %v1714
          %v1843 = vcvt.s32.f32 %v1715
          %v1844 = vcvt.s32.f32 %v1716
          %v1845 = vcvt.s32.f32 %v1717
          %v1846 = vcvt.s32.f32 %v1718
          %v1847 = vcvt.s32.f32 %v1719
          %v1848 = vcvt.s32.f32 %v1720
          %v1849 = vcvt.s32.f32 %v1721
          %v1850 = vcvt.s32.f32 %v1722
          %v1851 = vcvt.s32.f32 %v1723
          %v1852 = vcvt.s32.f32 %v1724
          %v1853 = vcvt.s32.f32 %v1725
          %v1854 = vcvt.s32.f32 %v1726
          %v1855 = vcvt.s32.f32 %v1727
          %v1856 = vcvt.s32.f32 %v1728
          %v1857 = vcvt.s32.f32 %v1729
          %v1858 = vcvt.s32.f32 %v1730
          %v1859 = vcvt.s32.f32 %v1731
          %v1860 = vcvt.s32.f32 %v1732
          %v1861 = vcvt.s32.f32 %v1733
          %v1862 = vcvt.s32.f32 %v1734
          %v1863 = vcvt.s32.f32 %v1735
          %v1864 = vcvt.s32.f32 %v1736
          %v1865 = vcvt.s32.f32 %v1737
          %v1866 = vcvt.s32.f32 %v1738
          %v1867 = vcvt.s32.f32 %v1739
          %v1868 = vcvt.s32.f32 %v1740
          %v1869 = vcvt.s32.f32 %v1741
          %v1870 = vcvt.s32.f32 %v1742
          %v1871 = vcvt.s32.f32 %v1743
          %v1872 = vcvt.s32.f32 %v1744
          %v1873 = vcvt.s32.f32 %v1745
          %v1874 = vcvt.s32.f32 %v1746
          %v1875 = vcvt.s32.f32 %v1747
          %v1876 = vcvt.s32.f32 %v1748
          %v1877 = vcvt.s32.f32 %v1749
          %v1878 = vcvt.s32.f32 %v1750
          %v1879 = vcvt.s32.f32 %v1751
          %v1880 = vcvt.s32.f32 %v1752
          %v1881 = vcvt.s32.f32 %v1753
          %v1882 = vcvt.s32.f32 %v1754
          %v1883 = vcvt.s32.f32 %v1755
          %v1884 = vcvt.s32.f32 %v1756
          %v1885 = vcvt.s32.f32 %v1757
          %v1886 = vcvt.s32.f32 %v1758
          %v1887 = vcvt.s32.f32 %v1759
          %v1888 = vcvt.s32.f32 %v1760
          %v1889 = vcvt.s32.f32 %v1761
          %v1890 = vcvt.s32.f32 %v1762
          %v1891 = vcvt.s32.f32 %v1763
          %v1892 = vcvt.s32.f32 %v1764
          %v1893 = vcvt.s32.f32 %v1765
          %v1894 = vcvt.s32.f32 %v1766
          %v1895 = vcvt.s32.f32 %v1767
          %v1896 = vcvt.s32.f32 %v1768
          %v1897 = vcvt.s32.f32 %v1769
          %v1898 = vcvt.s32.f32 %v1770
          %v1899 = vcvt.s32.f32 %v1771
          %v1900 = vcvt.s32.f32 %v1772
          %v1901 = vcvt.s32.f32 %v1773
          %v1902 = vcvt.s32.f32 %v1774
          %v1903 = vcvt.s32.f32 %v1775
          %v1904 = vcvt.s32.f32 %v1776
          %v1905 = vcvt.s32.f32 %v1777
          %v1906 = vcvt.s32.f32 %v1778
          %v1907 = vcvt.s32.f32 %v1779
          %v1908 = vcvt.s32.f32 %v1780
          %v1909 = vcvt.s32.f32 %v1781
          %v1910 = vcvt.s32.f32 %v1782
          %v1911 = vcvt.s32.f32 %v1783
          %v1912 = vcvt.s32.f32 %v1784
          %v1913 = vcvt.s32.f32 %v1785
          %v1914 = vcvt.s32.f32 %v1786
          %v1915 = vcvt.s32.f32 %v1787
          %v1916 = vcvt.s32.f32 %v1788
          %v1917 = vcvt.s32.f32 %v1789
          %v1918 = vcvt.s32.f32 %v1790
          %v1919 = vcvt.s32.f32 %v1791
          %v1920 = vcvt.s32.f32 %v1792
          %v1921 = vcvt.s32.f32 %v1793
          %v1922 = vcvt.s32.f32 %v1794
          %1923 = vmatpush.msra.mxu0 %v1438
          %1924 = vmatpush.msra.mxu0 %v1436
          %1925 = vmatpush.msra.mxu0 %v1434
          %1926 = vmatpush.msra.mxu0 %v1432
          %1927 = vmatpush.msra.mxu0 %v1430
          %1928 = vmatpush.msra.mxu0 %v1428
          %1929 = vmatpush.msra.mxu0 %v1426
          %1930 = vmatpush.msra.mxu0 %v1424
          %1931 = vmatpush.msra.mxu0 %v1422
          %1932 = vmatpush.msra.mxu0 %v1420
          %1933 = vmatpush.msra.mxu0 %v1418
          %1934 = vmatpush.msra.mxu0 %v1416
          %1935 = vmatpush.msra.mxu0 %v1414
          %1936 = vmatpush.msra.mxu0 %v1412
          %1937 = vmatpush.msra.mxu0 %v1410
          %1938 = vmatpush.msra.mxu0 %v1408
          %1939 = vmatmul.f32.gmra.mxu0 %v972
          %v1940 = vpop.f32.mrf.mxu0
          %v1941 = vadd.f32 0.0, %v1940
          %1942 = vmatmul.f32.gmra.mxu0 %v973
          %v1943 = vpop.f32.mrf.mxu0
          %v1944 = vadd.f32 0.0, %v1943
          %1945 = vmatmul.f32.gmra.mxu0 %v974
          %v1946 = vpop.f32.mrf.mxu0
          %v1947 = vadd.f32 0.0, %v1946
          %1948 = vmatmul.f32.gmra.mxu0 %v975
          %v1949 = vpop.f32.mrf.mxu0
          %v1950 = vadd.f32 0.0, %v1949
          %1951 = vmatmul.f32.gmra.mxu0 %v976
          %v1952 = vpop.f32.mrf.mxu0
          %v1953 = vadd.f32 0.0, %v1952
          %1954 = vmatmul.f32.gmra.mxu0 %v977
          %v1955 = vpop.f32.mrf.mxu0
          %v1956 = vadd.f32 0.0, %v1955
          %1957 = vmatmul.f32.gmra.mxu0 %v978
          %v1958 = vpop.f32.mrf.mxu0
          %v1959 = vadd.f32 0.0, %v1958
          %1960 = vmatmul.f32.gmra.mxu0 %v979
          %v1961 = vpop.f32.mrf.mxu0
          %v1962 = vadd.f32 0.0, %v1961
          %1963 = vmatmul.f32.gmra.mxu0 %v980
          %v1964 = vpop.f32.mrf.mxu0
          %v1965 = vadd.f32 0.0, %v1964
          %1966 = vmatmul.f32.gmra.mxu0 %v981
          %v1967 = vpop.f32.mrf.mxu0
          %v1968 = vadd.f32 0.0, %v1967
          %1969 = vmatmul.f32.gmra.mxu0 %v982
          %v1970 = vpop.f32.mrf.mxu0
          %v1971 = vadd.f32 0.0, %v1970
          %1972 = vmatmul.f32.gmra.mxu0 %v983
          %v1973 = vpop.f32.mrf.mxu0
          %v1974 = vadd.f32 0.0, %v1973
          %1975 = vmatmul.f32.gmra.mxu0 %v984
          %v1976 = vpop.f32.mrf.mxu0
          %v1977 = vadd.f32 0.0, %v1976
          %1978 = vmatmul.f32.gmra.mxu0 %v985
          %v1979 = vpop.f32.mrf.mxu0
          %v1980 = vadd.f32 0.0, %v1979
          %1981 = vmatmul.f32.gmra.mxu0 %v986
          %v1982 = vpop.f32.mrf.mxu0
          %v1983 = vadd.f32 0.0, %v1982
          %1984 = vmatmul.f32.gmra.mxu0 %v987
          %v1985 = vpop.f32.mrf.mxu0
          %v1986 = vadd.f32 0.0, %v1985
          %1987 = vdwg.mxu0
          %1988 = vmatpush.msra.mxu0 %v1470
          %1989 = vmatpush.msra.mxu0 %v1468
          %1990 = vmatpush.msra.mxu0 %v1466
          %1991 = vmatpush.msra.mxu0 %v1464
          %1992 = vmatpush.msra.mxu0 %v1462
          %1993 = vmatpush.msra.mxu0 %v1460
          %1994 = vmatpush.msra.mxu0 %v1458
          %1995 = vmatpush.msra.mxu0 %v1456
          %1996 = vmatpush.msra.mxu0 %v1454
          %1997 = vmatpush.msra.mxu0 %v1452
          %1998 = vmatpush.msra.mxu0 %v1450
          %1999 = vmatpush.msra.mxu0 %v1448
          %2000 = vmatpush.msra.mxu0 %v1446
          %2001 = vmatpush.msra.mxu0 %v1444
          %2002 = vmatpush.msra.mxu0 %v1442
          %2003 = vmatpush.msra.mxu0 %v1440
          %2004 = vmatmul.f32.gmra.mxu0 %v1004
          %v2005 = vpop.f32.mrf.mxu0
          %v2006 = vadd.f32 %v1941, %v2005
          %2007 = vmatmul.f32.gmra.mxu0 %v1005
          %v2008 = vpop.f32.mrf.mxu0
          %v2009 = vadd.f32 %v1944, %v2008
          %2010 = vmatmul.f32.gmra.mxu0 %v1006
          %v2011 = vpop.f32.mrf.mxu0
          %v2012 = vadd.f32 %v1947, %v2011
          %2013 = vmatmul.f32.gmra.mxu0 %v1007
          %v2014 = vpop.f32.mrf.mxu0
          %v2015 = vadd.f32 %v1950, %v2014
          %2016 = vmatmul.f32.gmra.mxu0 %v1008
          %v2017 = vpop.f32.mrf.mxu0
          %v2018 = vadd.f32 %v1953, %v2017
          %2019 = vmatmul.f32.gmra.mxu0 %v1009
          %v2020 = vpop.f32.mrf.mxu0
          %v2021 = vadd.f32 %v1956, %v2020
          %2022 = vmatmul.f32.gmra.mxu0 %v1010
          %v2023 = vpop.f32.mrf.mxu0
          %v2024 = vadd.f32 %v1959, %v2023
          %2025 = vmatmul.f32.gmra.mxu0 %v1011
          %v2026 = vpop.f32.mrf.mxu0
          %v2027 = vadd.f32 %v1962, %v2026
          %2028 = vmatmul.f32.gmra.mxu0 %v1012
          %v2029 = vpop.f32.mrf.mxu0
          %v2030 = vadd.f32 %v1965, %v2029
          %2031 = vmatmul.f32.gmra.mxu0 %v1013
          %v2032 = vpop.f32.mrf.mxu0
          %v2033 = vadd.f32 %v1968, %v2032
          %2034 = vmatmul.f32.gmra.mxu0 %v1014
          %v2035 = vpop.f32.mrf.mxu0
          %v2036 = vadd.f32 %v1971, %v2035
          %2037 = vmatmul.f32.gmra.mxu0 %v1015
          %v2038 = vpop.f32.mrf.mxu0
          %v2039 = vadd.f32 %v1974, %v2038
          %2040 = vmatmul.f32.gmra.mxu0 %v1016
          %v2041 = vpop.f32.mrf.mxu0
          %v2042 = vadd.f32 %v1977, %v2041
          %2043 = vmatmul.f32.gmra.mxu0 %v1017
          %v2044 = vpop.f32.mrf.mxu0
          %v2045 = vadd.f32 %v1980, %v2044
          %2046 = vmatmul.f32.gmra.mxu0 %v1018
          %v2047 = vpop.f32.mrf.mxu0
          %v2048 = vadd.f32 %v1983, %v2047
          %2049 = vmatmul.f32.gmra.mxu0 %v1019
          %v2050 = vpop.f32.mrf.mxu0
          %v2051 = vadd.f32 %v1986, %v2050
          %2052 = vdwg.mxu0
          %2053 = vmatpush.msra.mxu0 %v1502
          %2054 = vmatpush.msra.mxu0 %v1500
          %2055 = vmatpush.msra.mxu0 %v1498
          %2056 = vmatpush.msra.mxu0 %v1496
          %2057 = vmatpush.msra.mxu0 %v1494
          %2058 = vmatpush.msra.mxu0 %v1492
          %2059 = vmatpush.msra.mxu0 %v1490
          %2060 = vmatpush.msra.mxu0 %v1488
          %2061 = vmatpush.msra.mxu0 %v1486
          %2062 = vmatpush.msra.mxu0 %v1484
          %2063 = vmatpush.msra.mxu0 %v1482
          %2064 = vmatpush.msra.mxu0 %v1480
          %2065 = vmatpush.msra.mxu0 %v1478
          %2066 = vmatpush.msra.mxu0 %v1476
          %2067 = vmatpush.msra.mxu0 %v1474
          %2068 = vmatpush.msra.mxu0 %v1472
          %2069 = vmatmul.f32.gmra.mxu0 %v1036
          %v2070 = vpop.f32.mrf.mxu0
          %v2071 = vadd.f32 %v2006, %v2070
          %2072 = vmatmul.f32.gmra.mxu0 %v1037
          %v2073 = vpop.f32.mrf.mxu0
          %v2074 = vadd.f32 %v2009, %v2073
          %2075 = vmatmul.f32.gmra.mxu0 %v1038
          %v2076 = vpop.f32.mrf.mxu0
          %v2077 = vadd.f32 %v2012, %v2076
          %2078 = vmatmul.f32.gmra.mxu0 %v1039
          %v2079 = vpop.f32.mrf.mxu0
          %v2080 = vadd.f32 %v2015, %v2079
          %2081 = vmatmul.f32.gmra.mxu0 %v1040
          %v2082 = vpop.f32.mrf.mxu0
          %v2083 = vadd.f32 %v2018, %v2082
          %2084 = vmatmul.f32.gmra.mxu0 %v1041
          %v2085 = vpop.f32.mrf.mxu0
          %v2086 = vadd.f32 %v2021, %v2085
          %2087 = vmatmul.f32.gmra.mxu0 %v1042
          %v2088 = vpop.f32.mrf.mxu0
          %v2089 = vadd.f32 %v2024, %v2088
          %2090 = vmatmul.f32.gmra.mxu0 %v1043
          %v2091 = vpop.f32.mrf.mxu0
          %v2092 = vadd.f32 %v2027, %v2091
          %2093 = vmatmul.f32.gmra.mxu0 %v1044
          %v2094 = vpop.f32.mrf.mxu0
          %v2095 = vadd.f32 %v2030, %v2094
          %2096 = vmatmul.f32.gmra.mxu0 %v1045
          %v2097 = vpop.f32.mrf.mxu0
          %v2098 = vadd.f32 %v2033, %v2097
          %2099 = vmatmul.f32.gmra.mxu0 %v1046
          %v2100 = vpop.f32.mrf.mxu0
          %v2101 = vadd.f32 %v2036, %v2100
          %2102 = vmatmul.f32.gmra.mxu0 %v1047
          %v2103 = vpop.f32.mrf.mxu0
          %v2104 = vadd.f32 %v2039, %v2103
          %2105 = vmatmul.f32.gmra.mxu0 %v1048
          %v2106 = vpop.f32.mrf.mxu0
          %v2107 = vadd.f32 %v2042, %v2106
          %2108 = vmatmul.f32.gmra.mxu0 %v1049
          %v2109 = vpop.f32.mrf.mxu0
          %v2110 = vadd.f32 %v2045, %v2109
          %2111 = vmatmul.f32.gmra.mxu0 %v1050
          %v2112 = vpop.f32.mrf.mxu0
          %v2113 = vadd.f32 %v2048, %v2112
          %2114 = vmatmul.f32.gmra.mxu0 %v1051
          %v2115 = vpop.f32.mrf.mxu0
          %v2116 = vadd.f32 %v2051, %v2115
          %2117 = vdwg.mxu0
          %2118 = vmatpush.msra.mxu0 %v1534
          %2119 = vmatpush.msra.mxu0 %v1532
          %2120 = vmatpush.msra.mxu0 %v1530
          %2121 = vmatpush.msra.mxu0 %v1528
          %2122 = vmatpush.msra.mxu0 %v1526
          %2123 = vmatpush.msra.mxu0 %v1524
          %2124 = vmatpush.msra.mxu0 %v1522
          %2125 = vmatpush.msra.mxu0 %v1520
          %2126 = vmatpush.msra.mxu0 %v1518
          %2127 = vmatpush.msra.mxu0 %v1516
          %2128 = vmatpush.msra.mxu0 %v1514
          %2129 = vmatpush.msra.mxu0 %v1512
          %2130 = vmatpush.msra.mxu0 %v1510
          %2131 = vmatpush.msra.mxu0 %v1508
          %2132 = vmatpush.msra.mxu0 %v1506
          %2133 = vmatpush.msra.mxu0 %v1504
          %2134 = vmatmul.f32.gmra.mxu0 %v1068
          %v2135 = vpop.f32.mrf.mxu0
          %v2136 = vadd.f32 %v2071, %v2135
          %2137 = vmatmul.f32.gmra.mxu0 %v1069
          %v2138 = vpop.f32.mrf.mxu0
          %v2139 = vadd.f32 %v2074, %v2138
          %2140 = vmatmul.f32.gmra.mxu0 %v1070
          %v2141 = vpop.f32.mrf.mxu0
          %v2142 = vadd.f32 %v2077, %v2141
          %2143 = vmatmul.f32.gmra.mxu0 %v1071
          %v2144 = vpop.f32.mrf.mxu0
          %v2145 = vadd.f32 %v2080, %v2144
          %2146 = vmatmul.f32.gmra.mxu0 %v1072
          %v2147 = vpop.f32.mrf.mxu0
          %v2148 = vadd.f32 %v2083, %v2147
          %2149 = vmatmul.f32.gmra.mxu0 %v1073
          %v2150 = vpop.f32.mrf.mxu0
          %v2151 = vadd.f32 %v2086, %v2150
          %2152 = vmatmul.f32.gmra.mxu0 %v1074
          %v2153 = vpop.f32.mrf.mxu0
          %v2154 = vadd.f32 %v2089, %v2153
          %2155 = vmatmul.f32.gmra.mxu0 %v1075
          %v2156 = vpop.f32.mrf.mxu0
          %v2157 = vadd.f32 %v2092, %v2156
          %2158 = vmatmul.f32.gmra.mxu0 %v1076
          %v2159 = vpop.f32.mrf.mxu0
          %v2160 = vadd.f32 %v2095, %v2159
          %2161 = vmatmul.f32.gmra.mxu0 %v1077
          %v2162 = vpop.f32.mrf.mxu0
          %v2163 = vadd.f32 %v2098, %v2162
          %2164 = vmatmul.f32.gmra.mxu0 %v1078
          %v2165 = vpop.f32.mrf.mxu0
          %v2166 = vadd.f32 %v2101, %v2165
          %2167 = vmatmul.f32.gmra.mxu0 %v1079
          %v2168 = vpop.f32.mrf.mxu0
          %v2169 = vadd.f32 %v2104, %v2168
          %2170 = vmatmul.f32.gmra.mxu0 %v1080
          %v2171 = vpop.f32.mrf.mxu0
          %v2172 = vadd.f32 %v2107, %v2171
          %2173 = vmatmul.f32.gmra.mxu0 %v1081
          %v2174 = vpop.f32.mrf.mxu0
          %v2175 = vadd.f32 %v2110, %v2174
          %2176 = vmatmul.f32.gmra.mxu0 %v1082
          %v2177 = vpop.f32.mrf.mxu0
          %v2178 = vadd.f32 %v2113, %v2177
          %2179 = vmatmul.f32.gmra.mxu0 %v1083
          %v2180 = vpop.f32.mrf.mxu0
          %v2181 = vadd.f32 %v2116, %v2180
          %2182 = vdwg.mxu0
          %2183 = vmatpush.msra.mxu0 %v1439
          %2184 = vmatpush.msra.mxu0 %v1437
          %2185 = vmatpush.msra.mxu0 %v1435
          %2186 = vmatpush.msra.mxu0 %v1433
          %2187 = vmatpush.msra.mxu0 %v1431
          %2188 = vmatpush.msra.mxu0 %v1429
          %2189 = vmatpush.msra.mxu0 %v1427
          %2190 = vmatpush.msra.mxu0 %v1425
          %2191 = vmatpush.msra.mxu0 %v1423
          %2192 = vmatpush.msra.mxu0 %v1421
          %2193 = vmatpush.msra.mxu0 %v1419
          %2194 = vmatpush.msra.mxu0 %v1417
          %2195 = vmatpush.msra.mxu0 %v1415
          %2196 = vmatpush.msra.mxu0 %v1413
          %2197 = vmatpush.msra.mxu0 %v1411
          %2198 = vmatpush.msra.mxu0 %v1409
          %2199 = vmatmul.f32.gmra.mxu0 %v972
          %v2200 = vpop.f32.mrf.mxu0
          %v2201 = vadd.f32 0.0, %v2200
          %2202 = vmatmul.f32.gmra.mxu0 %v973
          %v2203 = vpop.f32.mrf.mxu0
          %v2204 = vadd.f32 0.0, %v2203
          %2205 = vmatmul.f32.gmra.mxu0 %v974
          %v2206 = vpop.f32.mrf.mxu0
          %v2207 = vadd.f32 0.0, %v2206
          %2208 = vmatmul.f32.gmra.mxu0 %v975
          %v2209 = vpop.f32.mrf.mxu0
          %v2210 = vadd.f32 0.0, %v2209
          %2211 = vmatmul.f32.gmra.mxu0 %v976
          %v2212 = vpop.f32.mrf.mxu0
          %v2213 = vadd.f32 0.0, %v2212
          %2214 = vmatmul.f32.gmra.mxu0 %v977
          %v2215 = vpop.f32.mrf.mxu0
          %v2216 = vadd.f32 0.0, %v2215
          %2217 = vmatmul.f32.gmra.mxu0 %v978
          %v2218 = vpop.f32.mrf.mxu0
          %v2219 = vadd.f32 0.0, %v2218
          %2220 = vmatmul.f32.gmra.mxu0 %v979
          %v2221 = vpop.f32.mrf.mxu0
          %v2222 = vadd.f32 0.0, %v2221
          %2223 = vmatmul.f32.gmra.mxu0 %v980
          %v2224 = vpop.f32.mrf.mxu0
          %v2225 = vadd.f32 0.0, %v2224
          %2226 = vmatmul.f32.gmra.mxu0 %v981
          %v2227 = vpop.f32.mrf.mxu0
          %v2228 = vadd.f32 0.0, %v2227
          %2229 = vmatmul.f32.gmra.mxu0 %v982
          %v2230 = vpop.f32.mrf.mxu0
          %v2231 = vadd.f32 0.0, %v2230
          %2232 = vmatmul.f32.gmra.mxu0 %v983
          %v2233 = vpop.f32.mrf.mxu0
          %v2234 = vadd.f32 0.0, %v2233
          %2235 = vmatmul.f32.gmra.mxu0 %v984
          %v2236 = vpop.f32.mrf.mxu0
          %v2237 = vadd.f32 0.0, %v2236
          %2238 = vmatmul.f32.gmra.mxu0 %v985
          %v2239 = vpop.f32.mrf.mxu0
          %v2240 = vadd.f32 0.0, %v2239
          %2241 = vmatmul.f32.gmra.mxu0 %v986
          %v2242 = vpop.f32.mrf.mxu0
          %v2243 = vadd.f32 0.0, %v2242
          %2244 = vmatmul.f32.gmra.mxu0 %v987
          %v2245 = vpop.f32.mrf.mxu0
          %v2246 = vadd.f32 0.0, %v2245
          %2247 = vdwg.mxu0
          %2248 = vmatpush.msra.mxu0 %v1471
          %2249 = vmatpush.msra.mxu0 %v1469
          %2250 = vmatpush.msra.mxu0 %v1467
          %2251 = vmatpush.msra.mxu0 %v1465
          %2252 = vmatpush.msra.mxu0 %v1463
          %2253 = vmatpush.msra.mxu0 %v1461
          %2254 = vmatpush.msra.mxu0 %v1459
          %2255 = vmatpush.msra.mxu0 %v1457
          %2256 = vmatpush.msra.mxu0 %v1455
          %2257 = vmatpush.msra.mxu0 %v1453
          %2258 = vmatpush.msra.mxu0 %v1451
          %2259 = vmatpush.msra.mxu0 %v1449
          %2260 = vmatpush.msra.mxu0 %v1447
          %2261 = vmatpush.msra.mxu0 %v1445
          %2262 = vmatpush.msra.mxu0 %v1443
          %2263 = vmatpush.msra.mxu0 %v1441
          %2264 = vmatmul.f32.gmra.mxu0 %v1004
          %v2265 = vpop.f32.mrf.mxu0
          %v2266 = vadd.f32 %v2201, %v2265
          %2267 = vmatmul.f32.gmra.mxu0 %v1005
          %v2268 = vpop.f32.mrf.mxu0
          %v2269 = vadd.f32 %v2204, %v2268
          %2270 = vmatmul.f32.gmra.mxu0 %v1006
          %v2271 = vpop.f32.mrf.mxu0
          %v2272 = vadd.f32 %v2207, %v2271
          %2273 = vmatmul.f32.gmra.mxu0 %v1007
          %v2274 = vpop.f32.mrf.mxu0
          %v2275 = vadd.f32 %v2210, %v2274
          %2276 = vmatmul.f32.gmra.mxu0 %v1008
          %v2277 = vpop.f32.mrf.mxu0
          %v2278 = vadd.f32 %v2213, %v2277
          %2279 = vmatmul.f32.gmra.mxu0 %v1009
          %v2280 = vpop.f32.mrf.mxu0
          %v2281 = vadd.f32 %v2216, %v2280
          %2282 = vmatmul.f32.gmra.mxu0 %v1010
          %v2283 = vpop.f32.mrf.mxu0
          %v2284 = vadd.f32 %v2219, %v2283
          %2285 = vmatmul.f32.gmra.mxu0 %v1011
          %v2286 = vpop.f32.mrf.mxu0
          %v2287 = vadd.f32 %v2222, %v2286
          %2288 = vmatmul.f32.gmra.mxu0 %v1012
          %v2289 = vpop.f32.mrf.mxu0
          %v2290 = vadd.f32 %v2225, %v2289
          %2291 = vmatmul.f32.gmra.mxu0 %v1013
          %v2292 = vpop.f32.mrf.mxu0
          %v2293 = vadd.f32 %v2228, %v2292
          %2294 = vmatmul.f32.gmra.mxu0 %v1014
          %v2295 = vpop.f32.mrf.mxu0
          %v2296 = vadd.f32 %v2231, %v2295
          %2297 = vmatmul.f32.gmra.mxu0 %v1015
          %v2298 = vpop.f32.mrf.mxu0
          %v2299 = vadd.f32 %v2234, %v2298
          %2300 = vmatmul.f32.gmra.mxu0 %v1016
          %v2301 = vpop.f32.mrf.mxu0
          %v2302 = vadd.f32 %v2237, %v2301
          %2303 = vmatmul.f32.gmra.mxu0 %v1017
          %v2304 = vpop.f32.mrf.mxu0
          %v2305 = vadd.f32 %v2240, %v2304
          %2306 = vmatmul.f32.gmra.mxu0 %v1018
          %v2307 = vpop.f32.mrf.mxu0
          %v2308 = vadd.f32 %v2243, %v2307
          %2309 = vmatmul.f32.gmra.mxu0 %v1019
          %v2310 = vpop.f32.mrf.mxu0
          %v2311 = vadd.f32 %v2246, %v2310
          %2312 = vdwg.mxu0
          %2313 = vmatpush.msra.mxu0 %v1503
          %2314 = vmatpush.msra.mxu0 %v1501
          %2315 = vmatpush.msra.mxu0 %v1499
          %2316 = vmatpush.msra.mxu0 %v1497
          %2317 = vmatpush.msra.mxu0 %v1495
          %2318 = vmatpush.msra.mxu0 %v1493
          %2319 = vmatpush.msra.mxu0 %v1491
          %2320 = vmatpush.msra.mxu0 %v1489
          %2321 = vmatpush.msra.mxu0 %v1487
          %2322 = vmatpush.msra.mxu0 %v1485
          %2323 = vmatpush.msra.mxu0 %v1483
          %2324 = vmatpush.msra.mxu0 %v1481
          %2325 = vmatpush.msra.mxu0 %v1479
          %2326 = vmatpush.msra.mxu0 %v1477
          %2327 = vmatpush.msra.mxu0 %v1475
          %2328 = vmatpush.msra.mxu0 %v1473
          %2329 = vmatmul.f32.gmra.mxu0 %v1036
          %v2330 = vpop.f32.mrf.mxu0
          %v2331 = vadd.f32 %v2266, %v2330
          %2332 = vmatmul.f32.gmra.mxu0 %v1037
          %v2333 = vpop.f32.mrf.mxu0
          %v2334 = vadd.f32 %v2269, %v2333
          %2335 = vmatmul.f32.gmra.mxu0 %v1038
          %v2336 = vpop.f32.mrf.mxu0
          %v2337 = vadd.f32 %v2272, %v2336
          %2338 = vmatmul.f32.gmra.mxu0 %v1039
          %v2339 = vpop.f32.mrf.mxu0
          %v2340 = vadd.f32 %v2275, %v2339
          %2341 = vmatmul.f32.gmra.mxu0 %v1040
          %v2342 = vpop.f32.mrf.mxu0
          %v2343 = vadd.f32 %v2278, %v2342
          %2344 = vmatmul.f32.gmra.mxu0 %v1041
          %v2345 = vpop.f32.mrf.mxu0
          %v2346 = vadd.f32 %v2281, %v2345
          %2347 = vmatmul.f32.gmra.mxu0 %v1042
          %v2348 = vpop.f32.mrf.mxu0
          %v2349 = vadd.f32 %v2284, %v2348
          %2350 = vmatmul.f32.gmra.mxu0 %v1043
          %v2351 = vpop.f32.mrf.mxu0
          %v2352 = vadd.f32 %v2287, %v2351
          %2353 = vmatmul.f32.gmra.mxu0 %v1044
          %v2354 = vpop.f32.mrf.mxu0
          %v2355 = vadd.f32 %v2290, %v2354
          %2356 = vmatmul.f32.gmra.mxu0 %v1045
          %v2357 = vpop.f32.mrf.mxu0
          %v2358 = vadd.f32 %v2293, %v2357
          %2359 = vmatmul.f32.gmra.mxu0 %v1046
          %v2360 = vpop.f32.mrf.mxu0
          %v2361 = vadd.f32 %v2296, %v2360
          %2362 = vmatmul.f32.gmra.mxu0 %v1047
          %v2363 = vpop.f32.mrf.mxu0
          %v2364 = vadd.f32 %v2299, %v2363
          %2365 = vmatmul.f32.gmra.mxu0 %v1048
          %v2366 = vpop.f32.mrf.mxu0
          %v2367 = vadd.f32 %v2302, %v2366
          %2368 = vmatmul.f32.gmra.mxu0 %v1049
          %v2369 = vpop.f32.mrf.mxu0
          %v2370 = vadd.f32 %v2305, %v2369
          %2371 = vmatmul.f32.gmra.mxu0 %v1050
          %v2372 = vpop.f32.mrf.mxu0
          %v2373 = vadd.f32 %v2308, %v2372
          %2374 = vmatmul.f32.gmra.mxu0 %v1051
          %v2375 = vpop.f32.mrf.mxu0
          %v2376 = vadd.f32 %v2311, %v2375
          %2377 = vdwg.mxu0
          %2378 = vmatpush.msra.mxu0 %v1535
          %2379 = vmatpush.msra.mxu0 %v1533
          %2380 = vmatpush.msra.mxu0 %v1531
          %2381 = vmatpush.msra.mxu0 %v1529
          %2382 = vmatpush.msra.mxu0 %v1527
          %2383 = vmatpush.msra.mxu0 %v1525
          %2384 = vmatpush.msra.mxu0 %v1523
          %2385 = vmatpush.msra.mxu0 %v1521
          %2386 = vmatpush.msra.mxu0 %v1519
          %2387 = vmatpush.msra.mxu0 %v1517
          %2388 = vmatpush.msra.mxu0 %v1515
          %2389 = vmatpush.msra.mxu0 %v1513
          %2390 = vmatpush.msra.mxu0 %v1511
          %2391 = vmatpush.msra.mxu0 %v1509
          %2392 = vmatpush.msra.mxu0 %v1507
          %2393 = vmatpush.msra.mxu0 %v1505
          %2394 = vmatmul.f32.gmra.mxu0 %v1068
          %v2395 = vpop.f32.mrf.mxu0
          %v2396 = vadd.f32 %v2331, %v2395
          %2397 = vmatmul.f32.gmra.mxu0 %v1069
          %v2398 = vpop.f32.mrf.mxu0
          %v2399 = vadd.f32 %v2334, %v2398
          %2400 = vmatmul.f32.gmra.mxu0 %v1070
          %v2401 = vpop.f32.mrf.mxu0
          %v2402 = vadd.f32 %v2337, %v2401
          %2403 = vmatmul.f32.gmra.mxu0 %v1071
          %v2404 = vpop.f32.mrf.mxu0
          %v2405 = vadd.f32 %v2340, %v2404
          %2406 = vmatmul.f32.gmra.mxu0 %v1072
          %v2407 = vpop.f32.mrf.mxu0
          %v2408 = vadd.f32 %v2343, %v2407
          %2409 = vmatmul.f32.gmra.mxu0 %v1073
          %v2410 = vpop.f32.mrf.mxu0
          %v2411 = vadd.f32 %v2346, %v2410
          %2412 = vmatmul.f32.gmra.mxu0 %v1074
          %v2413 = vpop.f32.mrf.mxu0
          %v2414 = vadd.f32 %v2349, %v2413
          %2415 = vmatmul.f32.gmra.mxu0 %v1075
          %v2416 = vpop.f32.mrf.mxu0
          %v2417 = vadd.f32 %v2352, %v2416
          %2418 = vmatmul.f32.gmra.mxu0 %v1076
          %v2419 = vpop.f32.mrf.mxu0
          %v2420 = vadd.f32 %v2355, %v2419
          %2421 = vmatmul.f32.gmra.mxu0 %v1077
          %v2422 = vpop.f32.mrf.mxu0
          %v2423 = vadd.f32 %v2358, %v2422
          %2424 = vmatmul.f32.gmra.mxu0 %v1078
          %v2425 = vpop.f32.mrf.mxu0
          %v2426 = vadd.f32 %v2361, %v2425
          %2427 = vmatmul.f32.gmra.mxu0 %v1079
          %v2428 = vpop.f32.mrf.mxu0
          %v2429 = vadd.f32 %v2364, %v2428
          %2430 = vmatmul.f32.gmra.mxu0 %v1080
          %v2431 = vpop.f32.mrf.mxu0
          %v2432 = vadd.f32 %v2367, %v2431
          %2433 = vmatmul.f32.gmra.mxu0 %v1081
          %v2434 = vpop.f32.mrf.mxu0
          %v2435 = vadd.f32 %v2370, %v2434
          %2436 = vmatmul.f32.gmra.mxu0 %v1082
          %v2437 = vpop.f32.mrf.mxu0
          %v2438 = vadd.f32 %v2373, %v2437
          %2439 = vmatmul.f32.gmra.mxu0 %v1083
          %v2440 = vpop.f32.mrf.mxu0
          %v2441 = vadd.f32 %v2376, %v2440
          %2442 = vdwg.mxu0
          %2443 = vmatpush.msra.mxu0 %v1825
          %2444 = vmatpush.msra.mxu0 %v1823
          %2445 = vmatpush.msra.mxu0 %v1821
          %2446 = vmatpush.msra.mxu0 %v1819
          %2447 = vmatpush.msra.mxu0 %v1817
          %2448 = vmatpush.msra.mxu0 %v1815
          %2449 = vmatpush.msra.mxu0 %v1813
          %2450 = vmatpush.msra.mxu0 %v1811
          %2451 = vmatpush.msra.mxu0 %v1809
          %2452 = vmatpush.msra.mxu0 %v1807
          %2453 = vmatpush.msra.mxu0 %v1805
          %2454 = vmatpush.msra.mxu0 %v1803
          %2455 = vmatpush.msra.mxu0 %v1801
          %2456 = vmatpush.msra.mxu0 %v1799
          %2457 = vmatpush.msra.mxu0 %v1797
          %2458 = vmatpush.msra.mxu0 %v1795
          %2459 = vmatmul.f32.gmra.mxu0 %v972
          %v2460 = vpop.f32.mrf.mxu0
          %v2461 = vadd.f32 0.0, %v2460
          %2462 = vmatmul.f32.gmra.mxu0 %v973
          %v2463 = vpop.f32.mrf.mxu0
          %v2464 = vadd.f32 0.0, %v2463
          %2465 = vmatmul.f32.gmra.mxu0 %v974
          %v2466 = vpop.f32.mrf.mxu0
          %v2467 = vadd.f32 0.0, %v2466
          %2468 = vmatmul.f32.gmra.mxu0 %v975
          %v2469 = vpop.f32.mrf.mxu0
          %v2470 = vadd.f32 0.0, %v2469
          %2471 = vmatmul.f32.gmra.mxu0 %v976
          %v2472 = vpop.f32.mrf.mxu0
          %v2473 = vadd.f32 0.0, %v2472
          %2474 = vmatmul.f32.gmra.mxu0 %v977
          %v2475 = vpop.f32.mrf.mxu0
          %v2476 = vadd.f32 0.0, %v2475
          %2477 = vmatmul.f32.gmra.mxu0 %v978
          %v2478 = vpop.f32.mrf.mxu0
          %v2479 = vadd.f32 0.0, %v2478
          %2480 = vmatmul.f32.gmra.mxu0 %v979
          %v2481 = vpop.f32.mrf.mxu0
          %v2482 = vadd.f32 0.0, %v2481
          %2483 = vmatmul.f32.gmra.mxu0 %v980
          %v2484 = vpop.f32.mrf.mxu0
          %v2485 = vadd.f32 0.0, %v2484
          %2486 = vmatmul.f32.gmra.mxu0 %v981
          %v2487 = vpop.f32.mrf.mxu0
          %v2488 = vadd.f32 0.0, %v2487
          %2489 = vmatmul.f32.gmra.mxu0 %v982
          %v2490 = vpop.f32.mrf.mxu0
          %v2491 = vadd.f32 0.0, %v2490
          %2492 = vmatmul.f32.gmra.mxu0 %v983
          %v2493 = vpop.f32.mrf.mxu0
          %v2494 = vadd.f32 0.0, %v2493
          %2495 = vmatmul.f32.gmra.mxu0 %v984
          %v2496 = vpop.f32.mrf.mxu0
          %v2497 = vadd.f32 0.0, %v2496
          %2498 = vmatmul.f32.gmra.mxu0 %v985
          %v2499 = vpop.f32.mrf.mxu0
          %v2500 = vadd.f32 0.0, %v2499
          %2501 = vmatmul.f32.gmra.mxu0 %v986
          %v2502 = vpop.f32.mrf.mxu0
          %v2503 = vadd.f32 0.0, %v2502
          %2504 = vmatmul.f32.gmra.mxu0 %v987
          %v2505 = vpop.f32.mrf.mxu0
          %v2506 = vadd.f32 0.0, %v2505
          %2507 = vdwg.mxu0
          %2508 = vmatpush.msra.mxu0 %v1857
          %2509 = vmatpush.msra.mxu0 %v1855
          %2510 = vmatpush.msra.mxu0 %v1853
          %2511 = vmatpush.msra.mxu0 %v1851
          %2512 = vmatpush.msra.mxu0 %v1849
          %2513 = vmatpush.msra.mxu0 %v1847
          %2514 = vmatpush.msra.mxu0 %v1845
          %2515 = vmatpush.msra.mxu0 %v1843
          %2516 = vmatpush.msra.mxu0 %v1841
          %2517 = vmatpush.msra.mxu0 %v1839
          %2518 = vmatpush.msra.mxu0 %v1837
          %2519 = vmatpush.msra.mxu0 %v1835
          %2520 = vmatpush.msra.mxu0 %v1833
          %2521 = vmatpush.msra.mxu0 %v1831
          %2522 = vmatpush.msra.mxu0 %v1829
          %2523 = vmatpush.msra.mxu0 %v1827
          %2524 = vmatmul.f32.gmra.mxu0 %v1004
          %v2525 = vpop.f32.mrf.mxu0
          %v2526 = vadd.f32 %v2461, %v2525
          %2527 = vmatmul.f32.gmra.mxu0 %v1005
          %v2528 = vpop.f32.mrf.mxu0
          %v2529 = vadd.f32 %v2464, %v2528
          %2530 = vmatmul.f32.gmra.mxu0 %v1006
          %v2531 = vpop.f32.mrf.mxu0
          %v2532 = vadd.f32 %v2467, %v2531
          %2533 = vmatmul.f32.gmra.mxu0 %v1007
          %v2534 = vpop.f32.mrf.mxu0
          %v2535 = vadd.f32 %v2470, %v2534
          %2536 = vmatmul.f32.gmra.mxu0 %v1008
          %v2537 = vpop.f32.mrf.mxu0
          %v2538 = vadd.f32 %v2473, %v2537
          %2539 = vmatmul.f32.gmra.mxu0 %v1009
          %v2540 = vpop.f32.mrf.mxu0
          %v2541 = vadd.f32 %v2476, %v2540
          %2542 = vmatmul.f32.gmra.mxu0 %v1010
          %v2543 = vpop.f32.mrf.mxu0
          %v2544 = vadd.f32 %v2479, %v2543
          %2545 = vmatmul.f32.gmra.mxu0 %v1011
          %v2546 = vpop.f32.mrf.mxu0
          %v2547 = vadd.f32 %v2482, %v2546
          %2548 = vmatmul.f32.gmra.mxu0 %v1012
          %v2549 = vpop.f32.mrf.mxu0
          %v2550 = vadd.f32 %v2485, %v2549
          %2551 = vmatmul.f32.gmra.mxu0 %v1013
          %v2552 = vpop.f32.mrf.mxu0
          %v2553 = vadd.f32 %v2488, %v2552
          %2554 = vmatmul.f32.gmra.mxu0 %v1014
          %v2555 = vpop.f32.mrf.mxu0
          %v2556 = vadd.f32 %v2491, %v2555
          %2557 = vmatmul.f32.gmra.mxu0 %v1015
          %v2558 = vpop.f32.mrf.mxu0
          %v2559 = vadd.f32 %v2494, %v2558
          %2560 = vmatmul.f32.gmra.mxu0 %v1016
          %v2561 = vpop.f32.mrf.mxu0
          %v2562 = vadd.f32 %v2497, %v2561
          %2563 = vmatmul.f32.gmra.mxu0 %v1017
          %v2564 = vpop.f32.mrf.mxu0
          %v2565 = vadd.f32 %v2500, %v2564
          %2566 = vmatmul.f32.gmra.mxu0 %v1018
          %v2567 = vpop.f32.mrf.mxu0
          %v2568 = vadd.f32 %v2503, %v2567
          %2569 = vmatmul.f32.gmra.mxu0 %v1019
          %v2570 = vpop.f32.mrf.mxu0
          %v2571 = vadd.f32 %v2506, %v2570
          %2572 = vdwg.mxu0
          %2573 = vmatpush.msra.mxu0 %v1889
          %2574 = vmatpush.msra.mxu0 %v1887
          %2575 = vmatpush.msra.mxu0 %v1885
          %2576 = vmatpush.msra.mxu0 %v1883
          %2577 = vmatpush.msra.mxu0 %v1881
          %2578 = vmatpush.msra.mxu0 %v1879
          %2579 = vmatpush.msra.mxu0 %v1877
          %2580 = vmatpush.msra.mxu0 %v1875
          %2581 = vmatpush.msra.mxu0 %v1873
          %2582 = vmatpush.msra.mxu0 %v1871
          %2583 = vmatpush.msra.mxu0 %v1869
          %2584 = vmatpush.msra.mxu0 %v1867
          %2585 = vmatpush.msra.mxu0 %v1865
          %2586 = vmatpush.msra.mxu0 %v1863
          %2587 = vmatpush.msra.mxu0 %v1861
          %2588 = vmatpush.msra.mxu0 %v1859
          %2589 = vmatmul.f32.gmra.mxu0 %v1036
          %v2590 = vpop.f32.mrf.mxu0
          %v2591 = vadd.f32 %v2526, %v2590
          %2592 = vmatmul.f32.gmra.mxu0 %v1037
          %v2593 = vpop.f32.mrf.mxu0
          %v2594 = vadd.f32 %v2529, %v2593
          %2595 = vmatmul.f32.gmra.mxu0 %v1038
          %v2596 = vpop.f32.mrf.mxu0
          %v2597 = vadd.f32 %v2532, %v2596
          %2598 = vmatmul.f32.gmra.mxu0 %v1039
          %v2599 = vpop.f32.mrf.mxu0
          %v2600 = vadd.f32 %v2535, %v2599
          %2601 = vmatmul.f32.gmra.mxu0 %v1040
          %v2602 = vpop.f32.mrf.mxu0
          %v2603 = vadd.f32 %v2538, %v2602
          %2604 = vmatmul.f32.gmra.mxu0 %v1041
          %v2605 = vpop.f32.mrf.mxu0
          %v2606 = vadd.f32 %v2541, %v2605
          %2607 = vmatmul.f32.gmra.mxu0 %v1042
          %v2608 = vpop.f32.mrf.mxu0
          %v2609 = vadd.f32 %v2544, %v2608
          %2610 = vmatmul.f32.gmra.mxu0 %v1043
          %v2611 = vpop.f32.mrf.mxu0
          %v2612 = vadd.f32 %v2547, %v2611
          %2613 = vmatmul.f32.gmra.mxu0 %v1044
          %v2614 = vpop.f32.mrf.mxu0
          %v2615 = vadd.f32 %v2550, %v2614
          %2616 = vmatmul.f32.gmra.mxu0 %v1045
          %v2617 = vpop.f32.mrf.mxu0
          %v2618 = vadd.f32 %v2553, %v2617
          %2619 = vmatmul.f32.gmra.mxu0 %v1046
          %v2620 = vpop.f32.mrf.mxu0
          %v2621 = vadd.f32 %v2556, %v2620
          %2622 = vmatmul.f32.gmra.mxu0 %v1047
          %v2623 = vpop.f32.mrf.mxu0
          %v2624 = vadd.f32 %v2559, %v2623
          %2625 = vmatmul.f32.gmra.mxu0 %v1048
          %v2626 = vpop.f32.mrf.mxu0
          %v2627 = vadd.f32 %v2562, %v2626
          %2628 = vmatmul.f32.gmra.mxu0 %v1049
          %v2629 = vpop.f32.mrf.mxu0
          %v2630 = vadd.f32 %v2565, %v2629
          %2631 = vmatmul.f32.gmra.mxu0 %v1050
          %v2632 = vpop.f32.mrf.mxu0
          %v2633 = vadd.f32 %v2568, %v2632
          %2634 = vmatmul.f32.gmra.mxu0 %v1051
          %v2635 = vpop.f32.mrf.mxu0
          %v2636 = vadd.f32 %v2571, %v2635
          %2637 = vdwg.mxu0
          %2638 = vmatpush.msra.mxu0 %v1921
          %2639 = vmatpush.msra.mxu0 %v1919
          %2640 = vmatpush.msra.mxu0 %v1917
          %2641 = vmatpush.msra.mxu0 %v1915
          %2642 = vmatpush.msra.mxu0 %v1913
          %2643 = vmatpush.msra.mxu0 %v1911
          %2644 = vmatpush.msra.mxu0 %v1909
          %2645 = vmatpush.msra.mxu0 %v1907
          %2646 = vmatpush.msra.mxu0 %v1905
          %2647 = vmatpush.msra.mxu0 %v1903
          %2648 = vmatpush.msra.mxu0 %v1901
          %2649 = vmatpush.msra.mxu0 %v1899
          %2650 = vmatpush.msra.mxu0 %v1897
          %2651 = vmatpush.msra.mxu0 %v1895
          %2652 = vmatpush.msra.mxu0 %v1893
          %2653 = vmatpush.msra.mxu0 %v1891
          %2654 = vmatmul.f32.gmra.mxu0 %v1068
          %v2655 = vpop.f32.mrf.mxu0
          %v2656 = vadd.f32 %v2591, %v2655
          %2657 = vmatmul.f32.gmra.mxu0 %v1069
          %v2658 = vpop.f32.mrf.mxu0
          %v2659 = vadd.f32 %v2594, %v2658
          %2660 = vmatmul.f32.gmra.mxu0 %v1070
          %v2661 = vpop.f32.mrf.mxu0
          %v2662 = vadd.f32 %v2597, %v2661
          %2663 = vmatmul.f32.gmra.mxu0 %v1071
          %v2664 = vpop.f32.mrf.mxu0
          %v2665 = vadd.f32 %v2600, %v2664
          %2666 = vmatmul.f32.gmra.mxu0 %v1072
          %v2667 = vpop.f32.mrf.mxu0
          %v2668 = vadd.f32 %v2603, %v2667
          %2669 = vmatmul.f32.gmra.mxu0 %v1073
          %v2670 = vpop.f32.mrf.mxu0
          %v2671 = vadd.f32 %v2606, %v2670
          %2672 = vmatmul.f32.gmra.mxu0 %v1074
          %v2673 = vpop.f32.mrf.mxu0
          %v2674 = vadd.f32 %v2609, %v2673
          %2675 = vmatmul.f32.gmra.mxu0 %v1075
          %v2676 = vpop.f32.mrf.mxu0
          %v2677 = vadd.f32 %v2612, %v2676
          %2678 = vmatmul.f32.gmra.mxu0 %v1076
          %v2679 = vpop.f32.mrf.mxu0
          %v2680 = vadd.f32 %v2615, %v2679
          %2681 = vmatmul.f32.gmra.mxu0 %v1077
          %v2682 = vpop.f32.mrf.mxu0
          %v2683 = vadd.f32 %v2618, %v2682
          %2684 = vmatmul.f32.gmra.mxu0 %v1078
          %v2685 = vpop.f32.mrf.mxu0
          %v2686 = vadd.f32 %v2621, %v2685
          %2687 = vmatmul.f32.gmra.mxu0 %v1079
          %v2688 = vpop.f32.mrf.mxu0
          %v2689 = vadd.f32 %v2624, %v2688
          %2690 = vmatmul.f32.gmra.mxu0 %v1080
          %v2691 = vpop.f32.mrf.mxu0
          %v2692 = vadd.f32 %v2627, %v2691
          %2693 = vmatmul.f32.gmra.mxu0 %v1081
          %v2694 = vpop.f32.mrf.mxu0
          %v2695 = vadd.f32 %v2630, %v2694
          %2696 = vmatmul.f32.gmra.mxu0 %v1082
          %v2697 = vpop.f32.mrf.mxu0
          %v2698 = vadd.f32 %v2633, %v2697
          %2699 = vmatmul.f32.gmra.mxu0 %v1083
          %v2700 = vpop.f32.mrf.mxu0
          %v2701 = vadd.f32 %v2636, %v2700
          %2702 = vdwg.mxu0
          %2703 = vmatpush.msra.mxu0 %v1826
          %2704 = vmatpush.msra.mxu0 %v1824
          %2705 = vmatpush.msra.mxu0 %v1822
          %2706 = vmatpush.msra.mxu0 %v1820
          %2707 = vmatpush.msra.mxu0 %v1818
          %2708 = vmatpush.msra.mxu0 %v1816
          %2709 = vmatpush.msra.mxu0 %v1814
          %2710 = vmatpush.msra.mxu0 %v1812
          %2711 = vmatpush.msra.mxu0 %v1810
          %2712 = vmatpush.msra.mxu0 %v1808
          %2713 = vmatpush.msra.mxu0 %v1806
          %2714 = vmatpush.msra.mxu0 %v1804
          %2715 = vmatpush.msra.mxu0 %v1802
          %2716 = vmatpush.msra.mxu0 %v1800
          %2717 = vmatpush.msra.mxu0 %v1798
          %2718 = vmatpush.msra.mxu0 %v1796
          %2719 = vmatmul.f32.gmra.mxu0 %v972
          %v2720 = vpop.f32.mrf.mxu0
          %v2721 = vadd.f32 0.0, %v2720
          %2722 = vmatmul.f32.gmra.mxu0 %v973
          %v2723 = vpop.f32.mrf.mxu0
          %v2724 = vadd.f32 0.0, %v2723
          %2725 = vmatmul.f32.gmra.mxu0 %v974
          %v2726 = vpop.f32.mrf.mxu0
          %v2727 = vadd.f32 0.0, %v2726
          %2728 = vmatmul.f32.gmra.mxu0 %v975
          %v2729 = vpop.f32.mrf.mxu0
          %v2730 = vadd.f32 0.0, %v2729
          %2731 = vmatmul.f32.gmra.mxu0 %v976
          %v2732 = vpop.f32.mrf.mxu0
          %v2733 = vadd.f32 0.0, %v2732
          %2734 = vmatmul.f32.gmra.mxu0 %v977
          %v2735 = vpop.f32.mrf.mxu0
          %v2736 = vadd.f32 0.0, %v2735
          %2737 = vmatmul.f32.gmra.mxu0 %v978
          %v2738 = vpop.f32.mrf.mxu0
          %v2739 = vadd.f32 0.0, %v2738
          %2740 = vmatmul.f32.gmra.mxu0 %v979
          %v2741 = vpop.f32.mrf.mxu0
          %v2742 = vadd.f32 0.0, %v2741
          %2743 = vmatmul.f32.gmra.mxu0 %v980
          %v2744 = vpop.f32.mrf.mxu0
          %v2745 = vadd.f32 0.0, %v2744
          %2746 = vmatmul.f32.gmra.mxu0 %v981
          %v2747 = vpop.f32.mrf.mxu0
          %v2748 = vadd.f32 0.0, %v2747
          %2749 = vmatmul.f32.gmra.mxu0 %v982
          %v2750 = vpop.f32.mrf.mxu0
          %v2751 = vadd.f32 0.0, %v2750
          %2752 = vmatmul.f32.gmra.mxu0 %v983
          %v2753 = vpop.f32.mrf.mxu0
          %v2754 = vadd.f32 0.0, %v2753
          %2755 = vmatmul.f32.gmra.mxu0 %v984
          %v2756 = vpop.f32.mrf.mxu0
          %v2757 = vadd.f32 0.0, %v2756
          %2758 = vmatmul.f32.gmra.mxu0 %v985
          %v2759 = vpop.f32.mrf.mxu0
          %v2760 = vadd.f32 0.0, %v2759
          %2761 = vmatmul.f32.gmra.mxu0 %v986
          %v2762 = vpop.f32.mrf.mxu0
          %v2763 = vadd.f32 0.0, %v2762
          %2764 = vmatmul.f32.gmra.mxu0 %v987
          %v2765 = vpop.f32.mrf.mxu0
          %v2766 = vadd.f32 0.0, %v2765
          %2767 = vdwg.mxu0
          %2768 = vmatpush.msra.mxu0 %v1858
          %2769 = vmatpush.msra.mxu0 %v1856
          %2770 = vmatpush.msra.mxu0 %v1854
          %2771 = vmatpush.msra.mxu0 %v1852
          %2772 = vmatpush.msra.mxu0 %v1850
          %2773 = vmatpush.msra.mxu0 %v1848
          %2774 = vmatpush.msra.mxu0 %v1846
          %2775 = vmatpush.msra.mxu0 %v1844
          %2776 = vmatpush.msra.mxu0 %v1842
          %2777 = vmatpush.msra.mxu0 %v1840
          %2778 = vmatpush.msra.mxu0 %v1838
          %2779 = vmatpush.msra.mxu0 %v1836
          %2780 = vmatpush.msra.mxu0 %v1834
          %2781 = vmatpush.msra.mxu0 %v1832
          %2782 = vmatpush.msra.mxu0 %v1830
          %2783 = vmatpush.msra.mxu0 %v1828
          %2784 = vmatmul.f32.gmra.mxu0 %v1004
          %v2785 = vpop.f32.mrf.mxu0
          %v2786 = vadd.f32 %v2721, %v2785
          %2787 = vmatmul.f32.gmra.mxu0 %v1005
          %v2788 = vpop.f32.mrf.mxu0
          %v2789 = vadd.f32 %v2724, %v2788
          %2790 = vmatmul.f32.gmra.mxu0 %v1006
          %v2791 = vpop.f32.mrf.mxu0
          %v2792 = vadd.f32 %v2727, %v2791
          %2793 = vmatmul.f32.gmra.mxu0 %v1007
          %v2794 = vpop.f32.mrf.mxu0
          %v2795 = vadd.f32 %v2730, %v2794
          %2796 = vmatmul.f32.gmra.mxu0 %v1008
          %v2797 = vpop.f32.mrf.mxu0
          %v2798 = vadd.f32 %v2733, %v2797
          %2799 = vmatmul.f32.gmra.mxu0 %v1009
          %v2800 = vpop.f32.mrf.mxu0
          %v2801 = vadd.f32 %v2736, %v2800
          %2802 = vmatmul.f32.gmra.mxu0 %v1010
          %v2803 = vpop.f32.mrf.mxu0
          %v2804 = vadd.f32 %v2739, %v2803
          %2805 = vmatmul.f32.gmra.mxu0 %v1011
          %v2806 = vpop.f32.mrf.mxu0
          %v2807 = vadd.f32 %v2742, %v2806
          %2808 = vmatmul.f32.gmra.mxu0 %v1012
          %v2809 = vpop.f32.mrf.mxu0
          %v2810 = vadd.f32 %v2745, %v2809
          %2811 = vmatmul.f32.gmra.mxu0 %v1013
          %v2812 = vpop.f32.mrf.mxu0
          %v2813 = vadd.f32 %v2748, %v2812
          %2814 = vmatmul.f32.gmra.mxu0 %v1014
          %v2815 = vpop.f32.mrf.mxu0
          %v2816 = vadd.f32 %v2751, %v2815
          %2817 = vmatmul.f32.gmra.mxu0 %v1015
          %v2818 = vpop.f32.mrf.mxu0
          %v2819 = vadd.f32 %v2754, %v2818
          %2820 = vmatmul.f32.gmra.mxu0 %v1016
          %v2821 = vpop.f32.mrf.mxu0
          %v2822 = vadd.f32 %v2757, %v2821
          %2823 = vmatmul.f32.gmra.mxu0 %v1017
          %v2824 = vpop.f32.mrf.mxu0
          %v2825 = vadd.f32 %v2760, %v2824
          %2826 = vmatmul.f32.gmra.mxu0 %v1018
          %v2827 = vpop.f32.mrf.mxu0
          %v2828 = vadd.f32 %v2763, %v2827
          %2829 = vmatmul.f32.gmra.mxu0 %v1019
          %v2830 = vpop.f32.mrf.mxu0
          %v2831 = vadd.f32 %v2766, %v2830
          %2832 = vdwg.mxu0
          %2833 = vmatpush.msra.mxu0 %v1890
          %2834 = vmatpush.msra.mxu0 %v1888
          %2835 = vmatpush.msra.mxu0 %v1886
          %2836 = vmatpush.msra.mxu0 %v1884
          %2837 = vmatpush.msra.mxu0 %v1882
          %2838 = vmatpush.msra.mxu0 %v1880
          %2839 = vmatpush.msra.mxu0 %v1878
          %2840 = vmatpush.msra.mxu0 %v1876
          %2841 = vmatpush.msra.mxu0 %v1874
          %2842 = vmatpush.msra.mxu0 %v1872
          %2843 = vmatpush.msra.mxu0 %v1870
          %2844 = vmatpush.msra.mxu0 %v1868
          %2845 = vmatpush.msra.mxu0 %v1866
          %2846 = vmatpush.msra.mxu0 %v1864
          %2847 = vmatpush.msra.mxu0 %v1862
          %2848 = vmatpush.msra.mxu0 %v1860
          %2849 = vmatmul.f32.gmra.mxu0 %v1036
          %v2850 = vpop.f32.mrf.mxu0
          %v2851 = vadd.f32 %v2786, %v2850
          %2852 = vmatmul.f32.gmra.mxu0 %v1037
          %v2853 = vpop.f32.mrf.mxu0
          %v2854 = vadd.f32 %v2789, %v2853
          %2855 = vmatmul.f32.gmra.mxu0 %v1038
          %v2856 = vpop.f32.mrf.mxu0
          %v2857 = vadd.f32 %v2792, %v2856
          %2858 = vmatmul.f32.gmra.mxu0 %v1039
          %v2859 = vpop.f32.mrf.mxu0
          %v2860 = vadd.f32 %v2795, %v2859
          %2861 = vmatmul.f32.gmra.mxu0 %v1040
          %v2862 = vpop.f32.mrf.mxu0
          %v2863 = vadd.f32 %v2798, %v2862
          %2864 = vmatmul.f32.gmra.mxu0 %v1041
          %v2865 = vpop.f32.mrf.mxu0
          %v2866 = vadd.f32 %v2801, %v2865
          %2867 = vmatmul.f32.gmra.mxu0 %v1042
          %v2868 = vpop.f32.mrf.mxu0
          %v2869 = vadd.f32 %v2804, %v2868
          %2870 = vmatmul.f32.gmra.mxu0 %v1043
          %v2871 = vpop.f32.mrf.mxu0
          %v2872 = vadd.f32 %v2807, %v2871
          %2873 = vmatmul.f32.gmra.mxu0 %v1044
          %v2874 = vpop.f32.mrf.mxu0
          %v2875 = vadd.f32 %v2810, %v2874
          %2876 = vmatmul.f32.gmra.mxu0 %v1045
          %v2877 = vpop.f32.mrf.mxu0
          %v2878 = vadd.f32 %v2813, %v2877
          %2879 = vmatmul.f32.gmra.mxu0 %v1046
          %v2880 = vpop.f32.mrf.mxu0
          %v2881 = vadd.f32 %v2816, %v2880
          %2882 = vmatmul.f32.gmra.mxu0 %v1047
          %v2883 = vpop.f32.mrf.mxu0
          %v2884 = vadd.f32 %v2819, %v2883
          %2885 = vmatmul.f32.gmra.mxu0 %v1048
          %v2886 = vpop.f32.mrf.mxu0
          %v2887 = vadd.f32 %v2822, %v2886
          %2888 = vmatmul.f32.gmra.mxu0 %v1049
          %v2889 = vpop.f32.mrf.mxu0
          %v2890 = vadd.f32 %v2825, %v2889
          %2891 = vmatmul.f32.gmra.mxu0 %v1050
          %v2892 = vpop.f32.mrf.mxu0
          %v2893 = vadd.f32 %v2828, %v2892
          %2894 = vmatmul.f32.gmra.mxu0 %v1051
          %v2895 = vpop.f32.mrf.mxu0
          %v2896 = vadd.f32 %v2831, %v2895
          %2897 = vdwg.mxu0
          %2898 = vmatpush.msra.mxu0 %v1922
          %2899 = vmatpush.msra.mxu0 %v1920
          %2900 = vmatpush.msra.mxu0 %v1918
          %2901 = vmatpush.msra.mxu0 %v1916
          %2902 = vmatpush.msra.mxu0 %v1914
          %2903 = vmatpush.msra.mxu0 %v1912
          %2904 = vmatpush.msra.mxu0 %v1910
          %2905 = vmatpush.msra.mxu0 %v1908
          %2906 = vmatpush.msra.mxu0 %v1906
          %2907 = vmatpush.msra.mxu0 %v1904
          %2908 = vmatpush.msra.mxu0 %v1902
          %2909 = vmatpush.msra.mxu0 %v1900
          %2910 = vmatpush.msra.mxu0 %v1898
          %2911 = vmatpush.msra.mxu0 %v1896
          %2912 = vmatpush.msra.mxu0 %v1894
          %2913 = vmatpush.msra.mxu0 %v1892
          %2914 = vmatmul.f32.gmra.mxu0 %v1068
          %v2915 = vpop.f32.mrf.mxu0
          %v2916 = vadd.f32 %v2851, %v2915
          %2917 = vmatmul.f32.gmra.mxu0 %v1069
          %v2918 = vpop.f32.mrf.mxu0
          %v2919 = vadd.f32 %v2854, %v2918
          %2920 = vmatmul.f32.gmra.mxu0 %v1070
          %v2921 = vpop.f32.mrf.mxu0
          %v2922 = vadd.f32 %v2857, %v2921
          %2923 = vmatmul.f32.gmra.mxu0 %v1071
          %v2924 = vpop.f32.mrf.mxu0
          %v2925 = vadd.f32 %v2860, %v2924
          %2926 = vmatmul.f32.gmra.mxu0 %v1072
          %v2927 = vpop.f32.mrf.mxu0
          %v2928 = vadd.f32 %v2863, %v2927
          %2929 = vmatmul.f32.gmra.mxu0 %v1073
          %v2930 = vpop.f32.mrf.mxu0
          %v2931 = vadd.f32 %v2866, %v2930
          %2932 = vmatmul.f32.gmra.mxu0 %v1074
          %v2933 = vpop.f32.mrf.mxu0
          %v2934 = vadd.f32 %v2869, %v2933
          %2935 = vmatmul.f32.gmra.mxu0 %v1075
          %v2936 = vpop.f32.mrf.mxu0
          %v2937 = vadd.f32 %v2872, %v2936
          %2938 = vmatmul.f32.gmra.mxu0 %v1076
          %v2939 = vpop.f32.mrf.mxu0
          %v2940 = vadd.f32 %v2875, %v2939
          %2941 = vmatmul.f32.gmra.mxu0 %v1077
          %v2942 = vpop.f32.mrf.mxu0
          %v2943 = vadd.f32 %v2878, %v2942
          %2944 = vmatmul.f32.gmra.mxu0 %v1078
          %v2945 = vpop.f32.mrf.mxu0
          %v2946 = vadd.f32 %v2881, %v2945
          %2947 = vmatmul.f32.gmra.mxu0 %v1079
          %v2948 = vpop.f32.mrf.mxu0
          %v2949 = vadd.f32 %v2884, %v2948
          %2950 = vmatmul.f32.gmra.mxu0 %v1080
          %v2951 = vpop.f32.mrf.mxu0
          %v2952 = vadd.f32 %v2887, %v2951
          %2953 = vmatmul.f32.gmra.mxu0 %v1081
          %v2954 = vpop.f32.mrf.mxu0
          %v2955 = vadd.f32 %v2890, %v2954
          %2956 = vmatmul.f32.gmra.mxu0 %v1082
          %v2957 = vpop.f32.mrf.mxu0
          %v2958 = vadd.f32 %v2893, %v2957
          %2959 = vmatmul.f32.gmra.mxu0 %v1083
          %v2960 = vpop.f32.mrf.mxu0
          %v2961 = vadd.f32 %v2896, %v2960
          %2962 = vdwg.mxu0
          %v2963 = vmul.f32 %v2136, %v2656
          %v2964 = vmul.f32 %v2396, %v2916
          %v2965 = vmul.f32 %v2139, %v2659
          %v2966 = vmul.f32 %v2399, %v2919
          %v2967 = vmul.f32 %v2142, %v2662
          %v2968 = vmul.f32 %v2402, %v2922
          %v2969 = vmul.f32 %v2145, %v2665
          %v2970 = vmul.f32 %v2405, %v2925
          %v2971 = vmul.f32 %v2148, %v2668
          %v2972 = vmul.f32 %v2408, %v2928
          %v2973 = vmul.f32 %v2151, %v2671
          %v2974 = vmul.f32 %v2411, %v2931
          %v2975 = vmul.f32 %v2154, %v2674
          %v2976 = vmul.f32 %v2414, %v2934
          %v2977 = vmul.f32 %v2157, %v2677
          %v2978 = vmul.f32 %v2417, %v2937
          %v2979 = vmul.f32 %v2160, %v2680
          %v2980 = vmul.f32 %v2420, %v2940
          %v2981 = vmul.f32 %v2163, %v2683
          %v2982 = vmul.f32 %v2423, %v2943
          %v2983 = vmul.f32 %v2166, %v2686
          %v2984 = vmul.f32 %v2426, %v2946
          %v2985 = vmul.f32 %v2169, %v2689
          %v2986 = vmul.f32 %v2429, %v2949
          %v2987 = vmul.f32 %v2172, %v2692
          %v2988 = vmul.f32 %v2432, %v2952
          %v2989 = vmul.f32 %v2175, %v2695
          %v2990 = vmul.f32 %v2435, %v2955
          %v2991 = vmul.f32 %v2178, %v2698
          %v2992 = vmul.f32 %v2438, %v2958
          %v2993 = vmul.f32 %v2181, %v2701
          %v2994 = vmul.f32 %v2441, %v2961
          %v2995 = vadd.f32 %v2963, %v2965
          %v2996 = vadd.f32 %v2995, %v2967
          %v2997 = vadd.f32 %v2996, %v2969
          %v2998 = vadd.f32 %v2997, %v2971
          %v2999 = vadd.f32 %v2998, %v2973
          %v3000 = vadd.f32 %v2999, %v2975
          %v3001 = vadd.f32 %v3000, %v2977
          %v3002 = vadd.f32 %v3001, %v2979
          %v3003 = vadd.f32 %v3002, %v2981
          %v3004 = vadd.f32 %v3003, %v2983
          %v3005 = vadd.f32 %v3004, %v2985
          %v3006 = vadd.f32 %v3005, %v2987
          %v3007 = vadd.f32 %v3006, %v2989
          %v3008 = vadd.f32 %v3007, %v2991
          %v3009 = vadd.f32 %v3008, %v2993
          %v3010 = vrot.slane %v3009, 4
          %v3011 = vadd.f32 %v3009, %v3010
          %v3012 = vrot.slane %v3011, 2
          %v3013 = vadd.f32 %v3011, %v3012
          %v3014 = vrot.slane %v3013, 1
          %v3015 = vadd.f32 %v3013, %v3014
          %v3016 = vadd.f32 %v2964, %v2966
          %v3017 = vadd.f32 %v3016, %v2968
          %v3018 = vadd.f32 %v3017, %v2970
          %v3019 = vadd.f32 %v3018, %v2972
          %v3020 = vadd.f32 %v3019, %v2974
          %v3021 = vadd.f32 %v3020, %v2976
          %v3022 = vadd.f32 %v3021, %v2978
          %v3023 = vadd.f32 %v3022, %v2980
          %v3024 = vadd.f32 %v3023, %v2982
          %v3025 = vadd.f32 %v3024, %v2984
          %v3026 = vadd.f32 %v3025, %v2986
          %v3027 = vadd.f32 %v3026, %v2988
          %v3028 = vadd.f32 %v3027, %v2990
          %v3029 = vadd.f32 %v3028, %v2992
          %v3030 = vadd.f32 %v3029, %v2994
          %v3031 = vrot.slane %v3030, 4
          %v3032 = vadd.f32 %v3030, %v3031
          %v3033 = vrot.slane %v3032, 2
          %v3034 = vadd.f32 %v3032, %v3033
          %v3035 = vrot.slane %v3034, 1
          %v3036 = vadd.f32 %v3034, %v3035
          %v3037 = vsub.f32 0.0, %v3015
          %v3038 = vsub.f32 0.0, %v3036
          %v3039 = vmul.f32 %v3037, 1.442695
          %v3040 = vpow.pop %v3039
          %v3041 = vmul.f32 %v3038, 1.442695
          %v3042 = vpow.pop %v3041
          %v3043 = vadd.f32 %v3040, 1.0
          %v3044 = vadd.f32 %v3042, 1.0
          %v3045 = vrcp.pop %v3043
          %v3046 = vmul.f32 %v3043, %v3045
          %v3047 = vsub.f32 1.0, %v3046
          %v3048 = vmul.f32 %v3045, %v3047
          %v3049 = vadd.f32 %v3045, %v3048
          %vm3050 = vweird.f32 %v3043
          %vm3051 = vweird.f32 %v3045
          %vm3052 = vmor %vm3050, %vm3051
          %v3053 = vsel %vm3052, %v3045, %v3049
          %v3054 = vand.u32 2147483647, %v3043
          %vm3055 = vcmp.eq.f32.partialorder %v3054, 8.507059e+37
          %v3056 = vand.u32 %v3043, 2147483648
          %v3057 = vor.u32 1.1754944e-38, %v3056
          %v3058 = vsel %vm3055, %v3057, %v3053
          %v3059 = vmul.f32 1.0, %v3058
          %v3060 = vrcp.pop %v3044
          %v3061 = vmul.f32 %v3044, %v3060
          %v3062 = vsub.f32 1.0, %v3061
          %v3063 = vmul.f32 %v3060, %v3062
          %v3064 = vadd.f32 %v3060, %v3063
          %vm3065 = vweird.f32 %v3044
          %vm3066 = vweird.f32 %v3060
          %vm3067 = vmor %vm3065, %vm3066
          %v3068 = vsel %vm3067, %v3060, %v3064
          %v3069 = vand.u32 2147483647, %v3044
          %vm3070 = vcmp.eq.f32.partialorder %v3069, 8.507059e+37
          %v3071 = vand.u32 %v3044, 2147483648
          %v3072 = vor.u32 1.1754944e-38, %v3071
          %v3073 = vsel %vm3070, %v3072, %v3068
          %v3074 = vmul.f32 1.0, %v3073
          %v3077 = vrot.slane %v3074, 7
          %vm3078 = vcmask 1040384
          %v3079 = vsel %vm3078, %v3059, %v3077
          %v3081 = vlaneseq
          %vm3082 = vcmp.ge.s32.totalorder %v3081, 0
          %vm3083 = vcmp.lt.s32.totalorder %v3081, 256
          %vm3084 = vmand %vm3082, %vm3083
          %3085 = vst.msk [vmem:[#allocation3] sm:$0x3] %vm3084, %v3079
        $region60: #{task_mlp_forward.1} parent=55 // pred_fallthru
          _
        // Predicated region
        $region61: #{task_mlp_forward.1} parent=55 // pred_check
          %p3086 = pneg %p228
        $region62: #{task_mlp_forward.1} parent=55 // pred_check_branch
          %3088 = sbr.rel (%p3086) target = $region64
        $region63: #{task_mlp_forward.1} parent=55 // pred_region
          %3090 = vsyncadd [#allocation4], 0
          %s3092 = sshll.u32 [#allocation3], 4
          %s3093 = int_to_ptr.vmem [resolvable:$true] %s3092
          %s3094 = sshll.u32 %s9, 4
          %s3095 = int_to_ptr.hbm [resolvable:$true] %s3094
          %3097 = dma.vmem_to_hbm [thread:$0]  %s3093, 32, %s3095, [#allocation4]
        $region64: #{task_mlp_forward.1} parent=55 // pred_fallthru
          _
        // Predicated region
        $region65: #{task_mlp_forward.1} parent=55 // pred_check
          %p3098 = pneg %p228
        $region66: #{task_mlp_forward.1} parent=55 // pred_check_branch
          %3100 = sbr.rel (%p3098) target = $region68
        $region67: #{task_mlp_forward.1} parent=55 // pred_region
          %3102 = dma.done [#allocation4], 32
        $region68: #{task_mlp_forward.1} parent=55 // pred_fallthru
          _
      $region56: #{task_mlp_forward.1} parent=5 // pred_fallthru
        _
      %p3103 = scmp.le.s32.totalorder 2, %s16
      // Predicated region
      $region69: #{task_mlp_forward.1} parent=5 // pred_check
        %p3104 = pneg %p3103
      $region70: #{task_mlp_forward.1} parent=5 // pred_check_branch
        %3106 = sbr.rel (%p3104) target = $region72
      $region71: #{task_mlp_forward.1} parent=5 // pred_region
        %s3107 = ssub.s32 %s16, 2
      $region72: #{task_mlp_forward.1} parent=5 // pred_fallthru
        _
    $region6: #{task_mlp_forward.1} parent=1 // loop_footer
      %s20 = sadd.s32 1, %s16
    $region7: #{task_mlp_forward.1} parent=1 // loop_footer_branch
      %15 = sbr.rel target = $region3
    $region8: #{task_mlp_forward.1} parent=1 // loop_exit
      _
    %3108 = vsyncpa [#allocation4], 1
    %s3109 = scalar_lea.sflag [#allocation4], 1
    %3110 = vsyncpa %s3109, 1

</llo_original>
